<compile_context>
chip_gen: v7x
topology: tpu7x:2x2x1
jax: 0.10.0
libtpu: 0.0.40
codegen_flags: <defaults>
</compile_context>

<pallas_src>
import math
import jax
import jax.numpy as jnp
from jax.experimental import pallas as pl
from jax.experimental.pallas import tpu as pltpu

# ---------------- model hyper-parameters (small, self-consistent) ------------
BATCH = 2
N_FEAT = 2
N_SEG = 4
D_SEG = 32          # embed dim
N_HEADS = 2
D_HEAD = D_SEG // N_HEADS
D_FF = 64
SEG_LEN = 8         # prediction length per segment
D_LAYERS = 2
CROSS_LEN = 8       # length of encoder (cross) sequence per layer
LN_EPS = 1e-5       # PyTorch TransformerDecoderLayer default

S_TOT = N_FEAT * N_SEG   # decoder tokens per batch element (8)
LANES = 128

# ---- packed weight-slab layout (per layer) ----
# Matrix slab: (RM, 128); every matrix starts at lane 0 and at a sublane offset
# that is a multiple of 8, so in-kernel slices are tile-aligned loads.
_R_SA_QKV = 0      # (D, 3D)   [Wq^T*scale | Wk^T | Wv^T]
_R_SA_O = 32       # (D, D)
_R_CA_Q = 64       # (D, D)    (*scale)
_R_CA_KV = 96      # (D, 2D)   [Wk^T | Wv^T]
_R_CA_O = 128      # (D, D)
_R_FF1 = 160       # (D, D_FF)
_R_FF2 = 192       # (D_FF, D)
_R_PRED = 256      # (D, SEG_LEN)
RM = 288
# Vector slab: (RV, 128); one vector per row, lanes 0:n.
(_V_SA_BQKV, _V_SA_BO, _V_CA_BQ, _V_CA_BKV, _V_CA_BO,
 _V_N1G, _V_N1B, _V_N2G, _V_N2B, _V_N3G, _V_N3B,
 _V_FF_B1, _V_FF_B2, _V_PRED_B) = range(14)
RV = 16


# ------------------------------ Pallas kernel --------------------------------
def fused_decoder_kernel(x_ref, cross_ref, wm_ref, wv_ref, pred_ref):
    B, S, Lc = BATCH, S_TOT, CROSS_LEN
    H, DH, D = N_HEADS, D_HEAD, D_SEG

    x = x_ref[...]                                    # (B*S, D) f32

    def layernorm(v, g, b):
        # Independent reductions (mean(v), mean(v*v)) -> overlap on the XLU.
        mu = jnp.mean(v, axis=-1, keepdims=True)
        ms = jnp.mean(v * v, axis=-1, keepdims=True)
        var = ms - mu * mu
        return (v - mu) * jax.lax.rsqrt(var + LN_EPS) * g + b

    def attention(q, k, v, lk):
        # q: (B*S, H*DH); k, v: (B*lk, H*DH).  Batch/head handled with static
        # slices; softmax batched over all (batch, head) pairs at once.
        scores = []
        for b in range(B):
            for h in range(H):
                qb = q[b * S:(b + 1) * S, h * DH:(h + 1) * DH]
                kb = k[b * lk:(b + 1) * lk, h * DH:(h + 1) * DH]
                scores.append(                         # q @ k^T, no transpose
                    jax.lax.dot_general(qb, kb, (((1,), (1,)), ((), ())),
                                        preferred_element_type=jnp.float32))
        s = jnp.concatenate(scores, axis=0)            # (B*H*S, lk)
        s = s - jnp.max(s, axis=-1, keepdims=True)
        p = jnp.exp(s)
        p = p * pl.reciprocal(jnp.sum(p, axis=-1, keepdims=True), approx=False)
        rows = []
        for b in range(B):
            heads = []
            for h in range(H):
                r0 = (b * H + h) * S
                pb = p[r0:r0 + S, :]                   # (S, lk)
                vb = v[b * lk:(b + 1) * lk, h * DH:(h + 1) * DH]
                heads.append(jnp.dot(pb, vb, preferred_element_type=jnp.float32))
            rows.append(jnp.concatenate(heads, axis=1))   # (S, H*DH)
        return jnp.concatenate(rows, axis=0)              # (B*S, H*DH)

    # TODO(synk): dropout is identity (eval mode); training-mode dropout not implemented.
    pred = None
    for l in range(D_LAYERS):                          # static unroll over layers
        def M(r0, nr, nc):                             # matrix slab slice
            return wm_ref[l, r0:r0 + nr, 0:nc]

        def V(r, nc):                                  # vector slab slice (1, nc)
            return wv_ref[l, r:r + 1, 0:nc]

        # ----- self-attention (post-norm) -----
        qkv = jnp.dot(x, M(_R_SA_QKV, D, 3 * D),
                      preferred_element_type=jnp.float32) + V(_V_SA_BQKV, 3 * D)
        ctx = attention(qkv[:, 0:D], qkv[:, D:2 * D], qkv[:, 2 * D:3 * D], S)
        sa = jnp.dot(ctx, M(_R_SA_O, D, D),
                     preferred_element_type=jnp.float32) + V(_V_SA_BO, D)
        x = layernorm(x + sa, V(_V_N1G, D), V(_V_N1B, D))

        # ----- cross-attention -----
        mem = cross_ref[l]                             # (B*Lc, D)
        q = jnp.dot(x, M(_R_CA_Q, D, D),
                    preferred_element_type=jnp.float32) + V(_V_CA_BQ, D)
        kv = jnp.dot(mem, M(_R_CA_KV, D, 2 * D),
                     preferred_element_type=jnp.float32) + V(_V_CA_BKV, 2 * D)
        ctx = attention(q, kv[:, 0:D], kv[:, D:2 * D], Lc)
        ca = jnp.dot(ctx, M(_R_CA_O, D, D),
                     preferred_element_type=jnp.float32) + V(_V_CA_BO, D)
        x = layernorm(x + ca, V(_V_N2G, D), V(_V_N2B, D))

        # ----- feed-forward (ReLU, PyTorch default) -----
        h1 = jnp.maximum(
            jnp.dot(x, M(_R_FF1, D, D_FF),
                    preferred_element_type=jnp.float32) + V(_V_FF_B1, D_FF), 0.0)
        ff = jnp.dot(h1, M(_R_FF2, D_FF, D),
                     preferred_element_type=jnp.float32) + V(_V_FF_B2, D)
        x = layernorm(x + ff, V(_V_N3G, D), V(_V_N3B, D))

        # ----- linear_pred head, accumulated across layers in-kernel -----
        p = jnp.dot(x, M(_R_PRED, D, SEG_LEN),
                    preferred_element_type=jnp.float32) + V(_V_PRED_B, SEG_LEN)
        pred = p if pred is None else pred + p

    pred_ref[...] = pred                               # single HBM writeback


# ------------------------- host-side weight packing --------------------------
def prepare_params(all_params, d, n_heads):
    """PyTorch-convention per-layer params -> two lane-dense slabs stacked over layers."""
    dh = d // n_heads
    scale = 1.0 / math.sqrt(dh)
    f32 = jnp.float32

    def row_block(m):
        m = m.astype(f32)
        return jnp.pad(m, ((0, 0), (0, LANES - m.shape[1])))

    def vec_row(v):
        v = v.reshape(-1).astype(f32)
        return jnp.pad(v, (0, LANES - v.shape[0]))[None, :]

    wm_layers, wv_layers = [], []
    for params in all_params:
        (sa_w, sa_b, sa_ow, sa_ob,
         ca_w, ca_b, ca_ow, ca_ob,
         g1, be1, g2, be2, g3, be3,
         w1, b1, w2, b2, wp, bp) = params

        sa_b_, ca_b_ = sa_b.reshape(-1), ca_b.reshape(-1)
        # PyTorch packs in_proj rows as [Wq; Wk; Wv]; kernel computes x @ W.T.
        sa_wq, sa_wk, sa_wv = sa_w[0:d].T * scale, sa_w[d:2 * d].T, sa_w[2 * d:3 * d].T
        sa_bq, sa_bk, sa_bv = sa_b_[0:d] * scale, sa_b_[d:2 * d], sa_b_[2 * d:3 * d]
        ca_wq, ca_wk, ca_wv = ca_w[0:d].T * scale, ca_w[d:2 * d].T, ca_w[2 * d:3 * d].T
        ca_bq, ca_bk, ca_bv = ca_b_[0:d] * scale, ca_b_[d:2 * d], ca_b_[2 * d:3 * d]

        wm = jnp.concatenate([
            row_block(jnp.concatenate([sa_wq, sa_wk, sa_wv], axis=1)),  # rows   0: 32
            row_block(sa_ow.T),                                          # rows  32: 64
            row_block(ca_wq),                                            # rows  64: 96
            row_block(jnp.concatenate([ca_wk, ca_wv], axis=1)),          # rows  96:128
            row_block(ca_ow.T),                                          # rows 128:160
            row_block(w1.T),                                             # rows 160:192
            row_block(w2.T),                                             # rows 192:256
            row_block(wp.T),                                             # rows 256:288
        ], axis=0)

        wv = jnp.concatenate([
            vec_row(jnp.concatenate([sa_bq, sa_bk, sa_bv])),
            vec_row(sa_ob), vec_row(ca_bq),
            vec_row(jnp.concatenate([ca_bk, ca_bv])), vec_row(ca_ob),
            vec_row(g1), vec_row(be1), vec_row(g2), vec_row(be2),
            vec_row(g3), vec_row(be3),
            vec_row(b1), vec_row(b2), vec_row(bp),
            jnp.zeros((RV - 14, LANES), f32),
        ], axis=0)

        wm_layers.append(wm)
        wv_layers.append(wv)

    return jnp.stack(wm_layers, axis=0), jnp.stack(wv_layers, axis=0)


# ------------------------------ wrapper ---------------------------------------
def decoder_forward(x, cross, all_params):
    """x: (B, n_feat, n_seg, d_seg); cross: (d_layers, B, Lc, d_seg)."""
    B, n_feat, n_seg, d = x.shape
    S = n_feat * n_seg
    L = len(all_params)
    Lc = cross.shape[2]

    # 'b n_feat n_seg d -> (b n_feat n_seg) d': batch folded into sublanes.
    x2 = x.reshape(B * S, d)
    # (L, B, Lc, d) -> (L, B*Lc, d): one contiguous load, batch-major rows.
    cross2 = cross.reshape(L, B * Lc, d)
    wm, wv = prepare_params(all_params, d, N_HEADS)

    pred = pl.pallas_call(
        fused_decoder_kernel,
        in_specs=[pl.BlockSpec(memory_space=pltpu.MemorySpace.VMEM)
                  for _ in range(4)],
        out_specs=pl.BlockSpec(memory_space=pltpu.MemorySpace.VMEM),
        out_shape=jax.ShapeDtypeStruct((B * S, SEG_LEN), jnp.float32),
    )(x2, cross2, wm, wv)

    # '(b n_feat n_seg) seg_len -> b n_seg seg_len n_feat' -> (b, n_seg*seg_len, n_feat)
    final_predict = pred.reshape(B, n_feat, n_seg, SEG_LEN)
    final_predict = jnp.transpose(final_predict, (0, 2, 3, 1))
    return final_predict.reshape(B, n_seg * SEG_LEN, n_feat)


decoder_forward_jit = jax.jit(decoder_forward)


# ------------------------ pure-JAX reference (for checking) -------------------
def decoder_reference(x, cross, all_params):
    B, n_feat, n_seg, d = x.shape
    S = n_feat * n_seg
    dh = d // N_HEADS
    scale = 1.0 / math.sqrt(dh)
    h = x.reshape(B, S, d)

    def mha(q_in, kv_in, w_in, b_in, w_out, b_out):
        b_in = b_in.reshape(-1)
        q = q_in @ w_in[0:d].T + b_in[0:d]
        k = kv_in @ w_in[d:2 * d].T + b_in[d:2 * d]
        v = kv_in @ w_in[2 * d:3 * d].T + b_in[2 * d:3 * d]
        outs = []
        for hh in range(N_HEADS):
            qh = q[..., hh * dh:(hh + 1) * dh]
            kh = k[..., hh * dh:(hh + 1) * dh]
            vh = v[..., hh * dh:(hh + 1) * dh]
            s = jnp.einsum('bqd,bkd->bqk', qh, kh) * scale
            p = jax.nn.softmax(s, axis=-1)
            outs.append(jnp.einsum('bqk,bkd->bqd', p, vh))
        o = jnp.concatenate(outs, axis=-1)
        return o @ w_out.T + b_out.reshape(-1)

    def ln(v, g, bta):
        mu = v.mean(-1, keepdims=True)
        var = ((v - mu) ** 2).mean(-1, keepdims=True)
        return (v - mu) / jnp.sqrt(var + LN_EPS) * g.reshape(-1) + bta.reshape(-1)

    final = None
    for i, params in enumerate(all_params):
        (sa_w, sa_b, sa_ow, sa_ob, ca_w, ca_b, ca_ow, ca_ob,
         g1, be1, g2, be2, g3, be3, w1, b1, w2, b2, wp, bp) = params
        mem = cross[i]
        h = ln(h + mha(h, h, sa_w, sa_b, sa_ow, sa_ob), g1, be1)
        h = ln(h + mha(h, mem, ca_w, ca_b, ca_ow, ca_ob), g2, be2)
        ff = jnp.maximum(h @ w1.T + b1.reshape(-1), 0.0) @ w2.T + b2.reshape(-1)
        h = ln(h + ff, g3, be3)
        p = h @ wp.T + bp.reshape(-1)
        final = p if final is None else final + p
    final = final.reshape(B, n_feat, n_seg, SEG_LEN)
    final = jnp.transpose(final, (0, 2, 3, 1))
    return final.reshape(B, n_seg * SEG_LEN, n_feat)


# ------------------------------ param init ------------------------------------
def init_block_params(key, d, d_ff, seg_len):
    ks = jax.random.split(key, 8)
    s = 0.05
    f32 = jnp.float32
    sa_w = (jax.random.normal(ks[0], (3 * d, d)) * s).astype(f32)
    sa_b = jnp.zeros((1, 3 * d), f32)
    sa_ow = (jax.random.normal(ks[1], (d, d)) * s).astype(f32)
    sa_ob = jnp.zeros((1, d), f32)
    ca_w = (jax.random.normal(ks[2], (3 * d, d)) * s).astype(f32)
    ca_b = jnp.zeros((1, 3 * d), f32)
    ca_ow = (jax.random.normal(ks[3], (d, d)) * s).astype(f32)
    ca_ob = jnp.zeros((1, d), f32)
    n1g = jnp.ones((1, d), f32); n1b = jnp.zeros((1, d), f32)
    n2g = jnp.ones((1, d), f32); n2b = jnp.zeros((1, d), f32)
    n3g = jnp.ones((1, d), f32); n3b = jnp.zeros((1, d), f32)
    w1 = (jax.random.normal(ks[4], (d_ff, d)) * s).astype(f32)
    b1 = jnp.zeros((1, d_ff), f32)
    w2 = (jax.random.normal(ks[5], (d, d_ff)) * s).astype(f32)
    b2 = jnp.zeros((1, d), f32)
    wp = (jax.random.normal(ks[6], (seg_len, d)) * s).astype(f32)
    bp = (jax.random.normal(ks[7], (1, seg_len)) * s).astype(f32)
    return (sa_w, sa_b, sa_ow, sa_ob,
            ca_w, ca_b, ca_ow, ca_ob,
            n1g, n1b, n2g, n2b, n3g, n3b,
            w1, b1, w2, b2,
            wp, bp)


# ------------------------------ main -------------------------------------------
if __name__ == "__main__":
    key = jax.random.PRNGKey(0)
    kx, kc, kp = jax.random.split(key, 3)

    x = jax.random.normal(kx, (BATCH, N_FEAT, N_SEG, D_SEG), jnp.float32)
    cross = jax.random.normal(kc, (D_LAYERS, BATCH, CROSS_LEN, D_SEG), jnp.float32)

    all_params = [
        init_block_params(jax.random.fold_in(kp, i), D_SEG, D_FF, SEG_LEN)
        for i in range(D_LAYERS)
    ]

    out = decoder_forward_jit(x, cross, all_params)
    out = jax.block_until_ready(out)

    assert out.shape == (BATCH, N_SEG * SEG_LEN, N_FEAT), out.shape
    assert bool(jnp.all(jnp.isfinite(out)))

    ref = decoder_reference(x, cross, all_params)
    max_err = float(jnp.max(jnp.abs(out - ref)))
    assert jnp.allclose(out, ref, atol=2e-3, rtol=2e-3), max_err

    print("KERNEL_OK")
</pallas_src>

<mosaic_0001>
module attributes {stable_mosaic.version = 11 : i64} {
  func.func @fused_decoder_kernel(%arg0: memref<16x32xf32, #tpu.memory_space<vmem>>, %arg1: memref<2x16x32xf32, #tpu.memory_space<vmem>>, %arg2: memref<2x288x128xf32, #tpu.memory_space<vmem>>, %arg3: memref<2x16x128xf32, #tpu.memory_space<vmem>>, %arg4: memref<16x8xf32, #tpu.memory_space<vmem>>) attributes {dimension_semantics = [], scalar_prefetch = 0 : i64, scratch_operands = 0 : i64, tpu.core_type = #tpu.core_type<tc>} {
    %c0 = arith.constant 0 : index
    %c0_0 = arith.constant 0 : index
    %0 = vector.load %arg0[%c0, %c0_0] : memref<16x32xf32, #tpu.memory_space<vmem>>, vector<16x32xf32>
    %c0_1 = arith.constant 0 : index
    %c0_2 = arith.constant 0 : index
    %c0_3 = arith.constant 0 : index
    %1 = vector.load %arg2[%c0_1, %c0_2, %c0_3] : memref<2x288x128xf32, #tpu.memory_space<vmem>>, vector<1x32x96xf32>
    %2 = vector.shape_cast %1 : vector<1x32x96xf32> to vector<32x96xf32>
    %cst = arith.constant dense<0.000000e+00> : vector<16x96xf32>
    %3 = tpu.matmul %0, %2, %cst {dimension_numbers = #tpu.dot_dimension_numbers<[1], [0], [0], [1], [0, 0, 1, 1], [], []>} : vector<16x32xf32>, vector<32x96xf32>, vector<16x96xf32> -> vector<16x96xf32>
    %c0_4 = arith.constant 0 : index
    %c0_5 = arith.constant 0 : index
    %c0_6 = arith.constant 0 : index
    %4 = vector.load %arg3[%c0_4, %c0_5, %c0_6] : memref<2x16x128xf32, #tpu.memory_space<vmem>>, vector<1x1x96xf32>
    %5 = vector.shape_cast %4 : vector<1x1x96xf32> to vector<1x96xf32>
    %6 = vector.broadcast %5 : vector<1x96xf32> to vector<16x96xf32>
    %7 = arith.addf %3, %6 : vector<16x96xf32>
    %8 = vector.extract_strided_slice %7 {offsets = [0, 0], sizes = [16, 32], strides = [1, 1]} : vector<16x96xf32> to vector<16x32xf32>
    %9 = vector.extract_strided_slice %7 {offsets = [0, 32], sizes = [16, 32], strides = [1, 1]} : vector<16x96xf32> to vector<16x32xf32>
    %10 = vector.extract_strided_slice %7 {offsets = [0, 64], sizes = [16, 32], strides = [1, 1]} : vector<16x96xf32> to vector<16x32xf32>
    %11 = vector.extract_strided_slice %8 {offsets = [0, 0], sizes = [8, 16], strides = [1, 1]} : vector<16x32xf32> to vector<8x16xf32>
    %12 = vector.extract_strided_slice %9 {offsets = [0, 0], sizes = [8, 16], strides = [1, 1]} : vector<16x32xf32> to vector<8x16xf32>
    %cst_7 = arith.constant dense<0.000000e+00> : vector<8x8xf32>
    %13 = tpu.matmul %11, %12, %cst_7 {dimension_numbers = #tpu.dot_dimension_numbers<[1], [1], [0], [0], [0, 0, 1, 0], [], []>} : vector<8x16xf32>, vector<8x16xf32>, vector<8x8xf32> -> vector<8x8xf32>
    %14 = vector.extract_strided_slice %8 {offsets = [0, 16], sizes = [8, 16], strides = [1, 1]} : vector<16x32xf32> to vector<8x16xf32>
    %15 = vector.extract_strided_slice %9 {offsets = [0, 16], sizes = [8, 16], strides = [1, 1]} : vector<16x32xf32> to vector<8x16xf32>
    %cst_8 = arith.constant dense<0.000000e+00> : vector<8x8xf32>
    %16 = tpu.matmul %14, %15, %cst_8 {dimension_numbers = #tpu.dot_dimension_numbers<[1], [1], [0], [0], [0, 0, 1, 0], [], []>} : vector<8x16xf32>, vector<8x16xf32>, vector<8x8xf32> -> vector<8x8xf32>
    %17 = vector.extract_strided_slice %8 {offsets = [8, 0], sizes = [8, 16], strides = [1, 1]} : vector<16x32xf32> to vector<8x16xf32>
    %18 = vector.extract_strided_slice %9 {offsets = [8, 0], sizes = [8, 16], strides = [1, 1]} : vector<16x32xf32> to vector<8x16xf32>
    %cst_9 = arith.constant dense<0.000000e+00> : vector<8x8xf32>
    %19 = tpu.matmul %17, %18, %cst_9 {dimension_numbers = #tpu.dot_dimension_numbers<[1], [1], [0], [0], [0, 0, 1, 0], [], []>} : vector<8x16xf32>, vector<8x16xf32>, vector<8x8xf32> -> vector<8x8xf32>
    %20 = vector.extract_strided_slice %8 {offsets = [8, 16], sizes = [8, 16], strides = [1, 1]} : vector<16x32xf32> to vector<8x16xf32>
    %21 = vector.extract_strided_slice %9 {offsets = [8, 16], sizes = [8, 16], strides = [1, 1]} : vector<16x32xf32> to vector<8x16xf32>
    %cst_10 = arith.constant dense<0.000000e+00> : vector<8x8xf32>
    %22 = tpu.matmul %20, %21, %cst_10 {dimension_numbers = #tpu.dot_dimension_numbers<[1], [1], [0], [0], [0, 0, 1, 0], [], []>} : vector<8x16xf32>, vector<8x16xf32>, vector<8x8xf32> -> vector<8x8xf32>
    %23 = tpu.concatenate %13, %16, %19, %22 in 0 : vector<8x8xf32>, vector<8x8xf32>, vector<8x8xf32>, vector<8x8xf32> -> vector<32x8xf32>
    %cst_11 = arith.constant dense<0xFF800000> : vector<32xf32>
    %24 = vector.multi_reduction <maximumf>, %23, %cst_11 [1] : vector<32x8xf32> to vector<32xf32>
    %25 = vector.shape_cast %24 : vector<32xf32> to vector<32x1xf32>
    %26 = vector.broadcast %25 : vector<32x1xf32> to vector<32x8xf32>
    %27 = arith.subf %23, %26 : vector<32x8xf32>
    %28 = math.exp %27 : vector<32x8xf32>
    %cst_12 = arith.constant dense<0.000000e+00> : vector<32xf32>
    %29 = vector.multi_reduction <add>, %28, %cst_12 [1] : vector<32x8xf32> to vector<32xf32>
    %30 = vector.shape_cast %29 : vector<32xf32> to vector<32x1xf32>
    %31 = tpu.reciprocal %30 : vector<32x1xf32> -> vector<32x1xf32>
    %32 = vector.broadcast %31 : vector<32x1xf32> to vector<32x8xf32>
    %33 = arith.mulf %28, %32 : vector<32x8xf32>
    %34 = vector.extract_strided_slice %33 {offsets = [0, 0], sizes = [8, 8], strides = [1, 1]} : vector<32x8xf32> to vector<8x8xf32>
    %35 = vector.extract_strided_slice %10 {offsets = [0, 0], sizes = [8, 16], strides = [1, 1]} : vector<16x32xf32> to vector<8x16xf32>
    %cst_13 = arith.constant dense<0.000000e+00> : vector<8x16xf32>
    %36 = tpu.matmul %34, %35, %cst_13 {dimension_numbers = #tpu.dot_dimension_numbers<[1], [0], [0], [1], [0, 0, 1, 1], [], []>} : vector<8x8xf32>, vector<8x16xf32>, vector<8x16xf32> -> vector<8x16xf32>
    %37 = vector.extract_strided_slice %33 {offsets = [8, 0], sizes = [8, 8], strides = [1, 1]} : vector<32x8xf32> to vector<8x8xf32>
    %38 = vector.extract_strided_slice %10 {offsets = [0, 16], sizes = [8, 16], strides = [1, 1]} : vector<16x32xf32> to vector<8x16xf32>
    %cst_14 = arith.constant dense<0.000000e+00> : vector<8x16xf32>
    %39 = tpu.matmul %37, %38, %cst_14 {dimension_numbers = #tpu.dot_dimension_numbers<[1], [0], [0], [1], [0, 0, 1, 1], [], []>} : vector<8x8xf32>, vector<8x16xf32>, vector<8x16xf32> -> vector<8x16xf32>
    %40 = tpu.concatenate %36, %39 in 1 : vector<8x16xf32>, vector<8x16xf32> -> vector<8x32xf32>
    %41 = vector.extract_strided_slice %33 {offsets = [16, 0], sizes = [8, 8], strides = [1, 1]} : vector<32x8xf32> to vector<8x8xf32>
    %42 = vector.extract_strided_slice %10 {offsets = [8, 0], sizes = [8, 16], strides = [1, 1]} : vector<16x32xf32> to vector<8x16xf32>
    %cst_15 = arith.constant dense<0.000000e+00> : vector<8x16xf32>
    %43 = tpu.matmul %41, %42, %cst_15 {dimension_numbers = #tpu.dot_dimension_numbers<[1], [0], [0], [1], [0, 0, 1, 1], [], []>} : vector<8x8xf32>, vector<8x16xf32>, vector<8x16xf32> -> vector<8x16xf32>
    %44 = vector.extract_strided_slice %33 {offsets = [24, 0], sizes = [8, 8], strides = [1, 1]} : vector<32x8xf32> to vector<8x8xf32>
    %45 = vector.extract_strided_slice %10 {offsets = [8, 16], sizes = [8, 16], strides = [1, 1]} : vector<16x32xf32> to vector<8x16xf32>
    %cst_16 = arith.constant dense<0.000000e+00> : vector<8x16xf32>
    %46 = tpu.matmul %44, %45, %cst_16 {dimension_numbers = #tpu.dot_dimension_numbers<[1], [0], [0], [1], [0, 0, 1, 1], [], []>} : vector<8x8xf32>, vector<8x16xf32>, vector<8x16xf32> -> vector<8x16xf32>
    %47 = tpu.concatenate %43, %46 in 1 : vector<8x16xf32>, vector<8x16xf32> -> vector<8x32xf32>
    %48 = tpu.concatenate %40, %47 in 0 : vector<8x32xf32>, vector<8x32xf32> -> vector<16x32xf32>
    %c0_17 = arith.constant 0 : index
    %c32 = arith.constant 32 : index
    %c0_18 = arith.constant 0 : index
    %49 = vector.load %arg2[%c0_17, %c32, %c0_18] : memref<2x288x128xf32, #tpu.memory_space<vmem>>, vector<1x32x32xf32>
    %50 = vector.shape_cast %49 : vector<1x32x32xf32> to vector<32x32xf32>
    %cst_19 = arith.constant dense<0.000000e+00> : vector<16x32xf32>
    %51 = tpu.matmul %48, %50, %cst_19 {dimension_numbers = #tpu.dot_dimension_numbers<[1], [0], [0], [1], [0, 0, 1, 1], [], []>} : vector<16x32xf32>, vector<32x32xf32>, vector<16x32xf32> -> vector<16x32xf32>
    %c0_20 = arith.constant 0 : index
    %c1 = arith.constant 1 : index
    %c0_21 = arith.constant 0 : index
    %52 = vector.load %arg3[%c0_20, %c1, %c0_21] : memref<2x16x128xf32, #tpu.memory_space<vmem>>, vector<1x1x32xf32>
    %53 = vector.shape_cast %52 : vector<1x1x32xf32> to vector<1x32xf32>
    %54 = vector.broadcast %53 : vector<1x32xf32> to vector<16x32xf32>
    %55 = arith.addf %51, %54 : vector<16x32xf32>
    %56 = arith.addf %0, %55 : vector<16x32xf32>
    %c0_22 = arith.constant 0 : index
    %c5 = arith.constant 5 : index
    %c0_23 = arith.constant 0 : index
    %57 = vector.load %arg3[%c0_22, %c5, %c0_23] : memref<2x16x128xf32, #tpu.memory_space<vmem>>, vector<1x1x32xf32>
    %58 = vector.shape_cast %57 : vector<1x1x32xf32> to vector<1x32xf32>
    %c0_24 = arith.constant 0 : index
    %c6 = arith.constant 6 : index
    %c0_25 = arith.constant 0 : index
    %59 = vector.load %arg3[%c0_24, %c6, %c0_25] : memref<2x16x128xf32, #tpu.memory_space<vmem>>, vector<1x1x32xf32>
    %60 = vector.shape_cast %59 : vector<1x1x32xf32> to vector<1x32xf32>
    %cst_26 = arith.constant dense<0.000000e+00> : vector<16xf32>
    %61 = vector.multi_reduction <add>, %56, %cst_26 [1] : vector<16x32xf32> to vector<16xf32>
    %62 = vector.shape_cast %61 : vector<16xf32> to vector<16x1xf32>
    %cst_27 = arith.constant 3.200000e+01 : f32
    %63 = vector.broadcast %cst_27 : f32 to vector<16x1xf32>
    %64 = arith.divf %62, %63 : vector<16x1xf32>
    %65 = arith.mulf %56, %56 : vector<16x32xf32>
    %cst_28 = arith.constant dense<0.000000e+00> : vector<16xf32>
    %66 = vector.multi_reduction <add>, %65, %cst_28 [1] : vector<16x32xf32> to vector<16xf32>
    %67 = vector.shape_cast %66 : vector<16xf32> to vector<16x1xf32>
    %cst_29 = arith.constant 3.200000e+01 : f32
    %68 = vector.broadcast %cst_29 : f32 to vector<16x1xf32>
    %69 = arith.divf %67, %68 : vector<16x1xf32>
    %70 = arith.mulf %64, %64 : vector<16x1xf32>
    %71 = arith.subf %69, %70 : vector<16x1xf32>
    %72 = vector.broadcast %64 : vector<16x1xf32> to vector<16x32xf32>
    %73 = arith.subf %56, %72 : vector<16x32xf32>
    %cst_30 = arith.constant 9.99999974E-6 : f32
    %74 = vector.broadcast %cst_30 : f32 to vector<16x1xf32>
    %75 = arith.addf %71, %74 : vector<16x1xf32>
    %76 = math.rsqrt %75 : vector<16x1xf32>
    %77 = vector.broadcast %76 : vector<16x1xf32> to vector<16x32xf32>
    %78 = arith.mulf %73, %77 : vector<16x32xf32>
    %79 = vector.broadcast %58 : vector<1x32xf32> to vector<16x32xf32>
    %80 = arith.mulf %78, %79 : vector<16x32xf32>
    %81 = vector.broadcast %60 : vector<1x32xf32> to vector<16x32xf32>
    %82 = arith.addf %80, %81 : vector<16x32xf32>
    %c0_31 = arith.constant 0 : index
    %c0_32 = arith.constant 0 : index
    %c0_33 = arith.constant 0 : index
    %83 = vector.load %arg1[%c0_31, %c0_32, %c0_33] : memref<2x16x32xf32, #tpu.memory_space<vmem>>, vector<1x16x32xf32>
    %84 = vector.shape_cast %83 : vector<1x16x32xf32> to vector<16x32xf32>
    %c0_34 = arith.constant 0 : index
    %c64 = arith.constant 64 : index
    %c0_35 = arith.constant 0 : index
    %85 = vector.load %arg2[%c0_34, %c64, %c0_35] : memref<2x288x128xf32, #tpu.memory_space<vmem>>, vector<1x32x32xf32>
    %86 = vector.shape_cast %85 : vector<1x32x32xf32> to vector<32x32xf32>
    %cst_36 = arith.constant dense<0.000000e+00> : vector<16x32xf32>
    %87 = tpu.matmul %82, %86, %cst_36 {dimension_numbers = #tpu.dot_dimension_numbers<[1], [0], [0], [1], [0, 0, 1, 1], [], []>} : vector<16x32xf32>, vector<32x32xf32>, vector<16x32xf32> -> vector<16x32xf32>
    %c0_37 = arith.constant 0 : index
    %c2 = arith.constant 2 : index
    %c0_38 = arith.constant 0 : index
    %88 = vector.load %arg3[%c0_37, %c2, %c0_38] : memref<2x16x128xf32, #tpu.memory_space<vmem>>, vector<1x1x32xf32>
    %89 = vector.shape_cast %88 : vector<1x1x32xf32> to vector<1x32xf32>
    %90 = vector.broadcast %89 : vector<1x32xf32> to vector<16x32xf32>
    %91 = arith.addf %87, %90 : vector<16x32xf32>
    %c0_39 = arith.constant 0 : index
    %c96 = arith.constant 96 : index
    %c0_40 = arith.constant 0 : index
    %92 = vector.load %arg2[%c0_39, %c96, %c0_40] : memref<2x288x128xf32, #tpu.memory_space<vmem>>, vector<1x32x64xf32>
    %93 = vector.shape_cast %92 : vector<1x32x64xf32> to vector<32x64xf32>
    %cst_41 = arith.constant dense<0.000000e+00> : vector<16x64xf32>
    %94 = tpu.matmul %84, %93, %cst_41 {dimension_numbers = #tpu.dot_dimension_numbers<[1], [0], [0], [1], [0, 0, 1, 1], [], []>} : vector<16x32xf32>, vector<32x64xf32>, vector<16x64xf32> -> vector<16x64xf32>
    %c0_42 = arith.constant 0 : index
    %c3 = arith.constant 3 : index
    %c0_43 = arith.constant 0 : index
    %95 = vector.load %arg3[%c0_42, %c3, %c0_43] : memref<2x16x128xf32, #tpu.memory_space<vmem>>, vector<1x1x64xf32>
    %96 = vector.shape_cast %95 : vector<1x1x64xf32> to vector<1x64xf32>
    %97 = vector.broadcast %96 : vector<1x64xf32> to vector<16x64xf32>
    %98 = arith.addf %94, %97 : vector<16x64xf32>
    %99 = vector.extract_strided_slice %98 {offsets = [0, 0], sizes = [16, 32], strides = [1, 1]} : vector<16x64xf32> to vector<16x32xf32>
    %100 = vector.extract_strided_slice %98 {offsets = [0, 32], sizes = [16, 32], strides = [1, 1]} : vector<16x64xf32> to vector<16x32xf32>
    %101 = vector.extract_strided_slice %91 {offsets = [0, 0], sizes = [8, 16], strides = [1, 1]} : vector<16x32xf32> to vector<8x16xf32>
    %102 = vector.extract_strided_slice %99 {offsets = [0, 0], sizes = [8, 16], strides = [1, 1]} : vector<16x32xf32> to vector<8x16xf32>
    %cst_44 = arith.constant dense<0.000000e+00> : vector<8x8xf32>
    %103 = tpu.matmul %101, %102, %cst_44 {dimension_numbers = #tpu.dot_dimension_numbers<[1], [1], [0], [0], [0, 0, 1, 0], [], []>} : vector<8x16xf32>, vector<8x16xf32>, vector<8x8xf32> -> vector<8x8xf32>
    %104 = vector.extract_strided_slice %91 {offsets = [0, 16], sizes = [8, 16], strides = [1, 1]} : vector<16x32xf32> to vector<8x16xf32>
    %105 = vector.extract_strided_slice %99 {offsets = [0, 16], sizes = [8, 16], strides = [1, 1]} : vector<16x32xf32> to vector<8x16xf32>
    %cst_45 = arith.constant dense<0.000000e+00> : vector<8x8xf32>
    %106 = tpu.matmul %104, %105, %cst_45 {dimension_numbers = #tpu.dot_dimension_numbers<[1], [1], [0], [0], [0, 0, 1, 0], [], []>} : vector<8x16xf32>, vector<8x16xf32>, vector<8x8xf32> -> vector<8x8xf32>
    %107 = vector.extract_strided_slice %91 {offsets = [8, 0], sizes = [8, 16], strides = [1, 1]} : vector<16x32xf32> to vector<8x16xf32>
    %108 = vector.extract_strided_slice %99 {offsets = [8, 0], sizes = [8, 16], strides = [1, 1]} : vector<16x32xf32> to vector<8x16xf32>
    %cst_46 = arith.constant dense<0.000000e+00> : vector<8x8xf32>
    %109 = tpu.matmul %107, %108, %cst_46 {dimension_numbers = #tpu.dot_dimension_numbers<[1], [1], [0], [0], [0, 0, 1, 0], [], []>} : vector<8x16xf32>, vector<8x16xf32>, vector<8x8xf32> -> vector<8x8xf32>
    %110 = vector.extract_strided_slice %91 {offsets = [8, 16], sizes = [8, 16], strides = [1, 1]} : vector<16x32xf32> to vector<8x16xf32>
    %111 = vector.extract_strided_slice %99 {offsets = [8, 16], sizes = [8, 16], strides = [1, 1]} : vector<16x32xf32> to vector<8x16xf32>
    %cst_47 = arith.constant dense<0.000000e+00> : vector<8x8xf32>
    %112 = tpu.matmul %110, %111, %cst_47 {dimension_numbers = #tpu.dot_dimension_numbers<[1], [1], [0], [0], [0, 0, 1, 0], [], []>} : vector<8x16xf32>, vector<8x16xf32>, vector<8x8xf32> -> vector<8x8xf32>
    %113 = tpu.concatenate %103, %106, %109, %112 in 0 : vector<8x8xf32>, vector<8x8xf32>, vector<8x8xf32>, vector<8x8xf32> -> vector<32x8xf32>
    %cst_48 = arith.constant dense<0xFF800000> : vector<32xf32>
    %114 = vector.multi_reduction <maximumf>, %113, %cst_48 [1] : vector<32x8xf32> to vector<32xf32>
    %115 = vector.shape_cast %114 : vector<32xf32> to vector<32x1xf32>
    %116 = vector.broadcast %115 : vector<32x1xf32> to vector<32x8xf32>
    %117 = arith.subf %113, %116 : vector<32x8xf32>
    %118 = math.exp %117 : vector<32x8xf32>
    %cst_49 = arith.constant dense<0.000000e+00> : vector<32xf32>
    %119 = vector.multi_reduction <add>, %118, %cst_49 [1] : vector<32x8xf32> to vector<32xf32>
    %120 = vector.shape_cast %119 : vector<32xf32> to vector<32x1xf32>
    %121 = tpu.reciprocal %120 : vector<32x1xf32> -> vector<32x1xf32>
    %122 = vector.broadcast %121 : vector<32x1xf32> to vector<32x8xf32>
    %123 = arith.mulf %118, %122 : vector<32x8xf32>
    %124 = vector.extract_strided_slice %123 {offsets = [0, 0], sizes = [8, 8], strides = [1, 1]} : vector<32x8xf32> to vector<8x8xf32>
    %125 = vector.extract_strided_slice %100 {offsets = [0, 0], sizes = [8, 16], strides = [1, 1]} : vector<16x32xf32> to vector<8x16xf32>
    %cst_50 = arith.constant dense<0.000000e+00> : vector<8x16xf32>
    %126 = tpu.matmul %124, %125, %cst_50 {dimension_numbers = #tpu.dot_dimension_numbers<[1], [0], [0], [1], [0, 0, 1, 1], [], []>} : vector<8x8xf32>, vector<8x16xf32>, vector<8x16xf32> -> vector<8x16xf32>
    %127 = vector.extract_strided_slice %123 {offsets = [8, 0], sizes = [8, 8], strides = [1, 1]} : vector<32x8xf32> to vector<8x8xf32>
    %128 = vector.extract_strided_slice %100 {offsets = [0, 16], sizes = [8, 16], strides = [1, 1]} : vector<16x32xf32> to vector<8x16xf32>
    %cst_51 = arith.constant dense<0.000000e+00> : vector<8x16xf32>
    %129 = tpu.matmul %127, %128, %cst_51 {dimension_numbers = #tpu.dot_dimension_numbers<[1], [0], [0], [1], [0, 0, 1, 1], [], []>} : vector<8x8xf32>, vector<8x16xf32>, vector<8x16xf32> -> vector<8x16xf32>
    %130 = tpu.concatenate %126, %129 in 1 : vector<8x16xf32>, vector<8x16xf32> -> vector<8x32xf32>
    %131 = vector.extract_strided_slice %123 {offsets = [16, 0], sizes = [8, 8], strides = [1, 1]} : vector<32x8xf32> to vector<8x8xf32>
    %132 = vector.extract_strided_slice %100 {offsets = [8, 0], sizes = [8, 16], strides = [1, 1]} : vector<16x32xf32> to vector<8x16xf32>
    %cst_52 = arith.constant dense<0.000000e+00> : vector<8x16xf32>
    %133 = tpu.matmul %131, %132, %cst_52 {dimension_numbers = #tpu.dot_dimension_numbers<[1], [0], [0], [1], [0, 0, 1, 1], [], []>} : vector<8x8xf32>, vector<8x16xf32>, vector<8x16xf32> -> vector<8x16xf32>
    %134 = vector.extract_strided_slice %123 {offsets = [24, 0], sizes = [8, 8], strides = [1, 1]} : vector<32x8xf32> to vector<8x8xf32>
    %135 = vector.extract_strided_slice %100 {offsets = [8, 16], sizes = [8, 16], strides = [1, 1]} : vector<16x32xf32> to vector<8x16xf32>
    %cst_53 = arith.constant dense<0.000000e+00> : vector<8x16xf32>
    %136 = tpu.matmul %134, %135, %cst_53 {dimension_numbers = #tpu.dot_dimension_numbers<[1], [0], [0], [1], [0, 0, 1, 1], [], []>} : vector<8x8xf32>, vector<8x16xf32>, vector<8x16xf32> -> vector<8x16xf32>
    %137 = tpu.concatenate %133, %136 in 1 : vector<8x16xf32>, vector<8x16xf32> -> vector<8x32xf32>
    %138 = tpu.concatenate %130, %137 in 0 : vector<8x32xf32>, vector<8x32xf32> -> vector<16x32xf32>
    %c0_54 = arith.constant 0 : index
    %c128 = arith.constant 128 : index
    %c0_55 = arith.constant 0 : index
    %139 = vector.load %arg2[%c0_54, %c128, %c0_55] : memref<2x288x128xf32, #tpu.memory_space<vmem>>, vector<1x32x32xf32>
    %140 = vector.shape_cast %139 : vector<1x32x32xf32> to vector<32x32xf32>
    %cst_56 = arith.constant dense<0.000000e+00> : vector<16x32xf32>
    %141 = tpu.matmul %138, %140, %cst_56 {dimension_numbers = #tpu.dot_dimension_numbers<[1], [0], [0], [1], [0, 0, 1, 1], [], []>} : vector<16x32xf32>, vector<32x32xf32>, vector<16x32xf32> -> vector<16x32xf32>
    %c0_57 = arith.constant 0 : index
    %c4 = arith.constant 4 : index
    %c0_58 = arith.constant 0 : index
    %142 = vector.load %arg3[%c0_57, %c4, %c0_58] : memref<2x16x128xf32, #tpu.memory_space<vmem>>, vector<1x1x32xf32>
    %143 = vector.shape_cast %142 : vector<1x1x32xf32> to vector<1x32xf32>
    %144 = vector.broadcast %143 : vector<1x32xf32> to vector<16x32xf32>
    %145 = arith.addf %141, %144 : vector<16x32xf32>
    %146 = arith.addf %82, %145 : vector<16x32xf32>
    %c0_59 = arith.constant 0 : index
    %c7 = arith.constant 7 : index
    %c0_60 = arith.constant 0 : index
    %147 = vector.load %arg3[%c0_59, %c7, %c0_60] : memref<2x16x128xf32, #tpu.memory_space<vmem>>, vector<1x1x32xf32>
    %148 = vector.shape_cast %147 : vector<1x1x32xf32> to vector<1x32xf32>
    %c0_61 = arith.constant 0 : index
    %c8 = arith.constant 8 : index
    %c0_62 = arith.constant 0 : index
    %149 = vector.load %arg3[%c0_61, %c8, %c0_62] : memref<2x16x128xf32, #tpu.memory_space<vmem>>, vector<1x1x32xf32>
    %150 = vector.shape_cast %149 : vector<1x1x32xf32> to vector<1x32xf32>
    %cst_63 = arith.constant dense<0.000000e+00> : vector<16xf32>
    %151 = vector.multi_reduction <add>, %146, %cst_63 [1] : vector<16x32xf32> to vector<16xf32>
    %152 = vector.shape_cast %151 : vector<16xf32> to vector<16x1xf32>
    %cst_64 = arith.constant 3.200000e+01 : f32
    %153 = vector.broadcast %cst_64 : f32 to vector<16x1xf32>
    %154 = arith.divf %152, %153 : vector<16x1xf32>
    %155 = arith.mulf %146, %146 : vector<16x32xf32>
    %cst_65 = arith.constant dense<0.000000e+00> : vector<16xf32>
    %156 = vector.multi_reduction <add>, %155, %cst_65 [1] : vector<16x32xf32> to vector<16xf32>
    %157 = vector.shape_cast %156 : vector<16xf32> to vector<16x1xf32>
    %cst_66 = arith.constant 3.200000e+01 : f32
    %158 = vector.broadcast %cst_66 : f32 to vector<16x1xf32>
    %159 = arith.divf %157, %158 : vector<16x1xf32>
    %160 = arith.mulf %154, %154 : vector<16x1xf32>
    %161 = arith.subf %159, %160 : vector<16x1xf32>
    %162 = vector.broadcast %154 : vector<16x1xf32> to vector<16x32xf32>
    %163 = arith.subf %146, %162 : vector<16x32xf32>
    %cst_67 = arith.constant 9.99999974E-6 : f32
    %164 = vector.broadcast %cst_67 : f32 to vector<16x1xf32>
    %165 = arith.addf %161, %164 : vector<16x1xf32>
    %166 = math.rsqrt %165 : vector<16x1xf32>
    %167 = vector.broadcast %166 : vector<16x1xf32> to vector<16x32xf32>
    %168 = arith.mulf %163, %167 : vector<16x32xf32>
    %169 = vector.broadcast %148 : vector<1x32xf32> to vector<16x32xf32>
    %170 = arith.mulf %168, %169 : vector<16x32xf32>
    %171 = vector.broadcast %150 : vector<1x32xf32> to vector<16x32xf32>
    %172 = arith.addf %170, %171 : vector<16x32xf32>
    %c0_68 = arith.constant 0 : index
    %c160 = arith.constant 160 : index
    %c0_69 = arith.constant 0 : index
    %173 = vector.load %arg2[%c0_68, %c160, %c0_69] : memref<2x288x128xf32, #tpu.memory_space<vmem>>, vector<1x32x64xf32>
    %174 = vector.shape_cast %173 : vector<1x32x64xf32> to vector<32x64xf32>
    %cst_70 = arith.constant dense<0.000000e+00> : vector<16x64xf32>
    %175 = tpu.matmul %172, %174, %cst_70 {dimension_numbers = #tpu.dot_dimension_numbers<[1], [0], [0], [1], [0, 0, 1, 1], [], []>} : vector<16x32xf32>, vector<32x64xf32>, vector<16x64xf32> -> vector<16x64xf32>
    %c0_71 = arith.constant 0 : index
    %c11 = arith.constant 11 : index
    %c0_72 = arith.constant 0 : index
    %176 = vector.load %arg3[%c0_71, %c11, %c0_72] : memref<2x16x128xf32, #tpu.memory_space<vmem>>, vector<1x1x64xf32>
    %177 = vector.shape_cast %176 : vector<1x1x64xf32> to vector<1x64xf32>
    %178 = vector.broadcast %177 : vector<1x64xf32> to vector<16x64xf32>
    %179 = arith.addf %175, %178 : vector<16x64xf32>
    %cst_73 = arith.constant 0.000000e+00 : f32
    %180 = vector.broadcast %cst_73 : f32 to vector<16x64xf32>
    %181 = arith.maximumf %179, %180 : vector<16x64xf32>
    %c0_74 = arith.constant 0 : index
    %c192 = arith.constant 192 : index
    %c0_75 = arith.constant 0 : index
    %182 = vector.load %arg2[%c0_74, %c192, %c0_75] : memref<2x288x128xf32, #tpu.memory_space<vmem>>, vector<1x64x32xf32>
    %183 = vector.shape_cast %182 : vector<1x64x32xf32> to vector<64x32xf32>
    %cst_76 = arith.constant dense<0.000000e+00> : vector<16x32xf32>
    %184 = tpu.matmul %181, %183, %cst_76 {dimension_numbers = #tpu.dot_dimension_numbers<[1], [0], [0], [1], [0, 0, 1, 1], [], []>} : vector<16x64xf32>, vector<64x32xf32>, vector<16x32xf32> -> vector<16x32xf32>
    %c0_77 = arith.constant 0 : index
    %c12 = arith.constant 12 : index
    %c0_78 = arith.constant 0 : index
    %185 = vector.load %arg3[%c0_77, %c12, %c0_78] : memref<2x16x128xf32, #tpu.memory_space<vmem>>, vector<1x1x32xf32>
    %186 = vector.shape_cast %185 : vector<1x1x32xf32> to vector<1x32xf32>
    %187 = vector.broadcast %186 : vector<1x32xf32> to vector<16x32xf32>
    %188 = arith.addf %184, %187 : vector<16x32xf32>
    %189 = arith.addf %172, %188 : vector<16x32xf32>
    %c0_79 = arith.constant 0 : index
    %c9 = arith.constant 9 : index
    %c0_80 = arith.constant 0 : index
    %190 = vector.load %arg3[%c0_79, %c9, %c0_80] : memref<2x16x128xf32, #tpu.memory_space<vmem>>, vector<1x1x32xf32>
    %191 = vector.shape_cast %190 : vector<1x1x32xf32> to vector<1x32xf32>
    %c0_81 = arith.constant 0 : index
    %c10 = arith.constant 10 : index
    %c0_82 = arith.constant 0 : index
    %192 = vector.load %arg3[%c0_81, %c10, %c0_82] : memref<2x16x128xf32, #tpu.memory_space<vmem>>, vector<1x1x32xf32>
    %193 = vector.shape_cast %192 : vector<1x1x32xf32> to vector<1x32xf32>
    %cst_83 = arith.constant dense<0.000000e+00> : vector<16xf32>
    %194 = vector.multi_reduction <add>, %189, %cst_83 [1] : vector<16x32xf32> to vector<16xf32>
    %195 = vector.shape_cast %194 : vector<16xf32> to vector<16x1xf32>
    %cst_84 = arith.constant 3.200000e+01 : f32
    %196 = vector.broadcast %cst_84 : f32 to vector<16x1xf32>
    %197 = arith.divf %195, %196 : vector<16x1xf32>
    %198 = arith.mulf %189, %189 : vector<16x32xf32>
    %cst_85 = arith.constant dense<0.000000e+00> : vector<16xf32>
    %199 = vector.multi_reduction <add>, %198, %cst_85 [1] : vector<16x32xf32> to vector<16xf32>
    %200 = vector.shape_cast %199 : vector<16xf32> to vector<16x1xf32>
    %cst_86 = arith.constant 3.200000e+01 : f32
    %201 = vector.broadcast %cst_86 : f32 to vector<16x1xf32>
    %202 = arith.divf %200, %201 : vector<16x1xf32>
    %203 = arith.mulf %197, %197 : vector<16x1xf32>
    %204 = arith.subf %202, %203 : vector<16x1xf32>
    %205 = vector.broadcast %197 : vector<16x1xf32> to vector<16x32xf32>
    %206 = arith.subf %189, %205 : vector<16x32xf32>
    %cst_87 = arith.constant 9.99999974E-6 : f32
    %207 = vector.broadcast %cst_87 : f32 to vector<16x1xf32>
    %208 = arith.addf %204, %207 : vector<16x1xf32>
    %209 = math.rsqrt %208 : vector<16x1xf32>
    %210 = vector.broadcast %209 : vector<16x1xf32> to vector<16x32xf32>
    %211 = arith.mulf %206, %210 : vector<16x32xf32>
    %212 = vector.broadcast %191 : vector<1x32xf32> to vector<16x32xf32>
    %213 = arith.mulf %211, %212 : vector<16x32xf32>
    %214 = vector.broadcast %193 : vector<1x32xf32> to vector<16x32xf32>
    %215 = arith.addf %213, %214 : vector<16x32xf32>
    %c0_88 = arith.constant 0 : index
    %c256 = arith.constant 256 : index
    %c0_89 = arith.constant 0 : index
    %216 = vector.load %arg2[%c0_88, %c256, %c0_89] : memref<2x288x128xf32, #tpu.memory_space<vmem>>, vector<1x32x8xf32>
    %217 = vector.shape_cast %216 : vector<1x32x8xf32> to vector<32x8xf32>
    %cst_90 = arith.constant dense<0.000000e+00> : vector<16x8xf32>
    %218 = tpu.matmul %215, %217, %cst_90 {dimension_numbers = #tpu.dot_dimension_numbers<[1], [0], [0], [1], [0, 0, 1, 1], [], []>} : vector<16x32xf32>, vector<32x8xf32>, vector<16x8xf32> -> vector<16x8xf32>
    %c0_91 = arith.constant 0 : index
    %c13 = arith.constant 13 : index
    %c0_92 = arith.constant 0 : index
    %219 = vector.load %arg3[%c0_91, %c13, %c0_92] : memref<2x16x128xf32, #tpu.memory_space<vmem>>, vector<1x1x8xf32>
    %220 = vector.shape_cast %219 : vector<1x1x8xf32> to vector<1x8xf32>
    %221 = vector.broadcast %220 : vector<1x8xf32> to vector<16x8xf32>
    %222 = arith.addf %218, %221 : vector<16x8xf32>
    %c1_93 = arith.constant 1 : index
    %c0_94 = arith.constant 0 : index
    %c0_95 = arith.constant 0 : index
    %223 = vector.load %arg2[%c1_93, %c0_94, %c0_95] : memref<2x288x128xf32, #tpu.memory_space<vmem>>, vector<1x32x96xf32>
    %224 = vector.shape_cast %223 : vector<1x32x96xf32> to vector<32x96xf32>
    %cst_96 = arith.constant dense<0.000000e+00> : vector<16x96xf32>
    %225 = tpu.matmul %215, %224, %cst_96 {dimension_numbers = #tpu.dot_dimension_numbers<[1], [0], [0], [1], [0, 0, 1, 1], [], []>} : vector<16x32xf32>, vector<32x96xf32>, vector<16x96xf32> -> vector<16x96xf32>
    %c1_97 = arith.constant 1 : index
    %c0_98 = arith.constant 0 : index
    %c0_99 = arith.constant 0 : index
    %226 = vector.load %arg3[%c1_97, %c0_98, %c0_99] : memref<2x16x128xf32, #tpu.memory_space<vmem>>, vector<1x1x96xf32>
    %227 = vector.shape_cast %226 : vector<1x1x96xf32> to vector<1x96xf32>
    %228 = vector.broadcast %227 : vector<1x96xf32> to vector<16x96xf32>
    %229 = arith.addf %225, %228 : vector<16x96xf32>
    %230 = vector.extract_strided_slice %229 {offsets = [0, 0], sizes = [16, 32], strides = [1, 1]} : vector<16x96xf32> to vector<16x32xf32>
    %231 = vector.extract_strided_slice %229 {offsets = [0, 32], sizes = [16, 32], strides = [1, 1]} : vector<16x96xf32> to vector<16x32xf32>
    %232 = vector.extract_strided_slice %229 {offsets = [0, 64], sizes = [16, 32], strides = [1, 1]} : vector<16x96xf32> to vector<16x32xf32>
    %233 = vector.extract_strided_slice %230 {offsets = [0, 0], sizes = [8, 16], strides = [1, 1]} : vector<16x32xf32> to vector<8x16xf32>
    %234 = vector.extract_strided_slice %231 {offsets = [0, 0], sizes = [8, 16], strides = [1, 1]} : vector<16x32xf32> to vector<8x16xf32>
    %cst_100 = arith.constant dense<0.000000e+00> : vector<8x8xf32>
    %235 = tpu.matmul %233, %234, %cst_100 {dimension_numbers = #tpu.dot_dimension_numbers<[1], [1], [0], [0], [0, 0, 1, 0], [], []>} : vector<8x16xf32>, vector<8x16xf32>, vector<8x8xf32> -> vector<8x8xf32>
    %236 = vector.extract_strided_slice %230 {offsets = [0, 16], sizes = [8, 16], strides = [1, 1]} : vector<16x32xf32> to vector<8x16xf32>
    %237 = vector.extract_strided_slice %231 {offsets = [0, 16], sizes = [8, 16], strides = [1, 1]} : vector<16x32xf32> to vector<8x16xf32>
    %cst_101 = arith.constant dense<0.000000e+00> : vector<8x8xf32>
    %238 = tpu.matmul %236, %237, %cst_101 {dimension_numbers = #tpu.dot_dimension_numbers<[1], [1], [0], [0], [0, 0, 1, 0], [], []>} : vector<8x16xf32>, vector<8x16xf32>, vector<8x8xf32> -> vector<8x8xf32>
    %239 = vector.extract_strided_slice %230 {offsets = [8, 0], sizes = [8, 16], strides = [1, 1]} : vector<16x32xf32> to vector<8x16xf32>
    %240 = vector.extract_strided_slice %231 {offsets = [8, 0], sizes = [8, 16], strides = [1, 1]} : vector<16x32xf32> to vector<8x16xf32>
    %cst_102 = arith.constant dense<0.000000e+00> : vector<8x8xf32>
    %241 = tpu.matmul %239, %240, %cst_102 {dimension_numbers = #tpu.dot_dimension_numbers<[1], [1], [0], [0], [0, 0, 1, 0], [], []>} : vector<8x16xf32>, vector<8x16xf32>, vector<8x8xf32> -> vector<8x8xf32>
    %242 = vector.extract_strided_slice %230 {offsets = [8, 16], sizes = [8, 16], strides = [1, 1]} : vector<16x32xf32> to vector<8x16xf32>
    %243 = vector.extract_strided_slice %231 {offsets = [8, 16], sizes = [8, 16], strides = [1, 1]} : vector<16x32xf32> to vector<8x16xf32>
    %cst_103 = arith.constant dense<0.000000e+00> : vector<8x8xf32>
    %244 = tpu.matmul %242, %243, %cst_103 {dimension_numbers = #tpu.dot_dimension_numbers<[1], [1], [0], [0], [0, 0, 1, 0], [], []>} : vector<8x16xf32>, vector<8x16xf32>, vector<8x8xf32> -> vector<8x8xf32>
    %245 = tpu.concatenate %235, %238, %241, %244 in 0 : vector<8x8xf32>, vector<8x8xf32>, vector<8x8xf32>, vector<8x8xf32> -> vector<32x8xf32>
    %cst_104 = arith.constant dense<0xFF800000> : vector<32xf32>
    %246 = vector.multi_reduction <maximumf>, %245, %cst_104 [1] : vector<32x8xf32> to vector<32xf32>
    %247 = vector.shape_cast %246 : vector<32xf32> to vector<32x1xf32>
    %248 = vector.broadcast %247 : vector<32x1xf32> to vector<32x8xf32>
    %249 = arith.subf %245, %248 : vector<32x8xf32>
    %250 = math.exp %249 : vector<32x8xf32>
    %cst_105 = arith.constant dense<0.000000e+00> : vector<32xf32>
    %251 = vector.multi_reduction <add>, %250, %cst_105 [1] : vector<32x8xf32> to vector<32xf32>
    %252 = vector.shape_cast %251 : vector<32xf32> to vector<32x1xf32>
    %253 = tpu.reciprocal %252 : vector<32x1xf32> -> vector<32x1xf32>
    %254 = vector.broadcast %253 : vector<32x1xf32> to vector<32x8xf32>
    %255 = arith.mulf %250, %254 : vector<32x8xf32>
    %256 = vector.extract_strided_slice %255 {offsets = [0, 0], sizes = [8, 8], strides = [1, 1]} : vector<32x8xf32> to vector<8x8xf32>
    %257 = vector.extract_strided_slice %232 {offsets = [0, 0], sizes = [8, 16], strides = [1, 1]} : vector<16x32xf32> to vector<8x16xf32>
    %cst_106 = arith.constant dense<0.000000e+00> : vector<8x16xf32>
    %258 = tpu.matmul %256, %257, %cst_106 {dimension_numbers = #tpu.dot_dimension_numbers<[1], [0], [0], [1], [0, 0, 1, 1], [], []>} : vector<8x8xf32>, vector<8x16xf32>, vector<8x16xf32> -> vector<8x16xf32>
    %259 = vector.extract_strided_slice %255 {offsets = [8, 0], sizes = [8, 8], strides = [1, 1]} : vector<32x8xf32> to vector<8x8xf32>
    %260 = vector.extract_strided_slice %232 {offsets = [0, 16], sizes = [8, 16], strides = [1, 1]} : vector<16x32xf32> to vector<8x16xf32>
    %cst_107 = arith.constant dense<0.000000e+00> : vector<8x16xf32>
    %261 = tpu.matmul %259, %260, %cst_107 {dimension_numbers = #tpu.dot_dimension_numbers<[1], [0], [0], [1], [0, 0, 1, 1], [], []>} : vector<8x8xf32>, vector<8x16xf32>, vector<8x16xf32> -> vector<8x16xf32>
    %262 = tpu.concatenate %258, %261 in 1 : vector<8x16xf32>, vector<8x16xf32> -> vector<8x32xf32>
    %263 = vector.extract_strided_slice %255 {offsets = [16, 0], sizes = [8, 8], strides = [1, 1]} : vector<32x8xf32> to vector<8x8xf32>
    %264 = vector.extract_strided_slice %232 {offsets = [8, 0], sizes = [8, 16], strides = [1, 1]} : vector<16x32xf32> to vector<8x16xf32>
    %cst_108 = arith.constant dense<0.000000e+00> : vector<8x16xf32>
    %265 = tpu.matmul %263, %264, %cst_108 {dimension_numbers = #tpu.dot_dimension_numbers<[1], [0], [0], [1], [0, 0, 1, 1], [], []>} : vector<8x8xf32>, vector<8x16xf32>, vector<8x16xf32> -> vector<8x16xf32>
    %266 = vector.extract_strided_slice %255 {offsets = [24, 0], sizes = [8, 8], strides = [1, 1]} : vector<32x8xf32> to vector<8x8xf32>
    %267 = vector.extract_strided_slice %232 {offsets = [8, 16], sizes = [8, 16], strides = [1, 1]} : vector<16x32xf32> to vector<8x16xf32>
    %cst_109 = arith.constant dense<0.000000e+00> : vector<8x16xf32>
    %268 = tpu.matmul %266, %267, %cst_109 {dimension_numbers = #tpu.dot_dimension_numbers<[1], [0], [0], [1], [0, 0, 1, 1], [], []>} : vector<8x8xf32>, vector<8x16xf32>, vector<8x16xf32> -> vector<8x16xf32>
    %269 = tpu.concatenate %265, %268 in 1 : vector<8x16xf32>, vector<8x16xf32> -> vector<8x32xf32>
    %270 = tpu.concatenate %262, %269 in 0 : vector<8x32xf32>, vector<8x32xf32> -> vector<16x32xf32>
    %c1_110 = arith.constant 1 : index
    %c32_111 = arith.constant 32 : index
    %c0_112 = arith.constant 0 : index
    %271 = vector.load %arg2[%c1_110, %c32_111, %c0_112] : memref<2x288x128xf32, #tpu.memory_space<vmem>>, vector<1x32x32xf32>
    %272 = vector.shape_cast %271 : vector<1x32x32xf32> to vector<32x32xf32>
    %cst_113 = arith.constant dense<0.000000e+00> : vector<16x32xf32>
    %273 = tpu.matmul %270, %272, %cst_113 {dimension_numbers = #tpu.dot_dimension_numbers<[1], [0], [0], [1], [0, 0, 1, 1], [], []>} : vector<16x32xf32>, vector<32x32xf32>, vector<16x32xf32> -> vector<16x32xf32>
    %c1_114 = arith.constant 1 : index
    %c1_115 = arith.constant 1 : index
    %c0_116 = arith.constant 0 : index
    %274 = vector.load %arg3[%c1_114, %c1_115, %c0_116] : memref<2x16x128xf32, #tpu.memory_space<vmem>>, vector<1x1x32xf32>
    %275 = vector.shape_cast %274 : vector<1x1x32xf32> to vector<1x32xf32>
    %276 = vector.broadcast %275 : vector<1x32xf32> to vector<16x32xf32>
    %277 = arith.addf %273, %276 : vector<16x32xf32>
    %278 = arith.addf %215, %277 : vector<16x32xf32>
    %c1_117 = arith.constant 1 : index
    %c5_118 = arith.constant 5 : index
    %c0_119 = arith.constant 0 : index
    %279 = vector.load %arg3[%c1_117, %c5_118, %c0_119] : memref<2x16x128xf32, #tpu.memory_space<vmem>>, vector<1x1x32xf32>
    %280 = vector.shape_cast %279 : vector<1x1x32xf32> to vector<1x32xf32>
    %c1_120 = arith.constant 1 : index
    %c6_121 = arith.constant 6 : index
    %c0_122 = arith.constant 0 : index
    %281 = vector.load %arg3[%c1_120, %c6_121, %c0_122] : memref<2x16x128xf32, #tpu.memory_space<vmem>>, vector<1x1x32xf32>
    %282 = vector.shape_cast %281 : vector<1x1x32xf32> to vector<1x32xf32>
    %cst_123 = arith.constant dense<0.000000e+00> : vector<16xf32>
    %283 = vector.multi_reduction <add>, %278, %cst_123 [1] : vector<16x32xf32> to vector<16xf32>
    %284 = vector.shape_cast %283 : vector<16xf32> to vector<16x1xf32>
    %cst_124 = arith.constant 3.200000e+01 : f32
    %285 = vector.broadcast %cst_124 : f32 to vector<16x1xf32>
    %286 = arith.divf %284, %285 : vector<16x1xf32>
    %287 = arith.mulf %278, %278 : vector<16x32xf32>
    %cst_125 = arith.constant dense<0.000000e+00> : vector<16xf32>
    %288 = vector.multi_reduction <add>, %287, %cst_125 [1] : vector<16x32xf32> to vector<16xf32>
    %289 = vector.shape_cast %288 : vector<16xf32> to vector<16x1xf32>
    %cst_126 = arith.constant 3.200000e+01 : f32
    %290 = vector.broadcast %cst_126 : f32 to vector<16x1xf32>
    %291 = arith.divf %289, %290 : vector<16x1xf32>
    %292 = arith.mulf %286, %286 : vector<16x1xf32>
    %293 = arith.subf %291, %292 : vector<16x1xf32>
    %294 = vector.broadcast %286 : vector<16x1xf32> to vector<16x32xf32>
    %295 = arith.subf %278, %294 : vector<16x32xf32>
    %cst_127 = arith.constant 9.99999974E-6 : f32
    %296 = vector.broadcast %cst_127 : f32 to vector<16x1xf32>
    %297 = arith.addf %293, %296 : vector<16x1xf32>
    %298 = math.rsqrt %297 : vector<16x1xf32>
    %299 = vector.broadcast %298 : vector<16x1xf32> to vector<16x32xf32>
    %300 = arith.mulf %295, %299 : vector<16x32xf32>
    %301 = vector.broadcast %280 : vector<1x32xf32> to vector<16x32xf32>
    %302 = arith.mulf %300, %301 : vector<16x32xf32>
    %303 = vector.broadcast %282 : vector<1x32xf32> to vector<16x32xf32>
    %304 = arith.addf %302, %303 : vector<16x32xf32>
    %c1_128 = arith.constant 1 : index
    %c0_129 = arith.constant 0 : index
    %c0_130 = arith.constant 0 : index
    %305 = vector.load %arg1[%c1_128, %c0_129, %c0_130] : memref<2x16x32xf32, #tpu.memory_space<vmem>>, vector<1x16x32xf32>
    %306 = vector.shape_cast %305 : vector<1x16x32xf32> to vector<16x32xf32>
    %c1_131 = arith.constant 1 : index
    %c64_132 = arith.constant 64 : index
    %c0_133 = arith.constant 0 : index
    %307 = vector.load %arg2[%c1_131, %c64_132, %c0_133] : memref<2x288x128xf32, #tpu.memory_space<vmem>>, vector<1x32x32xf32>
    %308 = vector.shape_cast %307 : vector<1x32x32xf32> to vector<32x32xf32>
    %cst_134 = arith.constant dense<0.000000e+00> : vector<16x32xf32>
    %309 = tpu.matmul %304, %308, %cst_134 {dimension_numbers = #tpu.dot_dimension_numbers<[1], [0], [0], [1], [0, 0, 1, 1], [], []>} : vector<16x32xf32>, vector<32x32xf32>, vector<16x32xf32> -> vector<16x32xf32>
    %c1_135 = arith.constant 1 : index
    %c2_136 = arith.constant 2 : index
    %c0_137 = arith.constant 0 : index
    %310 = vector.load %arg3[%c1_135, %c2_136, %c0_137] : memref<2x16x128xf32, #tpu.memory_space<vmem>>, vector<1x1x32xf32>
    %311 = vector.shape_cast %310 : vector<1x1x32xf32> to vector<1x32xf32>
    %312 = vector.broadcast %311 : vector<1x32xf32> to vector<16x32xf32>
    %313 = arith.addf %309, %312 : vector<16x32xf32>
    %c1_138 = arith.constant 1 : index
    %c96_139 = arith.constant 96 : index
    %c0_140 = arith.constant 0 : index
    %314 = vector.load %arg2[%c1_138, %c96_139, %c0_140] : memref<2x288x128xf32, #tpu.memory_space<vmem>>, vector<1x32x64xf32>
    %315 = vector.shape_cast %314 : vector<1x32x64xf32> to vector<32x64xf32>
    %cst_141 = arith.constant dense<0.000000e+00> : vector<16x64xf32>
    %316 = tpu.matmul %306, %315, %cst_141 {dimension_numbers = #tpu.dot_dimension_numbers<[1], [0], [0], [1], [0, 0, 1, 1], [], []>} : vector<16x32xf32>, vector<32x64xf32>, vector<16x64xf32> -> vector<16x64xf32>
    %c1_142 = arith.constant 1 : index
    %c3_143 = arith.constant 3 : index
    %c0_144 = arith.constant 0 : index
    %317 = vector.load %arg3[%c1_142, %c3_143, %c0_144] : memref<2x16x128xf32, #tpu.memory_space<vmem>>, vector<1x1x64xf32>
    %318 = vector.shape_cast %317 : vector<1x1x64xf32> to vector<1x64xf32>
    %319 = vector.broadcast %318 : vector<1x64xf32> to vector<16x64xf32>
    %320 = arith.addf %316, %319 : vector<16x64xf32>
    %321 = vector.extract_strided_slice %320 {offsets = [0, 0], sizes = [16, 32], strides = [1, 1]} : vector<16x64xf32> to vector<16x32xf32>
    %322 = vector.extract_strided_slice %320 {offsets = [0, 32], sizes = [16, 32], strides = [1, 1]} : vector<16x64xf32> to vector<16x32xf32>
    %323 = vector.extract_strided_slice %313 {offsets = [0, 0], sizes = [8, 16], strides = [1, 1]} : vector<16x32xf32> to vector<8x16xf32>
    %324 = vector.extract_strided_slice %321 {offsets = [0, 0], sizes = [8, 16], strides = [1, 1]} : vector<16x32xf32> to vector<8x16xf32>
    %cst_145 = arith.constant dense<0.000000e+00> : vector<8x8xf32>
    %325 = tpu.matmul %323, %324, %cst_145 {dimension_numbers = #tpu.dot_dimension_numbers<[1], [1], [0], [0], [0, 0, 1, 0], [], []>} : vector<8x16xf32>, vector<8x16xf32>, vector<8x8xf32> -> vector<8x8xf32>
    %326 = vector.extract_strided_slice %313 {offsets = [0, 16], sizes = [8, 16], strides = [1, 1]} : vector<16x32xf32> to vector<8x16xf32>
    %327 = vector.extract_strided_slice %321 {offsets = [0, 16], sizes = [8, 16], strides = [1, 1]} : vector<16x32xf32> to vector<8x16xf32>
    %cst_146 = arith.constant dense<0.000000e+00> : vector<8x8xf32>
    %328 = tpu.matmul %326, %327, %cst_146 {dimension_numbers = #tpu.dot_dimension_numbers<[1], [1], [0], [0], [0, 0, 1, 0], [], []>} : vector<8x16xf32>, vector<8x16xf32>, vector<8x8xf32> -> vector<8x8xf32>
    %329 = vector.extract_strided_slice %313 {offsets = [8, 0], sizes = [8, 16], strides = [1, 1]} : vector<16x32xf32> to vector<8x16xf32>
    %330 = vector.extract_strided_slice %321 {offsets = [8, 0], sizes = [8, 16], strides = [1, 1]} : vector<16x32xf32> to vector<8x16xf32>
    %cst_147 = arith.constant dense<0.000000e+00> : vector<8x8xf32>
    %331 = tpu.matmul %329, %330, %cst_147 {dimension_numbers = #tpu.dot_dimension_numbers<[1], [1], [0], [0], [0, 0, 1, 0], [], []>} : vector<8x16xf32>, vector<8x16xf32>, vector<8x8xf32> -> vector<8x8xf32>
    %332 = vector.extract_strided_slice %313 {offsets = [8, 16], sizes = [8, 16], strides = [1, 1]} : vector<16x32xf32> to vector<8x16xf32>
    %333 = vector.extract_strided_slice %321 {offsets = [8, 16], sizes = [8, 16], strides = [1, 1]} : vector<16x32xf32> to vector<8x16xf32>
    %cst_148 = arith.constant dense<0.000000e+00> : vector<8x8xf32>
    %334 = tpu.matmul %332, %333, %cst_148 {dimension_numbers = #tpu.dot_dimension_numbers<[1], [1], [0], [0], [0, 0, 1, 0], [], []>} : vector<8x16xf32>, vector<8x16xf32>, vector<8x8xf32> -> vector<8x8xf32>
    %335 = tpu.concatenate %325, %328, %331, %334 in 0 : vector<8x8xf32>, vector<8x8xf32>, vector<8x8xf32>, vector<8x8xf32> -> vector<32x8xf32>
    %cst_149 = arith.constant dense<0xFF800000> : vector<32xf32>
    %336 = vector.multi_reduction <maximumf>, %335, %cst_149 [1] : vector<32x8xf32> to vector<32xf32>
    %337 = vector.shape_cast %336 : vector<32xf32> to vector<32x1xf32>
    %338 = vector.broadcast %337 : vector<32x1xf32> to vector<32x8xf32>
    %339 = arith.subf %335, %338 : vector<32x8xf32>
    %340 = math.exp %339 : vector<32x8xf32>
    %cst_150 = arith.constant dense<0.000000e+00> : vector<32xf32>
    %341 = vector.multi_reduction <add>, %340, %cst_150 [1] : vector<32x8xf32> to vector<32xf32>
    %342 = vector.shape_cast %341 : vector<32xf32> to vector<32x1xf32>
    %343 = tpu.reciprocal %342 : vector<32x1xf32> -> vector<32x1xf32>
    %344 = vector.broadcast %343 : vector<32x1xf32> to vector<32x8xf32>
    %345 = arith.mulf %340, %344 : vector<32x8xf32>
    %346 = vector.extract_strided_slice %345 {offsets = [0, 0], sizes = [8, 8], strides = [1, 1]} : vector<32x8xf32> to vector<8x8xf32>
    %347 = vector.extract_strided_slice %322 {offsets = [0, 0], sizes = [8, 16], strides = [1, 1]} : vector<16x32xf32> to vector<8x16xf32>
    %cst_151 = arith.constant dense<0.000000e+00> : vector<8x16xf32>
    %348 = tpu.matmul %346, %347, %cst_151 {dimension_numbers = #tpu.dot_dimension_numbers<[1], [0], [0], [1], [0, 0, 1, 1], [], []>} : vector<8x8xf32>, vector<8x16xf32>, vector<8x16xf32> -> vector<8x16xf32>
    %349 = vector.extract_strided_slice %345 {offsets = [8, 0], sizes = [8, 8], strides = [1, 1]} : vector<32x8xf32> to vector<8x8xf32>
    %350 = vector.extract_strided_slice %322 {offsets = [0, 16], sizes = [8, 16], strides = [1, 1]} : vector<16x32xf32> to vector<8x16xf32>
    %cst_152 = arith.constant dense<0.000000e+00> : vector<8x16xf32>
    %351 = tpu.matmul %349, %350, %cst_152 {dimension_numbers = #tpu.dot_dimension_numbers<[1], [0], [0], [1], [0, 0, 1, 1], [], []>} : vector<8x8xf32>, vector<8x16xf32>, vector<8x16xf32> -> vector<8x16xf32>
    %352 = tpu.concatenate %348, %351 in 1 : vector<8x16xf32>, vector<8x16xf32> -> vector<8x32xf32>
    %353 = vector.extract_strided_slice %345 {offsets = [16, 0], sizes = [8, 8], strides = [1, 1]} : vector<32x8xf32> to vector<8x8xf32>
    %354 = vector.extract_strided_slice %322 {offsets = [8, 0], sizes = [8, 16], strides = [1, 1]} : vector<16x32xf32> to vector<8x16xf32>
    %cst_153 = arith.constant dense<0.000000e+00> : vector<8x16xf32>
    %355 = tpu.matmul %353, %354, %cst_153 {dimension_numbers = #tpu.dot_dimension_numbers<[1], [0], [0], [1], [0, 0, 1, 1], [], []>} : vector<8x8xf32>, vector<8x16xf32>, vector<8x16xf32> -> vector<8x16xf32>
    %356 = vector.extract_strided_slice %345 {offsets = [24, 0], sizes = [8, 8], strides = [1, 1]} : vector<32x8xf32> to vector<8x8xf32>
    %357 = vector.extract_strided_slice %322 {offsets = [8, 16], sizes = [8, 16], strides = [1, 1]} : vector<16x32xf32> to vector<8x16xf32>
    %cst_154 = arith.constant dense<0.000000e+00> : vector<8x16xf32>
    %358 = tpu.matmul %356, %357, %cst_154 {dimension_numbers = #tpu.dot_dimension_numbers<[1], [0], [0], [1], [0, 0, 1, 1], [], []>} : vector<8x8xf32>, vector<8x16xf32>, vector<8x16xf32> -> vector<8x16xf32>
    %359 = tpu.concatenate %355, %358 in 1 : vector<8x16xf32>, vector<8x16xf32> -> vector<8x32xf32>
    %360 = tpu.concatenate %352, %359 in 0 : vector<8x32xf32>, vector<8x32xf32> -> vector<16x32xf32>
    %c1_155 = arith.constant 1 : index
    %c128_156 = arith.constant 128 : index
    %c0_157 = arith.constant 0 : index
    %361 = vector.load %arg2[%c1_155, %c128_156, %c0_157] : memref<2x288x128xf32, #tpu.memory_space<vmem>>, vector<1x32x32xf32>
    %362 = vector.shape_cast %361 : vector<1x32x32xf32> to vector<32x32xf32>
    %cst_158 = arith.constant dense<0.000000e+00> : vector<16x32xf32>
    %363 = tpu.matmul %360, %362, %cst_158 {dimension_numbers = #tpu.dot_dimension_numbers<[1], [0], [0], [1], [0, 0, 1, 1], [], []>} : vector<16x32xf32>, vector<32x32xf32>, vector<16x32xf32> -> vector<16x32xf32>
    %c1_159 = arith.constant 1 : index
    %c4_160 = arith.constant 4 : index
    %c0_161 = arith.constant 0 : index
    %364 = vector.load %arg3[%c1_159, %c4_160, %c0_161] : memref<2x16x128xf32, #tpu.memory_space<vmem>>, vector<1x1x32xf32>
    %365 = vector.shape_cast %364 : vector<1x1x32xf32> to vector<1x32xf32>
    %366 = vector.broadcast %365 : vector<1x32xf32> to vector<16x32xf32>
    %367 = arith.addf %363, %366 : vector<16x32xf32>
    %368 = arith.addf %304, %367 : vector<16x32xf32>
    %c1_162 = arith.constant 1 : index
    %c7_163 = arith.constant 7 : index
    %c0_164 = arith.constant 0 : index
    %369 = vector.load %arg3[%c1_162, %c7_163, %c0_164] : memref<2x16x128xf32, #tpu.memory_space<vmem>>, vector<1x1x32xf32>
    %370 = vector.shape_cast %369 : vector<1x1x32xf32> to vector<1x32xf32>
    %c1_165 = arith.constant 1 : index
    %c8_166 = arith.constant 8 : index
    %c0_167 = arith.constant 0 : index
    %371 = vector.load %arg3[%c1_165, %c8_166, %c0_167] : memref<2x16x128xf32, #tpu.memory_space<vmem>>, vector<1x1x32xf32>
    %372 = vector.shape_cast %371 : vector<1x1x32xf32> to vector<1x32xf32>
    %cst_168 = arith.constant dense<0.000000e+00> : vector<16xf32>
    %373 = vector.multi_reduction <add>, %368, %cst_168 [1] : vector<16x32xf32> to vector<16xf32>
    %374 = vector.shape_cast %373 : vector<16xf32> to vector<16x1xf32>
    %cst_169 = arith.constant 3.200000e+01 : f32
    %375 = vector.broadcast %cst_169 : f32 to vector<16x1xf32>
    %376 = arith.divf %374, %375 : vector<16x1xf32>
    %377 = arith.mulf %368, %368 : vector<16x32xf32>
    %cst_170 = arith.constant dense<0.000000e+00> : vector<16xf32>
    %378 = vector.multi_reduction <add>, %377, %cst_170 [1] : vector<16x32xf32> to vector<16xf32>
    %379 = vector.shape_cast %378 : vector<16xf32> to vector<16x1xf32>
    %cst_171 = arith.constant 3.200000e+01 : f32
    %380 = vector.broadcast %cst_171 : f32 to vector<16x1xf32>
    %381 = arith.divf %379, %380 : vector<16x1xf32>
    %382 = arith.mulf %376, %376 : vector<16x1xf32>
    %383 = arith.subf %381, %382 : vector<16x1xf32>
    %384 = vector.broadcast %376 : vector<16x1xf32> to vector<16x32xf32>
    %385 = arith.subf %368, %384 : vector<16x32xf32>
    %cst_172 = arith.constant 9.99999974E-6 : f32
    %386 = vector.broadcast %cst_172 : f32 to vector<16x1xf32>
    %387 = arith.addf %383, %386 : vector<16x1xf32>
    %388 = math.rsqrt %387 : vector<16x1xf32>
    %389 = vector.broadcast %388 : vector<16x1xf32> to vector<16x32xf32>
    %390 = arith.mulf %385, %389 : vector<16x32xf32>
    %391 = vector.broadcast %370 : vector<1x32xf32> to vector<16x32xf32>
    %392 = arith.mulf %390, %391 : vector<16x32xf32>
    %393 = vector.broadcast %372 : vector<1x32xf32> to vector<16x32xf32>
    %394 = arith.addf %392, %393 : vector<16x32xf32>
    %c1_173 = arith.constant 1 : index
    %c160_174 = arith.constant 160 : index
    %c0_175 = arith.constant 0 : index
    %395 = vector.load %arg2[%c1_173, %c160_174, %c0_175] : memref<2x288x128xf32, #tpu.memory_space<vmem>>, vector<1x32x64xf32>
    %396 = vector.shape_cast %395 : vector<1x32x64xf32> to vector<32x64xf32>
    %cst_176 = arith.constant dense<0.000000e+00> : vector<16x64xf32>
    %397 = tpu.matmul %394, %396, %cst_176 {dimension_numbers = #tpu.dot_dimension_numbers<[1], [0], [0], [1], [0, 0, 1, 1], [], []>} : vector<16x32xf32>, vector<32x64xf32>, vector<16x64xf32> -> vector<16x64xf32>
    %c1_177 = arith.constant 1 : index
    %c11_178 = arith.constant 11 : index
    %c0_179 = arith.constant 0 : index
    %398 = vector.load %arg3[%c1_177, %c11_178, %c0_179] : memref<2x16x128xf32, #tpu.memory_space<vmem>>, vector<1x1x64xf32>
    %399 = vector.shape_cast %398 : vector<1x1x64xf32> to vector<1x64xf32>
    %400 = vector.broadcast %399 : vector<1x64xf32> to vector<16x64xf32>
    %401 = arith.addf %397, %400 : vector<16x64xf32>
    %cst_180 = arith.constant 0.000000e+00 : f32
    %402 = vector.broadcast %cst_180 : f32 to vector<16x64xf32>
    %403 = arith.maximumf %401, %402 : vector<16x64xf32>
    %c1_181 = arith.constant 1 : index
    %c192_182 = arith.constant 192 : index
    %c0_183 = arith.constant 0 : index
    %404 = vector.load %arg2[%c1_181, %c192_182, %c0_183] : memref<2x288x128xf32, #tpu.memory_space<vmem>>, vector<1x64x32xf32>
    %405 = vector.shape_cast %404 : vector<1x64x32xf32> to vector<64x32xf32>
    %cst_184 = arith.constant dense<0.000000e+00> : vector<16x32xf32>
    %406 = tpu.matmul %403, %405, %cst_184 {dimension_numbers = #tpu.dot_dimension_numbers<[1], [0], [0], [1], [0, 0, 1, 1], [], []>} : vector<16x64xf32>, vector<64x32xf32>, vector<16x32xf32> -> vector<16x32xf32>
    %c1_185 = arith.constant 1 : index
    %c12_186 = arith.constant 12 : index
    %c0_187 = arith.constant 0 : index
    %407 = vector.load %arg3[%c1_185, %c12_186, %c0_187] : memref<2x16x128xf32, #tpu.memory_space<vmem>>, vector<1x1x32xf32>
    %408 = vector.shape_cast %407 : vector<1x1x32xf32> to vector<1x32xf32>
    %409 = vector.broadcast %408 : vector<1x32xf32> to vector<16x32xf32>
    %410 = arith.addf %406, %409 : vector<16x32xf32>
    %411 = arith.addf %394, %410 : vector<16x32xf32>
    %c1_188 = arith.constant 1 : index
    %c9_189 = arith.constant 9 : index
    %c0_190 = arith.constant 0 : index
    %412 = vector.load %arg3[%c1_188, %c9_189, %c0_190] : memref<2x16x128xf32, #tpu.memory_space<vmem>>, vector<1x1x32xf32>
    %413 = vector.shape_cast %412 : vector<1x1x32xf32> to vector<1x32xf32>
    %c1_191 = arith.constant 1 : index
    %c10_192 = arith.constant 10 : index
    %c0_193 = arith.constant 0 : index
    %414 = vector.load %arg3[%c1_191, %c10_192, %c0_193] : memref<2x16x128xf32, #tpu.memory_space<vmem>>, vector<1x1x32xf32>
    %415 = vector.shape_cast %414 : vector<1x1x32xf32> to vector<1x32xf32>
    %cst_194 = arith.constant dense<0.000000e+00> : vector<16xf32>
    %416 = vector.multi_reduction <add>, %411, %cst_194 [1] : vector<16x32xf32> to vector<16xf32>
    %417 = vector.shape_cast %416 : vector<16xf32> to vector<16x1xf32>
    %cst_195 = arith.constant 3.200000e+01 : f32
    %418 = vector.broadcast %cst_195 : f32 to vector<16x1xf32>
    %419 = arith.divf %417, %418 : vector<16x1xf32>
    %420 = arith.mulf %411, %411 : vector<16x32xf32>
    %cst_196 = arith.constant dense<0.000000e+00> : vector<16xf32>
    %421 = vector.multi_reduction <add>, %420, %cst_196 [1] : vector<16x32xf32> to vector<16xf32>
    %422 = vector.shape_cast %421 : vector<16xf32> to vector<16x1xf32>
    %cst_197 = arith.constant 3.200000e+01 : f32
    %423 = vector.broadcast %cst_197 : f32 to vector<16x1xf32>
    %424 = arith.divf %422, %423 : vector<16x1xf32>
    %425 = arith.mulf %419, %419 : vector<16x1xf32>
    %426 = arith.subf %424, %425 : vector<16x1xf32>
    %427 = vector.broadcast %419 : vector<16x1xf32> to vector<16x32xf32>
    %428 = arith.subf %411, %427 : vector<16x32xf32>
    %cst_198 = arith.constant 9.99999974E-6 : f32
    %429 = vector.broadcast %cst_198 : f32 to vector<16x1xf32>
    %430 = arith.addf %426, %429 : vector<16x1xf32>
    %431 = math.rsqrt %430 : vector<16x1xf32>
    %432 = vector.broadcast %431 : vector<16x1xf32> to vector<16x32xf32>
    %433 = arith.mulf %428, %432 : vector<16x32xf32>
    %434 = vector.broadcast %413 : vector<1x32xf32> to vector<16x32xf32>
    %435 = arith.mulf %433, %434 : vector<16x32xf32>
    %436 = vector.broadcast %415 : vector<1x32xf32> to vector<16x32xf32>
    %437 = arith.addf %435, %436 : vector<16x32xf32>
    %c1_199 = arith.constant 1 : index
    %c256_200 = arith.constant 256 : index
    %c0_201 = arith.constant 0 : index
    %438 = vector.load %arg2[%c1_199, %c256_200, %c0_201] : memref<2x288x128xf32, #tpu.memory_space<vmem>>, vector<1x32x8xf32>
    %439 = vector.shape_cast %438 : vector<1x32x8xf32> to vector<32x8xf32>
    %cst_202 = arith.constant dense<0.000000e+00> : vector<16x8xf32>
    %440 = tpu.matmul %437, %439, %cst_202 {dimension_numbers = #tpu.dot_dimension_numbers<[1], [0], [0], [1], [0, 0, 1, 1], [], []>} : vector<16x32xf32>, vector<32x8xf32>, vector<16x8xf32> -> vector<16x8xf32>
    %c1_203 = arith.constant 1 : index
    %c13_204 = arith.constant 13 : index
    %c0_205 = arith.constant 0 : index
    %441 = vector.load %arg3[%c1_203, %c13_204, %c0_205] : memref<2x16x128xf32, #tpu.memory_space<vmem>>, vector<1x1x8xf32>
    %442 = vector.shape_cast %441 : vector<1x1x8xf32> to vector<1x8xf32>
    %443 = vector.broadcast %442 : vector<1x8xf32> to vector<16x8xf32>
    %444 = arith.addf %440, %443 : vector<16x8xf32>
    %445 = arith.addf %222, %444 : vector<16x8xf32>
    %c0_206 = arith.constant 0 : index
    %c0_207 = arith.constant 0 : index
    %446 = vector.load %arg4[%c0_206, %c0_207] : memref<16x8xf32, #tpu.memory_space<vmem>>, vector<16x8xf32>
    tpu.vector_store %arg4[%c0_206, %c0_207], %445 {strides = array<i32>} : memref<16x8xf32, #tpu.memory_space<vmem>>, vector<16x8xf32>,
    return
  }
}

</mosaic_0001>

<llo_original>
// kernel: decoder_forward.1
$region0: #{decoder_forward.1}
  #allocation0 [shape = 'u32[]', space=smem, size = 0x4, offset = 0x4, fixed_abs, tag = 'smem constant byte address 0x4 - core index']
  #allocation1 [shape = 'u32[144,128]{1,0:T(1,128)}', space=vmem, size = 0x12000, scoped, tag = 'internal scratch']
  %s0 = inlined_call_operand.vmem [shape: f32[16,32], index: 0, kind: input, shape index: {}]
  %s1 = inlined_call_operand.vmem [shape: f32[2,16,32], index: 1, kind: input, shape index: {}]
  %s2 = inlined_call_operand.vmem [shape: f32[2,288,128], index: 2, kind: input, shape index: {}]
  %s3 = inlined_call_operand.vmem [shape: f32[2,16,128], index: 3, kind: input, shape index: {}]
  %s4 = inlined_call_operand.vmem [shape: f32[16,8], index: 4, kind: output, shape index: {}]
  %s5 = sld [smem:[#allocation0]]
  $region26: #{decoder_forward.1} parent=0
    _
  %s7 = ssub.s32 1, %s5
  %s8 = scalar_select 0, %s7, %s5
  // Predicated region
  $region2: #{decoder_forward.1} parent=0 // pred_check
    _
  $region3: #{decoder_forward.1} parent=0 // pred_check_branch
    %10 = sbr.rel (0) target = $region5
  $region4: #{decoder_forward.1} parent=0 // pred_region
    _
  $region5: #{decoder_forward.1} parent=0 // pred_fallthru
    _
  // Predicated region
  $region6: #{decoder_forward.1} parent=0 // pred_check
    _
  $region7: #{decoder_forward.1} parent=0 // pred_check_branch
    %12 = sbr.rel (0) target = $region9
  $region8: #{decoder_forward.1} parent=0 // pred_region
    _
  $region9: #{decoder_forward.1} parent=0 // pred_fallthru
    _
  // Predicated region
  $region10: #{decoder_forward.1} parent=0 // pred_check
    _
  $region11: #{decoder_forward.1} parent=0 // pred_check_branch
    %14 = sbr.rel (0) target = $region13
  $region12: #{decoder_forward.1} parent=0 // pred_region
    _
  $region13: #{decoder_forward.1} parent=0 // pred_fallthru
    _
  // Predicated region
  $region14: #{decoder_forward.1} parent=0 // pred_check
    _
  $region15: #{decoder_forward.1} parent=0 // pred_check_branch
    %16 = sbr.rel (0) target = $region17
  $region16: #{decoder_forward.1} parent=0 // pred_region
    _
  $region17: #{decoder_forward.1} parent=0 // pred_fallthru
    _
  %v17 = vld [vmem:[%s0] sm:$0xff]
  %v18 = vld [vmem:[%s0 + $0x8] sm:$0xff]
  %v19 = vld [vmem:[%s2] sm:$0xff]
  %v20 = vld [vmem:[%s2 + $0x8] sm:$0xff]
  %v21 = vld [vmem:[%s2 + $0x10] sm:$0xff]
  %v22 = vld [vmem:[%s2 + $0x18] sm:$0xff]
  %v23 = vld [vmem:[%s3] sm:$0x1]
  %v24 = vlaneseq
  %v25 = vshrl.u32 %v24, 7
  %v26 = vsub.s32 0, %v25
  %v27 = vrot.slane %v23, %v26
  %vm28 = vcmask 261120
  %v30 = vsel %vm28, %v17, 0
  %v33 = vsel %vm28, %v18, 0
  %35 = vmatprep.subr.mxu0 0.0
  %36 = vmatpush1.msra.mxu0 %v19
  %37 = vmatprep.subr.mxu0 0.0
  %38 = vmatpush1.msra.mxu0 %v20
  %39 = vmatprep.subr.mxu0 0.0
  %40 = vmatpush1.msra.mxu0 %v21
  %41 = vmatprep.subr.mxu0 0.0
  %42 = vmatpush1.msra.mxu0 %v22
  %43 = vmatprep.subr.mxu0 0.0
  %44 = vmatpush1.msra.mxu0 0.0
  %45 = vmatprep.subr.mxu0 0.0
  %46 = vmatpush1.msra.mxu0 0.0
  %47 = vmatprep.subr.mxu0 0.0
  %48 = vmatpush1.msra.mxu0 0.0
  %49 = vmatprep.subr.mxu0 0.0
  %50 = vmatpush1.msra.mxu0 0.0
  %51 = vmatprep.subr.mxu0 0.0
  %52 = vmatpush1.msra.mxu0 0.0
  %53 = vmatprep.subr.mxu0 0.0
  %54 = vmatpush1.msra.mxu0 0.0
  %55 = vmatprep.subr.mxu0 0.0
  %56 = vmatpush1.msra.mxu0 0.0
  %57 = vmatprep.subr.mxu0 0.0
  %58 = vmatpush1.msra.mxu0 0.0
  %59 = vmatprep.subr.mxu0 0.0
  %60 = vmatpush1.msra.mxu0 0.0
  %61 = vmatprep.subr.mxu0 0.0
  %62 = vmatpush1.msra.mxu0 0.0
  %63 = vmatprep.subr.mxu0 0.0
  %64 = vmatpush1.msra.mxu0 0.0
  %65 = vmatprep.subr.mxu0 0.0
  %66 = vmatpush1.msra.mxu0 0.0
  %67 = vmatprep.subr.mxu0 0.0
  %68 = vmatpush1.msra.mxu0 0.0
  %69 = vmatprep.subr.mxu0 0.0
  %70 = vmatpush1.msra.mxu0 0.0
  %71 = vmatprep.subr.mxu0 0.0
  %72 = vmatpush1.msra.mxu0 0.0
  %73 = vmatprep.subr.mxu0 0.0
  %74 = vmatpush1.msra.mxu0 0.0
  %75 = vmatprep.subr.mxu0 0.0
  %76 = vmatpush1.msra.mxu0 0.0
  %77 = vmatprep.subr.mxu0 0.0
  %78 = vmatpush1.msra.mxu0 0.0
  %79 = vmatprep.subr.mxu0 0.0
  %80 = vmatpush1.msra.mxu0 0.0
  %81 = vmatprep.subr.mxu0 0.0
  %82 = vmatpush1.msra.mxu0 0.0
  %83 = vmatprep.subr.mxu0 0.0
  %84 = vmatpush1.msra.mxu0 0.0
  %85 = vmatprep.subr.mxu0 0.0
  %86 = vmatpush1.msra.mxu0 0.0
  %87 = vmatprep.subr.mxu0 0.0
  %88 = vmatpush1.msra.mxu0 0.0
  %89 = vmatprep.subr.mxu0 0.0
  %90 = vmatpush1.msra.mxu0 0.0
  %91 = vmatprep.subr.mxu0 0.0
  %92 = vmatpush1.msra.mxu0 0.0
  %93 = vmatprep.subr.mxu0 0.0
  %94 = vmatpush1.msra.mxu0 0.0
  %95 = vmatprep.subr.mxu0 0.0
  %96 = vmatpush1.msra.mxu0 0.0
  %97 = vmatprep.subr.mxu0 0.0
  %98 = vmatpush1.msra.mxu0 0.0
  %99 = vmatprep.mubr.f32.mxu0 0.0
  %100 = vmatmul.mubr.f32.gmra.mrb[0].mxu0 %v30
  %v101 = vpop.f32.mrb[0].mxu0
  %v102 = vadd.f32 %v27, %v101
  %v103 = vpop.f32.mrb[0].mxu0
  %104 = vmatprep.mubr.f32.mxu0 0.0
  %105 = vmatmul.mubr.f32.gmra.mrb[0].mxu0 %v33
  %v106 = vpop.f32.mrb[0].mxu0
  %v107 = vadd.f32 %v27, %v106
  %v108 = vpop.f32.mrb[0].mxu0
  %109 = vdwg.mxu0
  %111 = vrot.lane.b32.xlu0 %v102, 96
  %v112 = vpop.permute.xlu0 %111
  %vm113 = vcmask 130048
  %v114 = vsel %vm113, %v102, 0
  %v116 = vsel %vm113, %v112, 0
  %118 = vmatprep.subr.mxu0 0.0
  %119 = vmatpush1.xpose.msra.mxu0 %v116
  %120 = vmatprep.subr.mxu0 0.0
  %121 = vmatpush1.xpose.msra.mxu0 0.0
  %122 = vmatprep.subr.mxu0 0.0
  %123 = vmatpush1.xpose.msra.mxu0 0.0
  %124 = vmatprep.subr.mxu0 0.0
  %125 = vmatpush1.xpose.msra.mxu0 0.0
  %126 = vmatprep.subr.mxu0 0.0
  %127 = vmatpush1.xpose.msra.mxu0 0.0
  %128 = vmatprep.subr.mxu0 0.0
  %129 = vmatpush1.xpose.msra.mxu0 0.0
  %130 = vmatprep.subr.mxu0 0.0
  %131 = vmatpush1.xpose.msra.mxu0 0.0
  %132 = vmatprep.subr.mxu0 0.0
  %133 = vmatpush1.xpose.msra.mxu0 0.0
  %134 = vmatprep.subr.mxu0 0.0
  %135 = vmatpush1.xpose.msra.mxu0 0.0
  %136 = vmatprep.subr.mxu0 0.0
  %137 = vmatpush1.xpose.msra.mxu0 0.0
  %138 = vmatprep.subr.mxu0 0.0
  %139 = vmatpush1.xpose.msra.mxu0 0.0
  %140 = vmatprep.subr.mxu0 0.0
  %141 = vmatpush1.xpose.msra.mxu0 0.0
  %142 = vmatprep.subr.mxu0 0.0
  %143 = vmatpush1.xpose.msra.mxu0 0.0
  %144 = vmatprep.subr.mxu0 0.0
  %145 = vmatpush1.xpose.msra.mxu0 0.0
  %146 = vmatprep.subr.mxu0 0.0
  %147 = vmatpush1.xpose.msra.mxu0 0.0
  %148 = vmatprep.subr.mxu0 0.0
  %149 = vmatpush1.xpose.msra.mxu0 0.0
  %150 = vmatprep.subr.mxu0 0.0
  %151 = vmatpush1.xpose.msra.mxu0 0.0
  %152 = vmatprep.subr.mxu0 0.0
  %153 = vmatpush1.xpose.msra.mxu0 0.0
  %154 = vmatprep.subr.mxu0 0.0
  %155 = vmatpush1.xpose.msra.mxu0 0.0
  %156 = vmatprep.subr.mxu0 0.0
  %157 = vmatpush1.xpose.msra.mxu0 0.0
  %158 = vmatprep.subr.mxu0 0.0
  %159 = vmatpush1.xpose.msra.mxu0 0.0
  %160 = vmatprep.subr.mxu0 0.0
  %161 = vmatpush1.xpose.msra.mxu0 0.0
  %162 = vmatprep.subr.mxu0 0.0
  %163 = vmatpush1.xpose.msra.mxu0 0.0
  %164 = vmatprep.subr.mxu0 0.0
  %165 = vmatpush1.xpose.msra.mxu0 0.0
  %166 = vmatprep.subr.mxu0 0.0
  %167 = vmatpush1.xpose.msra.mxu0 0.0
  %168 = vmatprep.subr.mxu0 0.0
  %169 = vmatpush1.xpose.msra.mxu0 0.0
  %170 = vmatprep.subr.mxu0 0.0
  %171 = vmatpush1.xpose.msra.mxu0 0.0
  %172 = vmatprep.subr.mxu0 0.0
  %173 = vmatpush1.xpose.msra.mxu0 0.0
  %174 = vmatprep.subr.mxu0 0.0
  %175 = vmatpush1.xpose.msra.mxu0 0.0
  %176 = vmatprep.subr.mxu0 0.0
  %177 = vmatpush1.xpose.msra.mxu0 0.0
  %178 = vmatprep.subr.mxu0 0.0
  %179 = vmatpush1.xpose.msra.mxu0 0.0
  %180 = vmatprep.subr.mxu0 0.0
  %181 = vmatpush1.xpose.msra.mxu0 0.0
  %182 = vmatprep.mubr.f32.mxu0 0.0
  %183 = vmatmul.mubr.f32.gmra.mrb[0].mxu0 %v114
  %v184 = vpop.f32.mrb[0].mxu0
  %v185 = vadd.f32 0.0, %v184
  %v186 = vpop.f32.mrb[0].mxu0
  %187 = vdwg.mxu0
  %188 = vrot.lane.b32.xlu0 %v102, 112
  %v189 = vpop.permute.xlu0 %188
  %190 = vrot.lane.b32.xlu0 %v102, 80
  %v191 = vpop.permute.xlu0 %190
  %v192 = vsel %vm113, %v189, 0
  %v194 = vsel %vm113, %v191, 0
  %196 = vmatprep.subr.mxu0 0.0
  %197 = vmatpush1.xpose.msra.mxu0 %v194
  %198 = vmatprep.subr.mxu0 0.0
  %199 = vmatpush1.xpose.msra.mxu0 0.0
  %200 = vmatprep.subr.mxu0 0.0
  %201 = vmatpush1.xpose.msra.mxu0 0.0
  %202 = vmatprep.subr.mxu0 0.0
  %203 = vmatpush1.xpose.msra.mxu0 0.0
  %204 = vmatprep.subr.mxu0 0.0
  %205 = vmatpush1.xpose.msra.mxu0 0.0
  %206 = vmatprep.subr.mxu0 0.0
  %207 = vmatpush1.xpose.msra.mxu0 0.0
  %208 = vmatprep.subr.mxu0 0.0
  %209 = vmatpush1.xpose.msra.mxu0 0.0
  %210 = vmatprep.subr.mxu0 0.0
  %211 = vmatpush1.xpose.msra.mxu0 0.0
  %212 = vmatprep.subr.mxu0 0.0
  %213 = vmatpush1.xpose.msra.mxu0 0.0
  %214 = vmatprep.subr.mxu0 0.0
  %215 = vmatpush1.xpose.msra.mxu0 0.0
  %216 = vmatprep.subr.mxu0 0.0
  %217 = vmatpush1.xpose.msra.mxu0 0.0
  %218 = vmatprep.subr.mxu0 0.0
  %219 = vmatpush1.xpose.msra.mxu0 0.0
  %220 = vmatprep.subr.mxu0 0.0
  %221 = vmatpush1.xpose.msra.mxu0 0.0
  %222 = vmatprep.subr.mxu0 0.0
  %223 = vmatpush1.xpose.msra.mxu0 0.0
  %224 = vmatprep.subr.mxu0 0.0
  %225 = vmatpush1.xpose.msra.mxu0 0.0
  %226 = vmatprep.subr.mxu0 0.0
  %227 = vmatpush1.xpose.msra.mxu0 0.0
  %228 = vmatprep.subr.mxu0 0.0
  %229 = vmatpush1.xpose.msra.mxu0 0.0
  %230 = vmatprep.subr.mxu0 0.0
  %231 = vmatpush1.xpose.msra.mxu0 0.0
  %232 = vmatprep.subr.mxu0 0.0
  %233 = vmatpush1.xpose.msra.mxu0 0.0
  %234 = vmatprep.subr.mxu0 0.0
  %235 = vmatpush1.xpose.msra.mxu0 0.0
  %236 = vmatprep.subr.mxu0 0.0
  %237 = vmatpush1.xpose.msra.mxu0 0.0
  %238 = vmatprep.subr.mxu0 0.0
  %239 = vmatpush1.xpose.msra.mxu0 0.0
  %240 = vmatprep.subr.mxu0 0.0
  %241 = vmatpush1.xpose.msra.mxu0 0.0
  %242 = vmatprep.subr.mxu0 0.0
  %243 = vmatpush1.xpose.msra.mxu0 0.0
  %244 = vmatprep.subr.mxu0 0.0
  %245 = vmatpush1.xpose.msra.mxu0 0.0
  %246 = vmatprep.subr.mxu0 0.0
  %247 = vmatpush1.xpose.msra.mxu0 0.0
  %248 = vmatprep.subr.mxu0 0.0
  %249 = vmatpush1.xpose.msra.mxu0 0.0
  %250 = vmatprep.subr.mxu0 0.0
  %251 = vmatpush1.xpose.msra.mxu0 0.0
  %252 = vmatprep.subr.mxu0 0.0
  %253 = vmatpush1.xpose.msra.mxu0 0.0
  %254 = vmatprep.subr.mxu0 0.0
  %255 = vmatpush1.xpose.msra.mxu0 0.0
  %256 = vmatprep.subr.mxu0 0.0
  %257 = vmatpush1.xpose.msra.mxu0 0.0
  %258 = vmatprep.subr.mxu0 0.0
  %259 = vmatpush1.xpose.msra.mxu0 0.0
  %260 = vmatprep.mubr.f32.mxu0 0.0
  %261 = vmatmul.mubr.f32.gmra.mrb[0].mxu0 %v192
  %v262 = vpop.f32.mrb[0].mxu0
  %v263 = vadd.f32 0.0, %v262
  %v264 = vpop.f32.mrb[0].mxu0
  %265 = vdwg.mxu0
  %267 = vrot.lane.b32.xlu0 %v107, 96
  %v268 = vpop.permute.xlu0 %267
  %v269 = vsel %vm113, %v107, 0
  %v271 = vsel %vm113, %v268, 0
  %273 = vmatprep.subr.mxu0 0.0
  %274 = vmatpush1.xpose.msra.mxu0 %v271
  %275 = vmatprep.subr.mxu0 0.0
  %276 = vmatpush1.xpose.msra.mxu0 0.0
  %277 = vmatprep.subr.mxu0 0.0
  %278 = vmatpush1.xpose.msra.mxu0 0.0
  %279 = vmatprep.subr.mxu0 0.0
  %280 = vmatpush1.xpose.msra.mxu0 0.0
  %281 = vmatprep.subr.mxu0 0.0
  %282 = vmatpush1.xpose.msra.mxu0 0.0
  %283 = vmatprep.subr.mxu0 0.0
  %284 = vmatpush1.xpose.msra.mxu0 0.0
  %285 = vmatprep.subr.mxu0 0.0
  %286 = vmatpush1.xpose.msra.mxu0 0.0
  %287 = vmatprep.subr.mxu0 0.0
  %288 = vmatpush1.xpose.msra.mxu0 0.0
  %289 = vmatprep.subr.mxu0 0.0
  %290 = vmatpush1.xpose.msra.mxu0 0.0
  %291 = vmatprep.subr.mxu0 0.0
  %292 = vmatpush1.xpose.msra.mxu0 0.0
  %293 = vmatprep.subr.mxu0 0.0
  %294 = vmatpush1.xpose.msra.mxu0 0.0
  %295 = vmatprep.subr.mxu0 0.0
  %296 = vmatpush1.xpose.msra.mxu0 0.0
  %297 = vmatprep.subr.mxu0 0.0
  %298 = vmatpush1.xpose.msra.mxu0 0.0
  %299 = vmatprep.subr.mxu0 0.0
  %300 = vmatpush1.xpose.msra.mxu0 0.0
  %301 = vmatprep.subr.mxu0 0.0
  %302 = vmatpush1.xpose.msra.mxu0 0.0
  %303 = vmatprep.subr.mxu0 0.0
  %304 = vmatpush1.xpose.msra.mxu0 0.0
  %305 = vmatprep.subr.mxu0 0.0
  %306 = vmatpush1.xpose.msra.mxu0 0.0
  %307 = vmatprep.subr.mxu0 0.0
  %308 = vmatpush1.xpose.msra.mxu0 0.0
  %309 = vmatprep.subr.mxu0 0.0
  %310 = vmatpush1.xpose.msra.mxu0 0.0
  %311 = vmatprep.subr.mxu0 0.0
  %312 = vmatpush1.xpose.msra.mxu0 0.0
  %313 = vmatprep.subr.mxu0 0.0
  %314 = vmatpush1.xpose.msra.mxu0 0.0
  %315 = vmatprep.subr.mxu0 0.0
  %316 = vmatpush1.xpose.msra.mxu0 0.0
  %317 = vmatprep.subr.mxu0 0.0
  %318 = vmatpush1.xpose.msra.mxu0 0.0
  %319 = vmatprep.subr.mxu0 0.0
  %320 = vmatpush1.xpose.msra.mxu0 0.0
  %321 = vmatprep.subr.mxu0 0.0
  %322 = vmatpush1.xpose.msra.mxu0 0.0
  %323 = vmatprep.subr.mxu0 0.0
  %324 = vmatpush1.xpose.msra.mxu0 0.0
  %325 = vmatprep.subr.mxu0 0.0
  %326 = vmatpush1.xpose.msra.mxu0 0.0
  %327 = vmatprep.subr.mxu0 0.0
  %328 = vmatpush1.xpose.msra.mxu0 0.0
  %329 = vmatprep.subr.mxu0 0.0
  %330 = vmatpush1.xpose.msra.mxu0 0.0
  %331 = vmatprep.subr.mxu0 0.0
  %332 = vmatpush1.xpose.msra.mxu0 0.0
  %333 = vmatprep.subr.mxu0 0.0
  %334 = vmatpush1.xpose.msra.mxu0 0.0
  %335 = vmatprep.subr.mxu0 0.0
  %336 = vmatpush1.xpose.msra.mxu0 0.0
  %337 = vmatprep.mubr.f32.mxu0 0.0
  %338 = vmatmul.mubr.f32.gmra.mrb[0].mxu0 %v269
  %v339 = vpop.f32.mrb[0].mxu0
  %v340 = vadd.f32 0.0, %v339
  %v341 = vpop.f32.mrb[0].mxu0
  %342 = vdwg.mxu0
  %343 = vrot.lane.b32.xlu0 %v107, 112
  %v344 = vpop.permute.xlu0 %343
  %345 = vrot.lane.b32.xlu0 %v107, 80
  %v346 = vpop.permute.xlu0 %345
  %v347 = vsel %vm113, %v344, 0
  %v349 = vsel %vm113, %v346, 0
  %351 = vmatprep.subr.mxu0 0.0
  %352 = vmatpush1.xpose.msra.mxu0 %v349
  %353 = vmatprep.subr.mxu0 0.0
  %354 = vmatpush1.xpose.msra.mxu0 0.0
  %355 = vmatprep.subr.mxu0 0.0
  %356 = vmatpush1.xpose.msra.mxu0 0.0
  %357 = vmatprep.subr.mxu0 0.0
  %358 = vmatpush1.xpose.msra.mxu0 0.0
  %359 = vmatprep.subr.mxu0 0.0
  %360 = vmatpush1.xpose.msra.mxu0 0.0
  %361 = vmatprep.subr.mxu0 0.0
  %362 = vmatpush1.xpose.msra.mxu0 0.0
  %363 = vmatprep.subr.mxu0 0.0
  %364 = vmatpush1.xpose.msra.mxu0 0.0
  %365 = vmatprep.subr.mxu0 0.0
  %366 = vmatpush1.xpose.msra.mxu0 0.0
  %367 = vmatprep.subr.mxu0 0.0
  %368 = vmatpush1.xpose.msra.mxu0 0.0
  %369 = vmatprep.subr.mxu0 0.0
  %370 = vmatpush1.xpose.msra.mxu0 0.0
  %371 = vmatprep.subr.mxu0 0.0
  %372 = vmatpush1.xpose.msra.mxu0 0.0
  %373 = vmatprep.subr.mxu0 0.0
  %374 = vmatpush1.xpose.msra.mxu0 0.0
  %375 = vmatprep.subr.mxu0 0.0
  %376 = vmatpush1.xpose.msra.mxu0 0.0
  %377 = vmatprep.subr.mxu0 0.0
  %378 = vmatpush1.xpose.msra.mxu0 0.0
  %379 = vmatprep.subr.mxu0 0.0
  %380 = vmatpush1.xpose.msra.mxu0 0.0
  %381 = vmatprep.subr.mxu0 0.0
  %382 = vmatpush1.xpose.msra.mxu0 0.0
  %383 = vmatprep.subr.mxu0 0.0
  %384 = vmatpush1.xpose.msra.mxu0 0.0
  %385 = vmatprep.subr.mxu0 0.0
  %386 = vmatpush1.xpose.msra.mxu0 0.0
  %387 = vmatprep.subr.mxu0 0.0
  %388 = vmatpush1.xpose.msra.mxu0 0.0
  %389 = vmatprep.subr.mxu0 0.0
  %390 = vmatpush1.xpose.msra.mxu0 0.0
  %391 = vmatprep.subr.mxu0 0.0
  %392 = vmatpush1.xpose.msra.mxu0 0.0
  %393 = vmatprep.subr.mxu0 0.0
  %394 = vmatpush1.xpose.msra.mxu0 0.0
  %395 = vmatprep.subr.mxu0 0.0
  %396 = vmatpush1.xpose.msra.mxu0 0.0
  %397 = vmatprep.subr.mxu0 0.0
  %398 = vmatpush1.xpose.msra.mxu0 0.0
  %399 = vmatprep.subr.mxu0 0.0
  %400 = vmatpush1.xpose.msra.mxu0 0.0
  %401 = vmatprep.subr.mxu0 0.0
  %402 = vmatpush1.xpose.msra.mxu0 0.0
  %403 = vmatprep.subr.mxu0 0.0
  %404 = vmatpush1.xpose.msra.mxu0 0.0
  %405 = vmatprep.subr.mxu0 0.0
  %406 = vmatpush1.xpose.msra.mxu0 0.0
  %407 = vmatprep.subr.mxu0 0.0
  %408 = vmatpush1.xpose.msra.mxu0 0.0
  %409 = vmatprep.subr.mxu0 0.0
  %410 = vmatpush1.xpose.msra.mxu0 0.0
  %411 = vmatprep.subr.mxu0 0.0
  %412 = vmatpush1.xpose.msra.mxu0 0.0
  %413 = vmatprep.subr.mxu0 0.0
  %414 = vmatpush1.xpose.msra.mxu0 0.0
  %415 = vmatprep.mubr.f32.mxu0 0.0
  %416 = vmatmul.mubr.f32.gmra.mrb[0].mxu0 %v347
  %v417 = vpop.f32.mrb[0].mxu0
  %v418 = vadd.f32 0.0, %v417
  %v419 = vpop.f32.mrb[0].mxu0
  %420 = vdwg.mxu0
  %vm421 = vcmask 64512
  %v422 = vsel %vm421, %v185, -inf
  %423 = vmax.xlane.f32.xlu0 %v422
  %v424 = vpop.xlane.xlu0 %423
  %v425 = vsel %vm421, %v263, -inf
  %426 = vmax.xlane.f32.xlu0 %v425
  %v427 = vpop.xlane.xlu0 %426
  %v428 = vsel %vm421, %v340, -inf
  %429 = vmax.xlane.f32.xlu0 %v428
  %v430 = vpop.xlane.xlu0 %429
  %v431 = vsel %vm421, %v418, -inf
  %432 = vmax.xlane.f32.xlu0 %v431
  %v433 = vpop.xlane.xlu0 %432
  %v434 = vsub.f32 %v185, %v424
  %v435 = vsub.f32 %v263, %v427
  %v436 = vsub.f32 %v340, %v430
  %v437 = vsub.f32 %v418, %v433
  %v438 = vmul.f32 %v434, 1.442695
  %v439 = vpow.pop %v438
  %v440 = vmul.f32 %v435, 1.442695
  %v441 = vpow.pop %v440
  %v442 = vmul.f32 %v436, 1.442695
  %v443 = vpow.pop %v442
  %v444 = vmul.f32 %v437, 1.442695
  %v445 = vpow.pop %v444
  %v446 = vsel %vm421, %v439, 0.0
  %447 = vadd.xlane.f32.xlu0 %v446
  %v448 = vpop.xlane.xlu0 %447
  %v449 = vsel %vm421, %v441, 0.0
  %450 = vadd.xlane.f32.xlu0 %v449
  %v451 = vpop.xlane.xlu0 %450
  %v452 = vsel %vm421, %v443, 0.0
  %453 = vadd.xlane.f32.xlu0 %v452
  %v454 = vpop.xlane.xlu0 %453
  %v455 = vsel %vm421, %v445, 0.0
  %456 = vadd.xlane.f32.xlu0 %v455
  %v457 = vpop.xlane.xlu0 %456
  %v458 = vrcp.pop %v448
  %v459 = vrcp.pop %v451
  %v460 = vrcp.pop %v454
  %v461 = vrcp.pop %v457
  %v462 = vmul.f32 %v439, %v458
  %v463 = vmul.f32 %v441, %v459
  %v464 = vmul.f32 %v443, %v460
  %v465 = vmul.f32 %v445, %v461
  %466 = vrot.lane.b32.xlu0 %v102, 64
  %v467 = vpop.permute.xlu0 %466
  %v470 = vsel %vm421, %v462, 0
  %472 = vmatprep.subr.mxu0 0.0
  %473 = vmatpush1.msra.mxu0 %v467
  %474 = vmatprep.subr.mxu0 0.0
  %475 = vmatpush1.msra.mxu0 0.0
  %476 = vmatprep.subr.mxu0 0.0
  %477 = vmatpush1.msra.mxu0 0.0
  %478 = vmatprep.subr.mxu0 0.0
  %479 = vmatpush1.msra.mxu0 0.0
  %480 = vmatprep.subr.mxu0 0.0
  %481 = vmatpush1.msra.mxu0 0.0
  %482 = vmatprep.subr.mxu0 0.0
  %483 = vmatpush1.msra.mxu0 0.0
  %484 = vmatprep.subr.mxu0 0.0
  %485 = vmatpush1.msra.mxu0 0.0
  %486 = vmatprep.subr.mxu0 0.0
  %487 = vmatpush1.msra.mxu0 0.0
  %488 = vmatprep.subr.mxu0 0.0
  %489 = vmatpush1.msra.mxu0 0.0
  %490 = vmatprep.subr.mxu0 0.0
  %491 = vmatpush1.msra.mxu0 0.0
  %492 = vmatprep.subr.mxu0 0.0
  %493 = vmatpush1.msra.mxu0 0.0
  %494 = vmatprep.subr.mxu0 0.0
  %495 = vmatpush1.msra.mxu0 0.0
  %496 = vmatprep.subr.mxu0 0.0
  %497 = vmatpush1.msra.mxu0 0.0
  %498 = vmatprep.subr.mxu0 0.0
  %499 = vmatpush1.msra.mxu0 0.0
  %500 = vmatprep.subr.mxu0 0.0
  %501 = vmatpush1.msra.mxu0 0.0
  %502 = vmatprep.subr.mxu0 0.0
  %503 = vmatpush1.msra.mxu0 0.0
  %504 = vmatprep.subr.mxu0 0.0
  %505 = vmatpush1.msra.mxu0 0.0
  %506 = vmatprep.subr.mxu0 0.0
  %507 = vmatpush1.msra.mxu0 0.0
  %508 = vmatprep.subr.mxu0 0.0
  %509 = vmatpush1.msra.mxu0 0.0
  %510 = vmatprep.subr.mxu0 0.0
  %511 = vmatpush1.msra.mxu0 0.0
  %512 = vmatprep.subr.mxu0 0.0
  %513 = vmatpush1.msra.mxu0 0.0
  %514 = vmatprep.subr.mxu0 0.0
  %515 = vmatpush1.msra.mxu0 0.0
  %516 = vmatprep.subr.mxu0 0.0
  %517 = vmatpush1.msra.mxu0 0.0
  %518 = vmatprep.subr.mxu0 0.0
  %519 = vmatpush1.msra.mxu0 0.0
  %520 = vmatprep.subr.mxu0 0.0
  %521 = vmatpush1.msra.mxu0 0.0
  %522 = vmatprep.subr.mxu0 0.0
  %523 = vmatpush1.msra.mxu0 0.0
  %524 = vmatprep.subr.mxu0 0.0
  %525 = vmatpush1.msra.mxu0 0.0
  %526 = vmatprep.subr.mxu0 0.0
  %527 = vmatpush1.msra.mxu0 0.0
  %528 = vmatprep.subr.mxu0 0.0
  %529 = vmatpush1.msra.mxu0 0.0
  %530 = vmatprep.subr.mxu0 0.0
  %531 = vmatpush1.msra.mxu0 0.0
  %532 = vmatprep.subr.mxu0 0.0
  %533 = vmatpush1.msra.mxu0 0.0
  %534 = vmatprep.subr.mxu0 0.0
  %535 = vmatpush1.msra.mxu0 0.0
  %536 = vmatprep.mubr.f32.mxu0 0.0
  %537 = vmatmul.mubr.f32.gmra.mrb[0].mxu0 %v470
  %v538 = vpop.f32.mrb[0].mxu0
  %v539 = vadd.f32 0.0, %v538
  %v540 = vpop.f32.mrb[0].mxu0
  %541 = vdwg.mxu0
  %542 = vrot.lane.b32.xlu0 %v102, 48
  %v543 = vpop.permute.xlu0 %542
  %v546 = vsel %vm421, %v463, 0
  %548 = vmatprep.subr.mxu0 0.0
  %549 = vmatpush1.msra.mxu0 %v543
  %550 = vmatprep.subr.mxu0 0.0
  %551 = vmatpush1.msra.mxu0 0.0
  %552 = vmatprep.subr.mxu0 0.0
  %553 = vmatpush1.msra.mxu0 0.0
  %554 = vmatprep.subr.mxu0 0.0
  %555 = vmatpush1.msra.mxu0 0.0
  %556 = vmatprep.subr.mxu0 0.0
  %557 = vmatpush1.msra.mxu0 0.0
  %558 = vmatprep.subr.mxu0 0.0
  %559 = vmatpush1.msra.mxu0 0.0
  %560 = vmatprep.subr.mxu0 0.0
  %561 = vmatpush1.msra.mxu0 0.0
  %562 = vmatprep.subr.mxu0 0.0
  %563 = vmatpush1.msra.mxu0 0.0
  %564 = vmatprep.subr.mxu0 0.0
  %565 = vmatpush1.msra.mxu0 0.0
  %566 = vmatprep.subr.mxu0 0.0
  %567 = vmatpush1.msra.mxu0 0.0
  %568 = vmatprep.subr.mxu0 0.0
  %569 = vmatpush1.msra.mxu0 0.0
  %570 = vmatprep.subr.mxu0 0.0
  %571 = vmatpush1.msra.mxu0 0.0
  %572 = vmatprep.subr.mxu0 0.0
  %573 = vmatpush1.msra.mxu0 0.0
  %574 = vmatprep.subr.mxu0 0.0
  %575 = vmatpush1.msra.mxu0 0.0
  %576 = vmatprep.subr.mxu0 0.0
  %577 = vmatpush1.msra.mxu0 0.0
  %578 = vmatprep.subr.mxu0 0.0
  %579 = vmatpush1.msra.mxu0 0.0
  %580 = vmatprep.subr.mxu0 0.0
  %581 = vmatpush1.msra.mxu0 0.0
  %582 = vmatprep.subr.mxu0 0.0
  %583 = vmatpush1.msra.mxu0 0.0
  %584 = vmatprep.subr.mxu0 0.0
  %585 = vmatpush1.msra.mxu0 0.0
  %586 = vmatprep.subr.mxu0 0.0
  %587 = vmatpush1.msra.mxu0 0.0
  %588 = vmatprep.subr.mxu0 0.0
  %589 = vmatpush1.msra.mxu0 0.0
  %590 = vmatprep.subr.mxu0 0.0
  %591 = vmatpush1.msra.mxu0 0.0
  %592 = vmatprep.subr.mxu0 0.0
  %593 = vmatpush1.msra.mxu0 0.0
  %594 = vmatprep.subr.mxu0 0.0
  %595 = vmatpush1.msra.mxu0 0.0
  %596 = vmatprep.subr.mxu0 0.0
  %597 = vmatpush1.msra.mxu0 0.0
  %598 = vmatprep.subr.mxu0 0.0
  %599 = vmatpush1.msra.mxu0 0.0
  %600 = vmatprep.subr.mxu0 0.0
  %601 = vmatpush1.msra.mxu0 0.0
  %602 = vmatprep.subr.mxu0 0.0
  %603 = vmatpush1.msra.mxu0 0.0
  %604 = vmatprep.subr.mxu0 0.0
  %605 = vmatpush1.msra.mxu0 0.0
  %606 = vmatprep.subr.mxu0 0.0
  %607 = vmatpush1.msra.mxu0 0.0
  %608 = vmatprep.subr.mxu0 0.0
  %609 = vmatpush1.msra.mxu0 0.0
  %610 = vmatprep.subr.mxu0 0.0
  %611 = vmatpush1.msra.mxu0 0.0
  %612 = vmatprep.mubr.f32.mxu0 0.0
  %613 = vmatmul.mubr.f32.gmra.mrb[0].mxu0 %v546
  %v614 = vpop.f32.mrb[0].mxu0
  %v615 = vadd.f32 0.0, %v614
  %v616 = vpop.f32.mrb[0].mxu0
  %617 = vdwg.mxu0
  %619 = vrot.lane.b32.xlu0 %v615, 16
  %v620 = vpop.permute.xlu0 %619
  %v622 = vsel %vm113, %v539, %v620
  %623 = vrot.lane.b32.xlu0 %v107, 64
  %v624 = vpop.permute.xlu0 %623
  %v627 = vsel %vm421, %v464, 0
  %629 = vmatprep.subr.mxu0 0.0
  %630 = vmatpush1.msra.mxu0 %v624
  %631 = vmatprep.subr.mxu0 0.0
  %632 = vmatpush1.msra.mxu0 0.0
  %633 = vmatprep.subr.mxu0 0.0
  %634 = vmatpush1.msra.mxu0 0.0
  %635 = vmatprep.subr.mxu0 0.0
  %636 = vmatpush1.msra.mxu0 0.0
  %637 = vmatprep.subr.mxu0 0.0
  %638 = vmatpush1.msra.mxu0 0.0
  %639 = vmatprep.subr.mxu0 0.0
  %640 = vmatpush1.msra.mxu0 0.0
  %641 = vmatprep.subr.mxu0 0.0
  %642 = vmatpush1.msra.mxu0 0.0
  %643 = vmatprep.subr.mxu0 0.0
  %644 = vmatpush1.msra.mxu0 0.0
  %645 = vmatprep.subr.mxu0 0.0
  %646 = vmatpush1.msra.mxu0 0.0
  %647 = vmatprep.subr.mxu0 0.0
  %648 = vmatpush1.msra.mxu0 0.0
  %649 = vmatprep.subr.mxu0 0.0
  %650 = vmatpush1.msra.mxu0 0.0
  %651 = vmatprep.subr.mxu0 0.0
  %652 = vmatpush1.msra.mxu0 0.0
  %653 = vmatprep.subr.mxu0 0.0
  %654 = vmatpush1.msra.mxu0 0.0
  %655 = vmatprep.subr.mxu0 0.0
  %656 = vmatpush1.msra.mxu0 0.0
  %657 = vmatprep.subr.mxu0 0.0
  %658 = vmatpush1.msra.mxu0 0.0
  %659 = vmatprep.subr.mxu0 0.0
  %660 = vmatpush1.msra.mxu0 0.0
  %661 = vmatprep.subr.mxu0 0.0
  %662 = vmatpush1.msra.mxu0 0.0
  %663 = vmatprep.subr.mxu0 0.0
  %664 = vmatpush1.msra.mxu0 0.0
  %665 = vmatprep.subr.mxu0 0.0
  %666 = vmatpush1.msra.mxu0 0.0
  %667 = vmatprep.subr.mxu0 0.0
  %668 = vmatpush1.msra.mxu0 0.0
  %669 = vmatprep.subr.mxu0 0.0
  %670 = vmatpush1.msra.mxu0 0.0
  %671 = vmatprep.subr.mxu0 0.0
  %672 = vmatpush1.msra.mxu0 0.0
  %673 = vmatprep.subr.mxu0 0.0
  %674 = vmatpush1.msra.mxu0 0.0
  %675 = vmatprep.subr.mxu0 0.0
  %676 = vmatpush1.msra.mxu0 0.0
  %677 = vmatprep.subr.mxu0 0.0
  %678 = vmatpush1.msra.mxu0 0.0
  %679 = vmatprep.subr.mxu0 0.0
  %680 = vmatpush1.msra.mxu0 0.0
  %681 = vmatprep.subr.mxu0 0.0
  %682 = vmatpush1.msra.mxu0 0.0
  %683 = vmatprep.subr.mxu0 0.0
  %684 = vmatpush1.msra.mxu0 0.0
  %685 = vmatprep.subr.mxu0 0.0
  %686 = vmatpush1.msra.mxu0 0.0
  %687 = vmatprep.subr.mxu0 0.0
  %688 = vmatpush1.msra.mxu0 0.0
  %689 = vmatprep.subr.mxu0 0.0
  %690 = vmatpush1.msra.mxu0 0.0
  %691 = vmatprep.subr.mxu0 0.0
  %692 = vmatpush1.msra.mxu0 0.0
  %693 = vmatprep.mubr.f32.mxu0 0.0
  %694 = vmatmul.mubr.f32.gmra.mrb[0].mxu0 %v627
  %v695 = vpop.f32.mrb[0].mxu0
  %v696 = vadd.f32 0.0, %v695
  %v697 = vpop.f32.mrb[0].mxu0
  %698 = vdwg.mxu0
  %699 = vrot.lane.b32.xlu0 %v107, 48
  %v700 = vpop.permute.xlu0 %699
  %v703 = vsel %vm421, %v465, 0
  %705 = vmatprep.subr.mxu0 0.0
  %706 = vmatpush1.msra.mxu0 %v700
  %707 = vmatprep.subr.mxu0 0.0
  %708 = vmatpush1.msra.mxu0 0.0
  %709 = vmatprep.subr.mxu0 0.0
  %710 = vmatpush1.msra.mxu0 0.0
  %711 = vmatprep.subr.mxu0 0.0
  %712 = vmatpush1.msra.mxu0 0.0
  %713 = vmatprep.subr.mxu0 0.0
  %714 = vmatpush1.msra.mxu0 0.0
  %715 = vmatprep.subr.mxu0 0.0
  %716 = vmatpush1.msra.mxu0 0.0
  %717 = vmatprep.subr.mxu0 0.0
  %718 = vmatpush1.msra.mxu0 0.0
  %719 = vmatprep.subr.mxu0 0.0
  %720 = vmatpush1.msra.mxu0 0.0
  %721 = vmatprep.subr.mxu0 0.0
  %722 = vmatpush1.msra.mxu0 0.0
  %723 = vmatprep.subr.mxu0 0.0
  %724 = vmatpush1.msra.mxu0 0.0
  %725 = vmatprep.subr.mxu0 0.0
  %726 = vmatpush1.msra.mxu0 0.0
  %727 = vmatprep.subr.mxu0 0.0
  %728 = vmatpush1.msra.mxu0 0.0
  %729 = vmatprep.subr.mxu0 0.0
  %730 = vmatpush1.msra.mxu0 0.0
  %731 = vmatprep.subr.mxu0 0.0
  %732 = vmatpush1.msra.mxu0 0.0
  %733 = vmatprep.subr.mxu0 0.0
  %734 = vmatpush1.msra.mxu0 0.0
  %735 = vmatprep.subr.mxu0 0.0
  %736 = vmatpush1.msra.mxu0 0.0
  %737 = vmatprep.subr.mxu0 0.0
  %738 = vmatpush1.msra.mxu0 0.0
  %739 = vmatprep.subr.mxu0 0.0
  %740 = vmatpush1.msra.mxu0 0.0
  %741 = vmatprep.subr.mxu0 0.0
  %742 = vmatpush1.msra.mxu0 0.0
  %743 = vmatprep.subr.mxu0 0.0
  %744 = vmatpush1.msra.mxu0 0.0
  %745 = vmatprep.subr.mxu0 0.0
  %746 = vmatpush1.msra.mxu0 0.0
  %747 = vmatprep.subr.mxu0 0.0
  %748 = vmatpush1.msra.mxu0 0.0
  %749 = vmatprep.subr.mxu0 0.0
  %750 = vmatpush1.msra.mxu0 0.0
  %751 = vmatprep.subr.mxu0 0.0
  %752 = vmatpush1.msra.mxu0 0.0
  %753 = vmatprep.subr.mxu0 0.0
  %754 = vmatpush1.msra.mxu0 0.0
  %755 = vmatprep.subr.mxu0 0.0
  %756 = vmatpush1.msra.mxu0 0.0
  %757 = vmatprep.subr.mxu0 0.0
  %758 = vmatpush1.msra.mxu0 0.0
  %759 = vmatprep.subr.mxu0 0.0
  %760 = vmatpush1.msra.mxu0 0.0
  %761 = vmatprep.subr.mxu0 0.0
  %762 = vmatpush1.msra.mxu0 0.0
  %763 = vmatprep.subr.mxu0 0.0
  %764 = vmatpush1.msra.mxu0 0.0
  %765 = vmatprep.subr.mxu0 0.0
  %766 = vmatpush1.msra.mxu0 0.0
  %767 = vmatprep.subr.mxu0 0.0
  %768 = vmatpush1.msra.mxu0 0.0
  %769 = vmatprep.mubr.f32.mxu0 0.0
  %770 = vmatmul.mubr.f32.gmra.mrb[0].mxu0 %v703
  %v771 = vpop.f32.mrb[0].mxu0
  %v772 = vadd.f32 0.0, %v771
  %v773 = vpop.f32.mrb[0].mxu0
  %774 = vdwg.mxu0
  %776 = vrot.lane.b32.xlu0 %v772, 16
  %v777 = vpop.permute.xlu0 %776
  %v779 = vsel %vm113, %v696, %v777
  %v780 = vld [vmem:[%s2 + $0x20] sm:$0xff]
  %v781 = vld [vmem:[%s2 + $0x28] sm:$0xff]
  %v782 = vld [vmem:[%s2 + $0x30] sm:$0xff]
  %v783 = vld [vmem:[%s2 + $0x38] sm:$0xff]
  %v784 = vld [vmem:[%s3 + $0x1] sm:$0x1]
  %v785 = vlaneseq
  %v786 = vshrl.u32 %v785, 7
  %v787 = vsub.s32 0, %v786
  %v788 = vrot.slane %v784, %v787
  %v790 = vsel %vm28, %v622, 0
  %v793 = vsel %vm28, %v779, 0
  %795 = vmatprep.subr.mxu0 0.0
  %796 = vmatpush1.msra.mxu0 %v780
  %797 = vmatprep.subr.mxu0 0.0
  %798 = vmatpush1.msra.mxu0 %v781
  %799 = vmatprep.subr.mxu0 0.0
  %800 = vmatpush1.msra.mxu0 %v782
  %801 = vmatprep.subr.mxu0 0.0
  %802 = vmatpush1.msra.mxu0 %v783
  %803 = vmatprep.subr.mxu0 0.0
  %804 = vmatpush1.msra.mxu0 0.0
  %805 = vmatprep.subr.mxu0 0.0
  %806 = vmatpush1.msra.mxu0 0.0
  %807 = vmatprep.subr.mxu0 0.0
  %808 = vmatpush1.msra.mxu0 0.0
  %809 = vmatprep.subr.mxu0 0.0
  %810 = vmatpush1.msra.mxu0 0.0
  %811 = vmatprep.subr.mxu0 0.0
  %812 = vmatpush1.msra.mxu0 0.0
  %813 = vmatprep.subr.mxu0 0.0
  %814 = vmatpush1.msra.mxu0 0.0
  %815 = vmatprep.subr.mxu0 0.0
  %816 = vmatpush1.msra.mxu0 0.0
  %817 = vmatprep.subr.mxu0 0.0
  %818 = vmatpush1.msra.mxu0 0.0
  %819 = vmatprep.subr.mxu0 0.0
  %820 = vmatpush1.msra.mxu0 0.0
  %821 = vmatprep.subr.mxu0 0.0
  %822 = vmatpush1.msra.mxu0 0.0
  %823 = vmatprep.subr.mxu0 0.0
  %824 = vmatpush1.msra.mxu0 0.0
  %825 = vmatprep.subr.mxu0 0.0
  %826 = vmatpush1.msra.mxu0 0.0
  %827 = vmatprep.subr.mxu0 0.0
  %828 = vmatpush1.msra.mxu0 0.0
  %829 = vmatprep.subr.mxu0 0.0
  %830 = vmatpush1.msra.mxu0 0.0
  %831 = vmatprep.subr.mxu0 0.0
  %832 = vmatpush1.msra.mxu0 0.0
  %833 = vmatprep.subr.mxu0 0.0
  %834 = vmatpush1.msra.mxu0 0.0
  %835 = vmatprep.subr.mxu0 0.0
  %836 = vmatpush1.msra.mxu0 0.0
  %837 = vmatprep.subr.mxu0 0.0
  %838 = vmatpush1.msra.mxu0 0.0
  %839 = vmatprep.subr.mxu0 0.0
  %840 = vmatpush1.msra.mxu0 0.0
  %841 = vmatprep.subr.mxu0 0.0
  %842 = vmatpush1.msra.mxu0 0.0
  %843 = vmatprep.subr.mxu0 0.0
  %844 = vmatpush1.msra.mxu0 0.0
  %845 = vmatprep.subr.mxu0 0.0
  %846 = vmatpush1.msra.mxu0 0.0
  %847 = vmatprep.subr.mxu0 0.0
  %848 = vmatpush1.msra.mxu0 0.0
  %849 = vmatprep.subr.mxu0 0.0
  %850 = vmatpush1.msra.mxu0 0.0
  %851 = vmatprep.subr.mxu0 0.0
  %852 = vmatpush1.msra.mxu0 0.0
  %853 = vmatprep.subr.mxu0 0.0
  %854 = vmatpush1.msra.mxu0 0.0
  %855 = vmatprep.subr.mxu0 0.0
  %856 = vmatpush1.msra.mxu0 0.0
  %857 = vmatprep.subr.mxu0 0.0
  %858 = vmatpush1.msra.mxu0 0.0
  %859 = vmatprep.mubr.f32.mxu0 0.0
  %860 = vmatmul.mubr.f32.gmra.mrb[0].mxu0 %v790
  %v861 = vpop.f32.mrb[0].mxu0
  %v862 = vadd.f32 %v788, %v861
  %v863 = vpop.f32.mrb[0].mxu0
  %864 = vmatprep.mubr.f32.mxu0 0.0
  %865 = vmatmul.mubr.f32.gmra.mrb[0].mxu0 %v793
  %v866 = vpop.f32.mrb[0].mxu0
  %v867 = vadd.f32 %v788, %v866
  %v868 = vpop.f32.mrb[0].mxu0
  %869 = vdwg.mxu0
  %v870 = vadd.f32 %v17, %v862
  %v871 = vadd.f32 %v18, %v867
  %v872 = vld [vmem:[%s3 + $0x5] sm:$0x1]
  %v873 = vld [vmem:[%s3 + $0x6] sm:$0x1]
  %v874 = vsel %vm28, %v870, 0.0
  %875 = vadd.xlane.f32.xlu0 %v874
  %v876 = vpop.xlane.xlu0 %875
  %v877 = vsel %vm28, %v871, 0.0
  %878 = vadd.xlane.f32.xlu0 %v877
  %v879 = vpop.xlane.xlu0 %878
  %v880 = vrcp.pop 32.0
  %v881 = vmul.f32 %v876, %v880
  %v882 = vmul.f32 %v879, %v880
  %v883 = vmul.f32 %v870, %v870
  %v884 = vmul.f32 %v871, %v871
  %v885 = vsel %vm28, %v883, 0.0
  %886 = vadd.xlane.f32.xlu0 %v885
  %v887 = vpop.xlane.xlu0 %886
  %v888 = vsel %vm28, %v884, 0.0
  %889 = vadd.xlane.f32.xlu0 %v888
  %v890 = vpop.xlane.xlu0 %889
  %v891 = vmul.f32 %v887, %v880
  %v892 = vmul.f32 %v890, %v880
  %v893 = vmul.f32 %v881, %v881
  %v894 = vmul.f32 %v882, %v882
  %v895 = vsub.f32 %v891, %v893
  %v896 = vsub.f32 %v892, %v894
  %v897 = vsub.f32 %v870, %v881
  %v898 = vsub.f32 %v871, %v882
  %v899 = vadd.f32 %v895, 1e-05
  %v900 = vadd.f32 %v896, 1e-05
  %v901 = vrsqrt.pop %v899
  %v902 = vrsqrt.pop %v900
  %v903 = vmul.f32 %v897, %v901
  %v904 = vmul.f32 %v898, %v902
  %v905 = vlaneseq
  %v906 = vshrl.u32 %v905, 7
  %v907 = vsub.s32 0, %v906
  %v908 = vrot.slane %v872, %v907
  %v909 = vmul.f32 %v903, %v908
  %v910 = vmul.f32 %v904, %v908
  %v911 = vlaneseq
  %v912 = vshrl.u32 %v911, 7
  %v913 = vsub.s32 0, %v912
  %v914 = vrot.slane %v873, %v913
  %v915 = vadd.f32 %v909, %v914
  %v916 = vadd.f32 %v910, %v914
  %v917 = vld [vmem:[%s1] sm:$0xff]
  %v918 = vld [vmem:[%s1 + $0x8] sm:$0xff]
  %v919 = vld [vmem:[%s2 + $0x40] sm:$0xff]
  %v920 = vld [vmem:[%s2 + $0x48] sm:$0xff]
  %v921 = vld [vmem:[%s2 + $0x50] sm:$0xff]
  %v922 = vld [vmem:[%s2 + $0x58] sm:$0xff]
  %v923 = vld [vmem:[%s3 + $0x2] sm:$0x1]
  %v924 = vlaneseq
  %v925 = vshrl.u32 %v924, 7
  %v926 = vsub.s32 0, %v925
  %v927 = vrot.slane %v923, %v926
  %v929 = vsel %vm28, %v915, 0
  %v932 = vsel %vm28, %v916, 0
  %934 = vmatprep.subr.mxu0 0.0
  %935 = vmatpush1.msra.mxu0 %v919
  %936 = vmatprep.subr.mxu0 0.0
  %937 = vmatpush1.msra.mxu0 %v920
  %938 = vmatprep.subr.mxu0 0.0
  %939 = vmatpush1.msra.mxu0 %v921
  %940 = vmatprep.subr.mxu0 0.0
  %941 = vmatpush1.msra.mxu0 %v922
  %942 = vmatprep.subr.mxu0 0.0
  %943 = vmatpush1.msra.mxu0 0.0
  %944 = vmatprep.subr.mxu0 0.0
  %945 = vmatpush1.msra.mxu0 0.0
  %946 = vmatprep.subr.mxu0 0.0
  %947 = vmatpush1.msra.mxu0 0.0
  %948 = vmatprep.subr.mxu0 0.0
  %949 = vmatpush1.msra.mxu0 0.0
  %950 = vmatprep.subr.mxu0 0.0
  %951 = vmatpush1.msra.mxu0 0.0
  %952 = vmatprep.subr.mxu0 0.0
  %953 = vmatpush1.msra.mxu0 0.0
  %954 = vmatprep.subr.mxu0 0.0
  %955 = vmatpush1.msra.mxu0 0.0
  %956 = vmatprep.subr.mxu0 0.0
  %957 = vmatpush1.msra.mxu0 0.0
  %958 = vmatprep.subr.mxu0 0.0
  %959 = vmatpush1.msra.mxu0 0.0
  %960 = vmatprep.subr.mxu0 0.0
  %961 = vmatpush1.msra.mxu0 0.0
  %962 = vmatprep.subr.mxu0 0.0
  %963 = vmatpush1.msra.mxu0 0.0
  %964 = vmatprep.subr.mxu0 0.0
  %965 = vmatpush1.msra.mxu0 0.0
  %966 = vmatprep.subr.mxu0 0.0
  %967 = vmatpush1.msra.mxu0 0.0
  %968 = vmatprep.subr.mxu0 0.0
  %969 = vmatpush1.msra.mxu0 0.0
  %970 = vmatprep.subr.mxu0 0.0
  %971 = vmatpush1.msra.mxu0 0.0
  %972 = vmatprep.subr.mxu0 0.0
  %973 = vmatpush1.msra.mxu0 0.0
  %974 = vmatprep.subr.mxu0 0.0
  %975 = vmatpush1.msra.mxu0 0.0
  %976 = vmatprep.subr.mxu0 0.0
  %977 = vmatpush1.msra.mxu0 0.0
  %978 = vmatprep.subr.mxu0 0.0
  %979 = vmatpush1.msra.mxu0 0.0
  %980 = vmatprep.subr.mxu0 0.0
  %981 = vmatpush1.msra.mxu0 0.0
  %982 = vmatprep.subr.mxu0 0.0
  %983 = vmatpush1.msra.mxu0 0.0
  %984 = vmatprep.subr.mxu0 0.0
  %985 = vmatpush1.msra.mxu0 0.0
  %986 = vmatprep.subr.mxu0 0.0
  %987 = vmatpush1.msra.mxu0 0.0
  %988 = vmatprep.subr.mxu0 0.0
  %989 = vmatpush1.msra.mxu0 0.0
  %990 = vmatprep.subr.mxu0 0.0
  %991 = vmatpush1.msra.mxu0 0.0
  %992 = vmatprep.subr.mxu0 0.0
  %993 = vmatpush1.msra.mxu0 0.0
  %994 = vmatprep.subr.mxu0 0.0
  %995 = vmatpush1.msra.mxu0 0.0
  %996 = vmatprep.subr.mxu0 0.0
  %997 = vmatpush1.msra.mxu0 0.0
  %998 = vmatprep.mubr.f32.mxu0 0.0
  %999 = vmatmul.mubr.f32.gmra.mrb[0].mxu0 %v929
  %v1000 = vpop.f32.mrb[0].mxu0
  %v1001 = vadd.f32 %v927, %v1000
  %v1002 = vpop.f32.mrb[0].mxu0
  %1003 = vmatprep.mubr.f32.mxu0 0.0
  %1004 = vmatmul.mubr.f32.gmra.mrb[0].mxu0 %v932
  %v1005 = vpop.f32.mrb[0].mxu0
  %v1006 = vadd.f32 %v927, %v1005
  %v1007 = vpop.f32.mrb[0].mxu0
  %1008 = vdwg.mxu0
  %v1009 = vld [vmem:[%s2 + $0x60] sm:$0xff]
  %v1010 = vld [vmem:[%s2 + $0x68] sm:$0xff]
  %v1011 = vld [vmem:[%s2 + $0x70] sm:$0xff]
  %v1012 = vld [vmem:[%s2 + $0x78] sm:$0xff]
  %v1013 = vld [vmem:[%s3 + $0x3] sm:$0x1]
  %v1014 = vlaneseq
  %v1015 = vshrl.u32 %v1014, 7
  %v1016 = vsub.s32 0, %v1015
  %v1017 = vrot.slane %v1013, %v1016
  %v1019 = vsel %vm28, %v917, 0
  %v1022 = vsel %vm28, %v918, 0
  %1024 = vmatprep.subr.mxu0 0.0
  %1025 = vmatpush1.msra.mxu0 %v1009
  %1026 = vmatprep.subr.mxu0 0.0
  %1027 = vmatpush1.msra.mxu0 %v1010
  %1028 = vmatprep.subr.mxu0 0.0
  %1029 = vmatpush1.msra.mxu0 %v1011
  %1030 = vmatprep.subr.mxu0 0.0
  %1031 = vmatpush1.msra.mxu0 %v1012
  %1032 = vmatprep.subr.mxu0 0.0
  %1033 = vmatpush1.msra.mxu0 0.0
  %1034 = vmatprep.subr.mxu0 0.0
  %1035 = vmatpush1.msra.mxu0 0.0
  %1036 = vmatprep.subr.mxu0 0.0
  %1037 = vmatpush1.msra.mxu0 0.0
  %1038 = vmatprep.subr.mxu0 0.0
  %1039 = vmatpush1.msra.mxu0 0.0
  %1040 = vmatprep.subr.mxu0 0.0
  %1041 = vmatpush1.msra.mxu0 0.0
  %1042 = vmatprep.subr.mxu0 0.0
  %1043 = vmatpush1.msra.mxu0 0.0
  %1044 = vmatprep.subr.mxu0 0.0
  %1045 = vmatpush1.msra.mxu0 0.0
  %1046 = vmatprep.subr.mxu0 0.0
  %1047 = vmatpush1.msra.mxu0 0.0
  %1048 = vmatprep.subr.mxu0 0.0
  %1049 = vmatpush1.msra.mxu0 0.0
  %1050 = vmatprep.subr.mxu0 0.0
  %1051 = vmatpush1.msra.mxu0 0.0
  %1052 = vmatprep.subr.mxu0 0.0
  %1053 = vmatpush1.msra.mxu0 0.0
  %1054 = vmatprep.subr.mxu0 0.0
  %1055 = vmatpush1.msra.mxu0 0.0
  %1056 = vmatprep.subr.mxu0 0.0
  %1057 = vmatpush1.msra.mxu0 0.0
  %1058 = vmatprep.subr.mxu0 0.0
  %1059 = vmatpush1.msra.mxu0 0.0
  %1060 = vmatprep.subr.mxu0 0.0
  %1061 = vmatpush1.msra.mxu0 0.0
  %1062 = vmatprep.subr.mxu0 0.0
  %1063 = vmatpush1.msra.mxu0 0.0
  %1064 = vmatprep.subr.mxu0 0.0
  %1065 = vmatpush1.msra.mxu0 0.0
  %1066 = vmatprep.subr.mxu0 0.0
  %1067 = vmatpush1.msra.mxu0 0.0
  %1068 = vmatprep.subr.mxu0 0.0
  %1069 = vmatpush1.msra.mxu0 0.0
  %1070 = vmatprep.subr.mxu0 0.0
  %1071 = vmatpush1.msra.mxu0 0.0
  %1072 = vmatprep.subr.mxu0 0.0
  %1073 = vmatpush1.msra.mxu0 0.0
  %1074 = vmatprep.subr.mxu0 0.0
  %1075 = vmatpush1.msra.mxu0 0.0
  %1076 = vmatprep.subr.mxu0 0.0
  %1077 = vmatpush1.msra.mxu0 0.0
  %1078 = vmatprep.subr.mxu0 0.0
  %1079 = vmatpush1.msra.mxu0 0.0
  %1080 = vmatprep.subr.mxu0 0.0
  %1081 = vmatpush1.msra.mxu0 0.0
  %1082 = vmatprep.subr.mxu0 0.0
  %1083 = vmatpush1.msra.mxu0 0.0
  %1084 = vmatprep.subr.mxu0 0.0
  %1085 = vmatpush1.msra.mxu0 0.0
  %1086 = vmatprep.subr.mxu0 0.0
  %1087 = vmatpush1.msra.mxu0 0.0
  %1088 = vmatprep.mubr.f32.mxu0 0.0
  %1089 = vmatmul.mubr.f32.gmra.mrb[0].mxu0 %v1019
  %v1090 = vpop.f32.mrb[0].mxu0
  %v1091 = vadd.f32 %v1017, %v1090
  %v1092 = vpop.f32.mrb[0].mxu0
  %1093 = vmatprep.mubr.f32.mxu0 0.0
  %1094 = vmatmul.mubr.f32.gmra.mrb[0].mxu0 %v1022
  %v1095 = vpop.f32.mrb[0].mxu0
  %v1096 = vadd.f32 %v1017, %v1095
  %v1097 = vpop.f32.mrb[0].mxu0
  %1098 = vdwg.mxu0
  %v1100 = vsel %vm113, %v1001, 0
  %v1103 = vsel %vm113, %v1091, 0
  %1105 = vmatprep.subr.mxu0 0.0
  %1106 = vmatpush1.xpose.msra.mxu0 %v1103
  %1107 = vmatprep.subr.mxu0 0.0
  %1108 = vmatpush1.xpose.msra.mxu0 0.0
  %1109 = vmatprep.subr.mxu0 0.0
  %1110 = vmatpush1.xpose.msra.mxu0 0.0
  %1111 = vmatprep.subr.mxu0 0.0
  %1112 = vmatpush1.xpose.msra.mxu0 0.0
  %1113 = vmatprep.subr.mxu0 0.0
  %1114 = vmatpush1.xpose.msra.mxu0 0.0
  %1115 = vmatprep.subr.mxu0 0.0
  %1116 = vmatpush1.xpose.msra.mxu0 0.0
  %1117 = vmatprep.subr.mxu0 0.0
  %1118 = vmatpush1.xpose.msra.mxu0 0.0
  %1119 = vmatprep.subr.mxu0 0.0
  %1120 = vmatpush1.xpose.msra.mxu0 0.0
  %1121 = vmatprep.subr.mxu0 0.0
  %1122 = vmatpush1.xpose.msra.mxu0 0.0
  %1123 = vmatprep.subr.mxu0 0.0
  %1124 = vmatpush1.xpose.msra.mxu0 0.0
  %1125 = vmatprep.subr.mxu0 0.0
  %1126 = vmatpush1.xpose.msra.mxu0 0.0
  %1127 = vmatprep.subr.mxu0 0.0
  %1128 = vmatpush1.xpose.msra.mxu0 0.0
  %1129 = vmatprep.subr.mxu0 0.0
  %1130 = vmatpush1.xpose.msra.mxu0 0.0
  %1131 = vmatprep.subr.mxu0 0.0
  %1132 = vmatpush1.xpose.msra.mxu0 0.0
  %1133 = vmatprep.subr.mxu0 0.0
  %1134 = vmatpush1.xpose.msra.mxu0 0.0
  %1135 = vmatprep.subr.mxu0 0.0
  %1136 = vmatpush1.xpose.msra.mxu0 0.0
  %1137 = vmatprep.subr.mxu0 0.0
  %1138 = vmatpush1.xpose.msra.mxu0 0.0
  %1139 = vmatprep.subr.mxu0 0.0
  %1140 = vmatpush1.xpose.msra.mxu0 0.0
  %1141 = vmatprep.subr.mxu0 0.0
  %1142 = vmatpush1.xpose.msra.mxu0 0.0
  %1143 = vmatprep.subr.mxu0 0.0
  %1144 = vmatpush1.xpose.msra.mxu0 0.0
  %1145 = vmatprep.subr.mxu0 0.0
  %1146 = vmatpush1.xpose.msra.mxu0 0.0
  %1147 = vmatprep.subr.mxu0 0.0
  %1148 = vmatpush1.xpose.msra.mxu0 0.0
  %1149 = vmatprep.subr.mxu0 0.0
  %1150 = vmatpush1.xpose.msra.mxu0 0.0
  %1151 = vmatprep.subr.mxu0 0.0
  %1152 = vmatpush1.xpose.msra.mxu0 0.0
  %1153 = vmatprep.subr.mxu0 0.0
  %1154 = vmatpush1.xpose.msra.mxu0 0.0
  %1155 = vmatprep.subr.mxu0 0.0
  %1156 = vmatpush1.xpose.msra.mxu0 0.0
  %1157 = vmatprep.subr.mxu0 0.0
  %1158 = vmatpush1.xpose.msra.mxu0 0.0
  %1159 = vmatprep.subr.mxu0 0.0
  %1160 = vmatpush1.xpose.msra.mxu0 0.0
  %1161 = vmatprep.subr.mxu0 0.0
  %1162 = vmatpush1.xpose.msra.mxu0 0.0
  %1163 = vmatprep.subr.mxu0 0.0
  %1164 = vmatpush1.xpose.msra.mxu0 0.0
  %1165 = vmatprep.subr.mxu0 0.0
  %1166 = vmatpush1.xpose.msra.mxu0 0.0
  %1167 = vmatprep.subr.mxu0 0.0
  %1168 = vmatpush1.xpose.msra.mxu0 0.0
  %1169 = vmatprep.mubr.f32.mxu0 0.0
  %1170 = vmatmul.mubr.f32.gmra.mrb[0].mxu0 %v1100
  %v1171 = vpop.f32.mrb[0].mxu0
  %v1172 = vadd.f32 0.0, %v1171
  %v1173 = vpop.f32.mrb[0].mxu0
  %1174 = vdwg.mxu0
  %1175 = vrot.lane.b32.xlu0 %v1001, 112
  %v1176 = vpop.permute.xlu0 %1175
  %1177 = vrot.lane.b32.xlu0 %v1091, 112
  %v1178 = vpop.permute.xlu0 %1177
  %v1179 = vsel %vm113, %v1176, 0
  %v1181 = vsel %vm113, %v1178, 0
  %1183 = vmatprep.subr.mxu0 0.0
  %1184 = vmatpush1.xpose.msra.mxu0 %v1181
  %1185 = vmatprep.subr.mxu0 0.0
  %1186 = vmatpush1.xpose.msra.mxu0 0.0
  %1187 = vmatprep.subr.mxu0 0.0
  %1188 = vmatpush1.xpose.msra.mxu0 0.0
  %1189 = vmatprep.subr.mxu0 0.0
  %1190 = vmatpush1.xpose.msra.mxu0 0.0
  %1191 = vmatprep.subr.mxu0 0.0
  %1192 = vmatpush1.xpose.msra.mxu0 0.0
  %1193 = vmatprep.subr.mxu0 0.0
  %1194 = vmatpush1.xpose.msra.mxu0 0.0
  %1195 = vmatprep.subr.mxu0 0.0
  %1196 = vmatpush1.xpose.msra.mxu0 0.0
  %1197 = vmatprep.subr.mxu0 0.0
  %1198 = vmatpush1.xpose.msra.mxu0 0.0
  %1199 = vmatprep.subr.mxu0 0.0
  %1200 = vmatpush1.xpose.msra.mxu0 0.0
  %1201 = vmatprep.subr.mxu0 0.0
  %1202 = vmatpush1.xpose.msra.mxu0 0.0
  %1203 = vmatprep.subr.mxu0 0.0
  %1204 = vmatpush1.xpose.msra.mxu0 0.0
  %1205 = vmatprep.subr.mxu0 0.0
  %1206 = vmatpush1.xpose.msra.mxu0 0.0
  %1207 = vmatprep.subr.mxu0 0.0
  %1208 = vmatpush1.xpose.msra.mxu0 0.0
  %1209 = vmatprep.subr.mxu0 0.0
  %1210 = vmatpush1.xpose.msra.mxu0 0.0
  %1211 = vmatprep.subr.mxu0 0.0
  %1212 = vmatpush1.xpose.msra.mxu0 0.0
  %1213 = vmatprep.subr.mxu0 0.0
  %1214 = vmatpush1.xpose.msra.mxu0 0.0
  %1215 = vmatprep.subr.mxu0 0.0
  %1216 = vmatpush1.xpose.msra.mxu0 0.0
  %1217 = vmatprep.subr.mxu0 0.0
  %1218 = vmatpush1.xpose.msra.mxu0 0.0
  %1219 = vmatprep.subr.mxu0 0.0
  %1220 = vmatpush1.xpose.msra.mxu0 0.0
  %1221 = vmatprep.subr.mxu0 0.0
  %1222 = vmatpush1.xpose.msra.mxu0 0.0
  %1223 = vmatprep.subr.mxu0 0.0
  %1224 = vmatpush1.xpose.msra.mxu0 0.0
  %1225 = vmatprep.subr.mxu0 0.0
  %1226 = vmatpush1.xpose.msra.mxu0 0.0
  %1227 = vmatprep.subr.mxu0 0.0
  %1228 = vmatpush1.xpose.msra.mxu0 0.0
  %1229 = vmatprep.subr.mxu0 0.0
  %1230 = vmatpush1.xpose.msra.mxu0 0.0
  %1231 = vmatprep.subr.mxu0 0.0
  %1232 = vmatpush1.xpose.msra.mxu0 0.0
  %1233 = vmatprep.subr.mxu0 0.0
  %1234 = vmatpush1.xpose.msra.mxu0 0.0
  %1235 = vmatprep.subr.mxu0 0.0
  %1236 = vmatpush1.xpose.msra.mxu0 0.0
  %1237 = vmatprep.subr.mxu0 0.0
  %1238 = vmatpush1.xpose.msra.mxu0 0.0
  %1239 = vmatprep.subr.mxu0 0.0
  %1240 = vmatpush1.xpose.msra.mxu0 0.0
  %1241 = vmatprep.subr.mxu0 0.0
  %1242 = vmatpush1.xpose.msra.mxu0 0.0
  %1243 = vmatprep.subr.mxu0 0.0
  %1244 = vmatpush1.xpose.msra.mxu0 0.0
  %1245 = vmatprep.subr.mxu0 0.0
  %1246 = vmatpush1.xpose.msra.mxu0 0.0
  %1247 = vmatprep.mubr.f32.mxu0 0.0
  %1248 = vmatmul.mubr.f32.gmra.mrb[0].mxu0 %v1179
  %v1249 = vpop.f32.mrb[0].mxu0
  %v1250 = vadd.f32 0.0, %v1249
  %v1251 = vpop.f32.mrb[0].mxu0
  %1252 = vdwg.mxu0
  %v1254 = vsel %vm113, %v1006, 0
  %v1257 = vsel %vm113, %v1096, 0
  %1259 = vmatprep.subr.mxu0 0.0
  %1260 = vmatpush1.xpose.msra.mxu0 %v1257
  %1261 = vmatprep.subr.mxu0 0.0
  %1262 = vmatpush1.xpose.msra.mxu0 0.0
  %1263 = vmatprep.subr.mxu0 0.0
  %1264 = vmatpush1.xpose.msra.mxu0 0.0
  %1265 = vmatprep.subr.mxu0 0.0
  %1266 = vmatpush1.xpose.msra.mxu0 0.0
  %1267 = vmatprep.subr.mxu0 0.0
  %1268 = vmatpush1.xpose.msra.mxu0 0.0
  %1269 = vmatprep.subr.mxu0 0.0
  %1270 = vmatpush1.xpose.msra.mxu0 0.0
  %1271 = vmatprep.subr.mxu0 0.0
  %1272 = vmatpush1.xpose.msra.mxu0 0.0
  %1273 = vmatprep.subr.mxu0 0.0
  %1274 = vmatpush1.xpose.msra.mxu0 0.0
  %1275 = vmatprep.subr.mxu0 0.0
  %1276 = vmatpush1.xpose.msra.mxu0 0.0
  %1277 = vmatprep.subr.mxu0 0.0
  %1278 = vmatpush1.xpose.msra.mxu0 0.0
  %1279 = vmatprep.subr.mxu0 0.0
  %1280 = vmatpush1.xpose.msra.mxu0 0.0
  %1281 = vmatprep.subr.mxu0 0.0
  %1282 = vmatpush1.xpose.msra.mxu0 0.0
  %1283 = vmatprep.subr.mxu0 0.0
  %1284 = vmatpush1.xpose.msra.mxu0 0.0
  %1285 = vmatprep.subr.mxu0 0.0
  %1286 = vmatpush1.xpose.msra.mxu0 0.0
  %1287 = vmatprep.subr.mxu0 0.0
  %1288 = vmatpush1.xpose.msra.mxu0 0.0
  %1289 = vmatprep.subr.mxu0 0.0
  %1290 = vmatpush1.xpose.msra.mxu0 0.0
  %1291 = vmatprep.subr.mxu0 0.0
  %1292 = vmatpush1.xpose.msra.mxu0 0.0
  %1293 = vmatprep.subr.mxu0 0.0
  %1294 = vmatpush1.xpose.msra.mxu0 0.0
  %1295 = vmatprep.subr.mxu0 0.0
  %1296 = vmatpush1.xpose.msra.mxu0 0.0
  %1297 = vmatprep.subr.mxu0 0.0
  %1298 = vmatpush1.xpose.msra.mxu0 0.0
  %1299 = vmatprep.subr.mxu0 0.0
  %1300 = vmatpush1.xpose.msra.mxu0 0.0
  %1301 = vmatprep.subr.mxu0 0.0
  %1302 = vmatpush1.xpose.msra.mxu0 0.0
  %1303 = vmatprep.subr.mxu0 0.0
  %1304 = vmatpush1.xpose.msra.mxu0 0.0
  %1305 = vmatprep.subr.mxu0 0.0
  %1306 = vmatpush1.xpose.msra.mxu0 0.0
  %1307 = vmatprep.subr.mxu0 0.0
  %1308 = vmatpush1.xpose.msra.mxu0 0.0
  %1309 = vmatprep.subr.mxu0 0.0
  %1310 = vmatpush1.xpose.msra.mxu0 0.0
  %1311 = vmatprep.subr.mxu0 0.0
  %1312 = vmatpush1.xpose.msra.mxu0 0.0
  %1313 = vmatprep.subr.mxu0 0.0
  %1314 = vmatpush1.xpose.msra.mxu0 0.0
  %1315 = vmatprep.subr.mxu0 0.0
  %1316 = vmatpush1.xpose.msra.mxu0 0.0
  %1317 = vmatprep.subr.mxu0 0.0
  %1318 = vmatpush1.xpose.msra.mxu0 0.0
  %1319 = vmatprep.subr.mxu0 0.0
  %1320 = vmatpush1.xpose.msra.mxu0 0.0
  %1321 = vmatprep.subr.mxu0 0.0
  %1322 = vmatpush1.xpose.msra.mxu0 0.0
  %1323 = vmatprep.mubr.f32.mxu0 0.0
  %1324 = vmatmul.mubr.f32.gmra.mrb[0].mxu0 %v1254
  %v1325 = vpop.f32.mrb[0].mxu0
  %v1326 = vadd.f32 0.0, %v1325
  %v1327 = vpop.f32.mrb[0].mxu0
  %1328 = vdwg.mxu0
  %1329 = vrot.lane.b32.xlu0 %v1006, 112
  %v1330 = vpop.permute.xlu0 %1329
  %1331 = vrot.lane.b32.xlu0 %v1096, 112
  %v1332 = vpop.permute.xlu0 %1331
  %v1333 = vsel %vm113, %v1330, 0
  %v1335 = vsel %vm113, %v1332, 0
  %1337 = vmatprep.subr.mxu0 0.0
  %1338 = vmatpush1.xpose.msra.mxu0 %v1335
  %1339 = vmatprep.subr.mxu0 0.0
  %1340 = vmatpush1.xpose.msra.mxu0 0.0
  %1341 = vmatprep.subr.mxu0 0.0
  %1342 = vmatpush1.xpose.msra.mxu0 0.0
  %1343 = vmatprep.subr.mxu0 0.0
  %1344 = vmatpush1.xpose.msra.mxu0 0.0
  %1345 = vmatprep.subr.mxu0 0.0
  %1346 = vmatpush1.xpose.msra.mxu0 0.0
  %1347 = vmatprep.subr.mxu0 0.0
  %1348 = vmatpush1.xpose.msra.mxu0 0.0
  %1349 = vmatprep.subr.mxu0 0.0
  %1350 = vmatpush1.xpose.msra.mxu0 0.0
  %1351 = vmatprep.subr.mxu0 0.0
  %1352 = vmatpush1.xpose.msra.mxu0 0.0
  %1353 = vmatprep.subr.mxu0 0.0
  %1354 = vmatpush1.xpose.msra.mxu0 0.0
  %1355 = vmatprep.subr.mxu0 0.0
  %1356 = vmatpush1.xpose.msra.mxu0 0.0
  %1357 = vmatprep.subr.mxu0 0.0
  %1358 = vmatpush1.xpose.msra.mxu0 0.0
  %1359 = vmatprep.subr.mxu0 0.0
  %1360 = vmatpush1.xpose.msra.mxu0 0.0
  %1361 = vmatprep.subr.mxu0 0.0
  %1362 = vmatpush1.xpose.msra.mxu0 0.0
  %1363 = vmatprep.subr.mxu0 0.0
  %1364 = vmatpush1.xpose.msra.mxu0 0.0
  %1365 = vmatprep.subr.mxu0 0.0
  %1366 = vmatpush1.xpose.msra.mxu0 0.0
  %1367 = vmatprep.subr.mxu0 0.0
  %1368 = vmatpush1.xpose.msra.mxu0 0.0
  %1369 = vmatprep.subr.mxu0 0.0
  %1370 = vmatpush1.xpose.msra.mxu0 0.0
  %1371 = vmatprep.subr.mxu0 0.0
  %1372 = vmatpush1.xpose.msra.mxu0 0.0
  %1373 = vmatprep.subr.mxu0 0.0
  %1374 = vmatpush1.xpose.msra.mxu0 0.0
  %1375 = vmatprep.subr.mxu0 0.0
  %1376 = vmatpush1.xpose.msra.mxu0 0.0
  %1377 = vmatprep.subr.mxu0 0.0
  %1378 = vmatpush1.xpose.msra.mxu0 0.0
  %1379 = vmatprep.subr.mxu0 0.0
  %1380 = vmatpush1.xpose.msra.mxu0 0.0
  %1381 = vmatprep.subr.mxu0 0.0
  %1382 = vmatpush1.xpose.msra.mxu0 0.0
  %1383 = vmatprep.subr.mxu0 0.0
  %1384 = vmatpush1.xpose.msra.mxu0 0.0
  %1385 = vmatprep.subr.mxu0 0.0
  %1386 = vmatpush1.xpose.msra.mxu0 0.0
  %1387 = vmatprep.subr.mxu0 0.0
  %1388 = vmatpush1.xpose.msra.mxu0 0.0
  %1389 = vmatprep.subr.mxu0 0.0
  %1390 = vmatpush1.xpose.msra.mxu0 0.0
  %1391 = vmatprep.subr.mxu0 0.0
  %1392 = vmatpush1.xpose.msra.mxu0 0.0
  %1393 = vmatprep.subr.mxu0 0.0
  %1394 = vmatpush1.xpose.msra.mxu0 0.0
  %1395 = vmatprep.subr.mxu0 0.0
  %1396 = vmatpush1.xpose.msra.mxu0 0.0
  %1397 = vmatprep.subr.mxu0 0.0
  %1398 = vmatpush1.xpose.msra.mxu0 0.0
  %1399 = vmatprep.subr.mxu0 0.0
  %1400 = vmatpush1.xpose.msra.mxu0 0.0
  %1401 = vmatprep.mubr.f32.mxu0 0.0
  %1402 = vmatmul.mubr.f32.gmra.mrb[0].mxu0 %v1333
  %v1403 = vpop.f32.mrb[0].mxu0
  %v1404 = vadd.f32 0.0, %v1403
  %v1405 = vpop.f32.mrb[0].mxu0
  %1406 = vdwg.mxu0
  %v1407 = vsel %vm421, %v1172, -inf
  %1408 = vmax.xlane.f32.xlu0 %v1407
  %v1409 = vpop.xlane.xlu0 %1408
  %v1410 = vsel %vm421, %v1250, -inf
  %1411 = vmax.xlane.f32.xlu0 %v1410
  %v1412 = vpop.xlane.xlu0 %1411
  %v1413 = vsel %vm421, %v1326, -inf
  %1414 = vmax.xlane.f32.xlu0 %v1413
  %v1415 = vpop.xlane.xlu0 %1414
  %v1416 = vsel %vm421, %v1404, -inf
  %1417 = vmax.xlane.f32.xlu0 %v1416
  %v1418 = vpop.xlane.xlu0 %1417
  %v1419 = vsub.f32 %v1172, %v1409
  %v1420 = vsub.f32 %v1250, %v1412
  %v1421 = vsub.f32 %v1326, %v1415
  %v1422 = vsub.f32 %v1404, %v1418
  %v1423 = vmul.f32 %v1419, 1.442695
  %v1424 = vpow.pop %v1423
  %v1425 = vmul.f32 %v1420, 1.442695
  %v1426 = vpow.pop %v1425
  %v1427 = vmul.f32 %v1421, 1.442695
  %v1428 = vpow.pop %v1427
  %v1429 = vmul.f32 %v1422, 1.442695
  %v1430 = vpow.pop %v1429
  %v1431 = vsel %vm421, %v1424, 0.0
  %1432 = vadd.xlane.f32.xlu0 %v1431
  %v1433 = vpop.xlane.xlu0 %1432
  %v1434 = vsel %vm421, %v1426, 0.0
  %1435 = vadd.xlane.f32.xlu0 %v1434
  %v1436 = vpop.xlane.xlu0 %1435
  %v1437 = vsel %vm421, %v1428, 0.0
  %1438 = vadd.xlane.f32.xlu0 %v1437
  %v1439 = vpop.xlane.xlu0 %1438
  %v1440 = vsel %vm421, %v1430, 0.0
  %1441 = vadd.xlane.f32.xlu0 %v1440
  %v1442 = vpop.xlane.xlu0 %1441
  %v1443 = vrcp.pop %v1433
  %v1444 = vrcp.pop %v1436
  %v1445 = vrcp.pop %v1439
  %v1446 = vrcp.pop %v1442
  %v1447 = vmul.f32 %v1424, %v1443
  %v1448 = vmul.f32 %v1426, %v1444
  %v1449 = vmul.f32 %v1428, %v1445
  %v1450 = vmul.f32 %v1430, %v1446
  %1451 = vrot.lane.b32.xlu0 %v1091, 96
  %v1452 = vpop.permute.xlu0 %1451
  %v1455 = vsel %vm421, %v1447, 0
  %1457 = vmatprep.subr.mxu0 0.0
  %1458 = vmatpush1.msra.mxu0 %v1452
  %1459 = vmatprep.subr.mxu0 0.0
  %1460 = vmatpush1.msra.mxu0 0.0
  %1461 = vmatprep.subr.mxu0 0.0
  %1462 = vmatpush1.msra.mxu0 0.0
  %1463 = vmatprep.subr.mxu0 0.0
  %1464 = vmatpush1.msra.mxu0 0.0
  %1465 = vmatprep.subr.mxu0 0.0
  %1466 = vmatpush1.msra.mxu0 0.0
  %1467 = vmatprep.subr.mxu0 0.0
  %1468 = vmatpush1.msra.mxu0 0.0
  %1469 = vmatprep.subr.mxu0 0.0
  %1470 = vmatpush1.msra.mxu0 0.0
  %1471 = vmatprep.subr.mxu0 0.0
  %1472 = vmatpush1.msra.mxu0 0.0
  %1473 = vmatprep.subr.mxu0 0.0
  %1474 = vmatpush1.msra.mxu0 0.0
  %1475 = vmatprep.subr.mxu0 0.0
  %1476 = vmatpush1.msra.mxu0 0.0
  %1477 = vmatprep.subr.mxu0 0.0
  %1478 = vmatpush1.msra.mxu0 0.0
  %1479 = vmatprep.subr.mxu0 0.0
  %1480 = vmatpush1.msra.mxu0 0.0
  %1481 = vmatprep.subr.mxu0 0.0
  %1482 = vmatpush1.msra.mxu0 0.0
  %1483 = vmatprep.subr.mxu0 0.0
  %1484 = vmatpush1.msra.mxu0 0.0
  %1485 = vmatprep.subr.mxu0 0.0
  %1486 = vmatpush1.msra.mxu0 0.0
  %1487 = vmatprep.subr.mxu0 0.0
  %1488 = vmatpush1.msra.mxu0 0.0
  %1489 = vmatprep.subr.mxu0 0.0
  %1490 = vmatpush1.msra.mxu0 0.0
  %1491 = vmatprep.subr.mxu0 0.0
  %1492 = vmatpush1.msra.mxu0 0.0
  %1493 = vmatprep.subr.mxu0 0.0
  %1494 = vmatpush1.msra.mxu0 0.0
  %1495 = vmatprep.subr.mxu0 0.0
  %1496 = vmatpush1.msra.mxu0 0.0
  %1497 = vmatprep.subr.mxu0 0.0
  %1498 = vmatpush1.msra.mxu0 0.0
  %1499 = vmatprep.subr.mxu0 0.0
  %1500 = vmatpush1.msra.mxu0 0.0
  %1501 = vmatprep.subr.mxu0 0.0
  %1502 = vmatpush1.msra.mxu0 0.0
  %1503 = vmatprep.subr.mxu0 0.0
  %1504 = vmatpush1.msra.mxu0 0.0
  %1505 = vmatprep.subr.mxu0 0.0
  %1506 = vmatpush1.msra.mxu0 0.0
  %1507 = vmatprep.subr.mxu0 0.0
  %1508 = vmatpush1.msra.mxu0 0.0
  %1509 = vmatprep.subr.mxu0 0.0
  %1510 = vmatpush1.msra.mxu0 0.0
  %1511 = vmatprep.subr.mxu0 0.0
  %1512 = vmatpush1.msra.mxu0 0.0
  %1513 = vmatprep.subr.mxu0 0.0
  %1514 = vmatpush1.msra.mxu0 0.0
  %1515 = vmatprep.subr.mxu0 0.0
  %1516 = vmatpush1.msra.mxu0 0.0
  %1517 = vmatprep.subr.mxu0 0.0
  %1518 = vmatpush1.msra.mxu0 0.0
  %1519 = vmatprep.subr.mxu0 0.0
  %1520 = vmatpush1.msra.mxu0 0.0
  %1521 = vmatprep.mubr.f32.mxu0 0.0
  %1522 = vmatmul.mubr.f32.gmra.mrb[0].mxu0 %v1455
  %v1523 = vpop.f32.mrb[0].mxu0
  %v1524 = vadd.f32 0.0, %v1523
  %v1525 = vpop.f32.mrb[0].mxu0
  %1526 = vdwg.mxu0
  %1527 = vrot.lane.b32.xlu0 %v1091, 80
  %v1528 = vpop.permute.xlu0 %1527
  %v1531 = vsel %vm421, %v1448, 0
  %1533 = vmatprep.subr.mxu0 0.0
  %1534 = vmatpush1.msra.mxu0 %v1528
  %1535 = vmatprep.subr.mxu0 0.0
  %1536 = vmatpush1.msra.mxu0 0.0
  %1537 = vmatprep.subr.mxu0 0.0
  %1538 = vmatpush1.msra.mxu0 0.0
  %1539 = vmatprep.subr.mxu0 0.0
  %1540 = vmatpush1.msra.mxu0 0.0
  %1541 = vmatprep.subr.mxu0 0.0
  %1542 = vmatpush1.msra.mxu0 0.0
  %1543 = vmatprep.subr.mxu0 0.0
  %1544 = vmatpush1.msra.mxu0 0.0
  %1545 = vmatprep.subr.mxu0 0.0
  %1546 = vmatpush1.msra.mxu0 0.0
  %1547 = vmatprep.subr.mxu0 0.0
  %1548 = vmatpush1.msra.mxu0 0.0
  %1549 = vmatprep.subr.mxu0 0.0
  %1550 = vmatpush1.msra.mxu0 0.0
  %1551 = vmatprep.subr.mxu0 0.0
  %1552 = vmatpush1.msra.mxu0 0.0
  %1553 = vmatprep.subr.mxu0 0.0
  %1554 = vmatpush1.msra.mxu0 0.0
  %1555 = vmatprep.subr.mxu0 0.0
  %1556 = vmatpush1.msra.mxu0 0.0
  %1557 = vmatprep.subr.mxu0 0.0
  %1558 = vmatpush1.msra.mxu0 0.0
  %1559 = vmatprep.subr.mxu0 0.0
  %1560 = vmatpush1.msra.mxu0 0.0
  %1561 = vmatprep.subr.mxu0 0.0
  %1562 = vmatpush1.msra.mxu0 0.0
  %1563 = vmatprep.subr.mxu0 0.0
  %1564 = vmatpush1.msra.mxu0 0.0
  %1565 = vmatprep.subr.mxu0 0.0
  %1566 = vmatpush1.msra.mxu0 0.0
  %1567 = vmatprep.subr.mxu0 0.0
  %1568 = vmatpush1.msra.mxu0 0.0
  %1569 = vmatprep.subr.mxu0 0.0
  %1570 = vmatpush1.msra.mxu0 0.0
  %1571 = vmatprep.subr.mxu0 0.0
  %1572 = vmatpush1.msra.mxu0 0.0
  %1573 = vmatprep.subr.mxu0 0.0
  %1574 = vmatpush1.msra.mxu0 0.0
  %1575 = vmatprep.subr.mxu0 0.0
  %1576 = vmatpush1.msra.mxu0 0.0
  %1577 = vmatprep.subr.mxu0 0.0
  %1578 = vmatpush1.msra.mxu0 0.0
  %1579 = vmatprep.subr.mxu0 0.0
  %1580 = vmatpush1.msra.mxu0 0.0
  %1581 = vmatprep.subr.mxu0 0.0
  %1582 = vmatpush1.msra.mxu0 0.0
  %1583 = vmatprep.subr.mxu0 0.0
  %1584 = vmatpush1.msra.mxu0 0.0
  %1585 = vmatprep.subr.mxu0 0.0
  %1586 = vmatpush1.msra.mxu0 0.0
  %1587 = vmatprep.subr.mxu0 0.0
  %1588 = vmatpush1.msra.mxu0 0.0
  %1589 = vmatprep.subr.mxu0 0.0
  %1590 = vmatpush1.msra.mxu0 0.0
  %1591 = vmatprep.subr.mxu0 0.0
  %1592 = vmatpush1.msra.mxu0 0.0
  %1593 = vmatprep.subr.mxu0 0.0
  %1594 = vmatpush1.msra.mxu0 0.0
  %1595 = vmatprep.subr.mxu0 0.0
  %1596 = vmatpush1.msra.mxu0 0.0
  %1597 = vmatprep.mubr.f32.mxu0 0.0
  %1598 = vmatmul.mubr.f32.gmra.mrb[0].mxu0 %v1531
  %v1599 = vpop.f32.mrb[0].mxu0
  %v1600 = vadd.f32 0.0, %v1599
  %v1601 = vpop.f32.mrb[0].mxu0
  %1602 = vdwg.mxu0
  %1604 = vrot.lane.b32.xlu0 %v1600, 16
  %v1605 = vpop.permute.xlu0 %1604
  %v1607 = vsel %vm113, %v1524, %v1605
  %1608 = vrot.lane.b32.xlu0 %v1096, 96
  %v1609 = vpop.permute.xlu0 %1608
  %v1612 = vsel %vm421, %v1449, 0
  %1614 = vmatprep.subr.mxu0 0.0
  %1615 = vmatpush1.msra.mxu0 %v1609
  %1616 = vmatprep.subr.mxu0 0.0
  %1617 = vmatpush1.msra.mxu0 0.0
  %1618 = vmatprep.subr.mxu0 0.0
  %1619 = vmatpush1.msra.mxu0 0.0
  %1620 = vmatprep.subr.mxu0 0.0
  %1621 = vmatpush1.msra.mxu0 0.0
  %1622 = vmatprep.subr.mxu0 0.0
  %1623 = vmatpush1.msra.mxu0 0.0
  %1624 = vmatprep.subr.mxu0 0.0
  %1625 = vmatpush1.msra.mxu0 0.0
  %1626 = vmatprep.subr.mxu0 0.0
  %1627 = vmatpush1.msra.mxu0 0.0
  %1628 = vmatprep.subr.mxu0 0.0
  %1629 = vmatpush1.msra.mxu0 0.0
  %1630 = vmatprep.subr.mxu0 0.0
  %1631 = vmatpush1.msra.mxu0 0.0
  %1632 = vmatprep.subr.mxu0 0.0
  %1633 = vmatpush1.msra.mxu0 0.0
  %1634 = vmatprep.subr.mxu0 0.0
  %1635 = vmatpush1.msra.mxu0 0.0
  %1636 = vmatprep.subr.mxu0 0.0
  %1637 = vmatpush1.msra.mxu0 0.0
  %1638 = vmatprep.subr.mxu0 0.0
  %1639 = vmatpush1.msra.mxu0 0.0
  %1640 = vmatprep.subr.mxu0 0.0
  %1641 = vmatpush1.msra.mxu0 0.0
  %1642 = vmatprep.subr.mxu0 0.0
  %1643 = vmatpush1.msra.mxu0 0.0
  %1644 = vmatprep.subr.mxu0 0.0
  %1645 = vmatpush1.msra.mxu0 0.0
  %1646 = vmatprep.subr.mxu0 0.0
  %1647 = vmatpush1.msra.mxu0 0.0
  %1648 = vmatprep.subr.mxu0 0.0
  %1649 = vmatpush1.msra.mxu0 0.0
  %1650 = vmatprep.subr.mxu0 0.0
  %1651 = vmatpush1.msra.mxu0 0.0
  %1652 = vmatprep.subr.mxu0 0.0
  %1653 = vmatpush1.msra.mxu0 0.0
  %1654 = vmatprep.subr.mxu0 0.0
  %1655 = vmatpush1.msra.mxu0 0.0
  %1656 = vmatprep.subr.mxu0 0.0
  %1657 = vmatpush1.msra.mxu0 0.0
  %1658 = vmatprep.subr.mxu0 0.0
  %1659 = vmatpush1.msra.mxu0 0.0
  %1660 = vmatprep.subr.mxu0 0.0
  %1661 = vmatpush1.msra.mxu0 0.0
  %1662 = vmatprep.subr.mxu0 0.0
  %1663 = vmatpush1.msra.mxu0 0.0
  %1664 = vmatprep.subr.mxu0 0.0
  %1665 = vmatpush1.msra.mxu0 0.0
  %1666 = vmatprep.subr.mxu0 0.0
  %1667 = vmatpush1.msra.mxu0 0.0
  %1668 = vmatprep.subr.mxu0 0.0
  %1669 = vmatpush1.msra.mxu0 0.0
  %1670 = vmatprep.subr.mxu0 0.0
  %1671 = vmatpush1.msra.mxu0 0.0
  %1672 = vmatprep.subr.mxu0 0.0
  %1673 = vmatpush1.msra.mxu0 0.0
  %1674 = vmatprep.subr.mxu0 0.0
  %1675 = vmatpush1.msra.mxu0 0.0
  %1676 = vmatprep.subr.mxu0 0.0
  %1677 = vmatpush1.msra.mxu0 0.0
  %1678 = vmatprep.mubr.f32.mxu0 0.0
  %1679 = vmatmul.mubr.f32.gmra.mrb[0].mxu0 %v1612
  %v1680 = vpop.f32.mrb[0].mxu0
  %v1681 = vadd.f32 0.0, %v1680
  %v1682 = vpop.f32.mrb[0].mxu0
  %1683 = vdwg.mxu0
  %1684 = vrot.lane.b32.xlu0 %v1096, 80
  %v1685 = vpop.permute.xlu0 %1684
  %v1688 = vsel %vm421, %v1450, 0
  %1690 = vmatprep.subr.mxu0 0.0
  %1691 = vmatpush1.msra.mxu0 %v1685
  %1692 = vmatprep.subr.mxu0 0.0
  %1693 = vmatpush1.msra.mxu0 0.0
  %1694 = vmatprep.subr.mxu0 0.0
  %1695 = vmatpush1.msra.mxu0 0.0
  %1696 = vmatprep.subr.mxu0 0.0
  %1697 = vmatpush1.msra.mxu0 0.0
  %1698 = vmatprep.subr.mxu0 0.0
  %1699 = vmatpush1.msra.mxu0 0.0
  %1700 = vmatprep.subr.mxu0 0.0
  %1701 = vmatpush1.msra.mxu0 0.0
  %1702 = vmatprep.subr.mxu0 0.0
  %1703 = vmatpush1.msra.mxu0 0.0
  %1704 = vmatprep.subr.mxu0 0.0
  %1705 = vmatpush1.msra.mxu0 0.0
  %1706 = vmatprep.subr.mxu0 0.0
  %1707 = vmatpush1.msra.mxu0 0.0
  %1708 = vmatprep.subr.mxu0 0.0
  %1709 = vmatpush1.msra.mxu0 0.0
  %1710 = vmatprep.subr.mxu0 0.0
  %1711 = vmatpush1.msra.mxu0 0.0
  %1712 = vmatprep.subr.mxu0 0.0
  %1713 = vmatpush1.msra.mxu0 0.0
  %1714 = vmatprep.subr.mxu0 0.0
  %1715 = vmatpush1.msra.mxu0 0.0
  %1716 = vmatprep.subr.mxu0 0.0
  %1717 = vmatpush1.msra.mxu0 0.0
  %1718 = vmatprep.subr.mxu0 0.0
  %1719 = vmatpush1.msra.mxu0 0.0
  %1720 = vmatprep.subr.mxu0 0.0
  %1721 = vmatpush1.msra.mxu0 0.0
  %1722 = vmatprep.subr.mxu0 0.0
  %1723 = vmatpush1.msra.mxu0 0.0
  %1724 = vmatprep.subr.mxu0 0.0
  %1725 = vmatpush1.msra.mxu0 0.0
  %1726 = vmatprep.subr.mxu0 0.0
  %1727 = vmatpush1.msra.mxu0 0.0
  %1728 = vmatprep.subr.mxu0 0.0
  %1729 = vmatpush1.msra.mxu0 0.0
  %1730 = vmatprep.subr.mxu0 0.0
  %1731 = vmatpush1.msra.mxu0 0.0
  %1732 = vmatprep.subr.mxu0 0.0
  %1733 = vmatpush1.msra.mxu0 0.0
  %1734 = vmatprep.subr.mxu0 0.0
  %1735 = vmatpush1.msra.mxu0 0.0
  %1736 = vmatprep.subr.mxu0 0.0
  %1737 = vmatpush1.msra.mxu0 0.0
  %1738 = vmatprep.subr.mxu0 0.0
  %1739 = vmatpush1.msra.mxu0 0.0
  %1740 = vmatprep.subr.mxu0 0.0
  %1741 = vmatpush1.msra.mxu0 0.0
  %1742 = vmatprep.subr.mxu0 0.0
  %1743 = vmatpush1.msra.mxu0 0.0
  %1744 = vmatprep.subr.mxu0 0.0
  %1745 = vmatpush1.msra.mxu0 0.0
  %1746 = vmatprep.subr.mxu0 0.0
  %1747 = vmatpush1.msra.mxu0 0.0
  %1748 = vmatprep.subr.mxu0 0.0
  %1749 = vmatpush1.msra.mxu0 0.0
  %1750 = vmatprep.subr.mxu0 0.0
  %1751 = vmatpush1.msra.mxu0 0.0
  %1752 = vmatprep.subr.mxu0 0.0
  %1753 = vmatpush1.msra.mxu0 0.0
  %1754 = vmatprep.mubr.f32.mxu0 0.0
  %1755 = vmatmul.mubr.f32.gmra.mrb[0].mxu0 %v1688
  %v1756 = vpop.f32.mrb[0].mxu0
  %v1757 = vadd.f32 0.0, %v1756
  %v1758 = vpop.f32.mrb[0].mxu0
  %1759 = vdwg.mxu0
  %1761 = vrot.lane.b32.xlu0 %v1757, 16
  %v1762 = vpop.permute.xlu0 %1761
  %v1764 = vsel %vm113, %v1681, %v1762
  %v1765 = vld [vmem:[%s2 + $0x80] sm:$0xff]
  %v1766 = vld [vmem:[%s2 + $0x88] sm:$0xff]
  %v1767 = vld [vmem:[%s2 + $0x90] sm:$0xff]
  %v1768 = vld [vmem:[%s2 + $0x98] sm:$0xff]
  %v1769 = vld [vmem:[%s3 + $0x4] sm:$0x1]
  %v1770 = vlaneseq
  %v1771 = vshrl.u32 %v1770, 7
  %v1772 = vsub.s32 0, %v1771
  %v1773 = vrot.slane %v1769, %v1772
  %v1775 = vsel %vm28, %v1607, 0
  %v1778 = vsel %vm28, %v1764, 0
  %1780 = vmatprep.subr.mxu0 0.0
  %1781 = vmatpush1.msra.mxu0 %v1765
  %1782 = vmatprep.subr.mxu0 0.0
  %1783 = vmatpush1.msra.mxu0 %v1766
  %1784 = vmatprep.subr.mxu0 0.0
  %1785 = vmatpush1.msra.mxu0 %v1767
  %1786 = vmatprep.subr.mxu0 0.0
  %1787 = vmatpush1.msra.mxu0 %v1768
  %1788 = vmatprep.subr.mxu0 0.0
  %1789 = vmatpush1.msra.mxu0 0.0
  %1790 = vmatprep.subr.mxu0 0.0
  %1791 = vmatpush1.msra.mxu0 0.0
  %1792 = vmatprep.subr.mxu0 0.0
  %1793 = vmatpush1.msra.mxu0 0.0
  %1794 = vmatprep.subr.mxu0 0.0
  %1795 = vmatpush1.msra.mxu0 0.0
  %1796 = vmatprep.subr.mxu0 0.0
  %1797 = vmatpush1.msra.mxu0 0.0
  %1798 = vmatprep.subr.mxu0 0.0
  %1799 = vmatpush1.msra.mxu0 0.0
  %1800 = vmatprep.subr.mxu0 0.0
  %1801 = vmatpush1.msra.mxu0 0.0
  %1802 = vmatprep.subr.mxu0 0.0
  %1803 = vmatpush1.msra.mxu0 0.0
  %1804 = vmatprep.subr.mxu0 0.0
  %1805 = vmatpush1.msra.mxu0 0.0
  %1806 = vmatprep.subr.mxu0 0.0
  %1807 = vmatpush1.msra.mxu0 0.0
  %1808 = vmatprep.subr.mxu0 0.0
  %1809 = vmatpush1.msra.mxu0 0.0
  %1810 = vmatprep.subr.mxu0 0.0
  %1811 = vmatpush1.msra.mxu0 0.0
  %1812 = vmatprep.subr.mxu0 0.0
  %1813 = vmatpush1.msra.mxu0 0.0
  %1814 = vmatprep.subr.mxu0 0.0
  %1815 = vmatpush1.msra.mxu0 0.0
  %1816 = vmatprep.subr.mxu0 0.0
  %1817 = vmatpush1.msra.mxu0 0.0
  %1818 = vmatprep.subr.mxu0 0.0
  %1819 = vmatpush1.msra.mxu0 0.0
  %1820 = vmatprep.subr.mxu0 0.0
  %1821 = vmatpush1.msra.mxu0 0.0
  %1822 = vmatprep.subr.mxu0 0.0
  %1823 = vmatpush1.msra.mxu0 0.0
  %1824 = vmatprep.subr.mxu0 0.0
  %1825 = vmatpush1.msra.mxu0 0.0
  %1826 = vmatprep.subr.mxu0 0.0
  %1827 = vmatpush1.msra.mxu0 0.0
  %1828 = vmatprep.subr.mxu0 0.0
  %1829 = vmatpush1.msra.mxu0 0.0
  %1830 = vmatprep.subr.mxu0 0.0
  %1831 = vmatpush1.msra.mxu0 0.0
  %1832 = vmatprep.subr.mxu0 0.0
  %1833 = vmatpush1.msra.mxu0 0.0
  %1834 = vmatprep.subr.mxu0 0.0
  %1835 = vmatpush1.msra.mxu0 0.0
  %1836 = vmatprep.subr.mxu0 0.0
  %1837 = vmatpush1.msra.mxu0 0.0
  %1838 = vmatprep.subr.mxu0 0.0
  %1839 = vmatpush1.msra.mxu0 0.0
  %1840 = vmatprep.subr.mxu0 0.0
  %1841 = vmatpush1.msra.mxu0 0.0
  %1842 = vmatprep.subr.mxu0 0.0
  %1843 = vmatpush1.msra.mxu0 0.0
  %1844 = vmatprep.mubr.f32.mxu0 0.0
  %1845 = vmatmul.mubr.f32.gmra.mrb[0].mxu0 %v1775
  %v1846 = vpop.f32.mrb[0].mxu0
  %v1847 = vadd.f32 %v1773, %v1846
  %v1848 = vpop.f32.mrb[0].mxu0
  %1849 = vmatprep.mubr.f32.mxu0 0.0
  %1850 = vmatmul.mubr.f32.gmra.mrb[0].mxu0 %v1778
  %v1851 = vpop.f32.mrb[0].mxu0
  %v1852 = vadd.f32 %v1773, %v1851
  %v1853 = vpop.f32.mrb[0].mxu0
  %1854 = vdwg.mxu0
  %v1855 = vadd.f32 %v915, %v1847
  %v1856 = vadd.f32 %v916, %v1852
  %v1857 = vld [vmem:[%s3 + $0x7] sm:$0x1]
  %v1858 = vld [vmem:[%s3 + $0x8] sm:$0x1]
  %v1859 = vsel %vm28, %v1855, 0.0
  %1860 = vadd.xlane.f32.xlu0 %v1859
  %v1861 = vpop.xlane.xlu0 %1860
  %v1862 = vsel %vm28, %v1856, 0.0
  %1863 = vadd.xlane.f32.xlu0 %v1862
  %v1864 = vpop.xlane.xlu0 %1863
  %v1865 = vmul.f32 %v1861, %v880
  %v1866 = vmul.f32 %v1864, %v880
  %v1867 = vmul.f32 %v1855, %v1855
  %v1868 = vmul.f32 %v1856, %v1856
  %v1869 = vsel %vm28, %v1867, 0.0
  %1870 = vadd.xlane.f32.xlu0 %v1869
  %v1871 = vpop.xlane.xlu0 %1870
  %v1872 = vsel %vm28, %v1868, 0.0
  %1873 = vadd.xlane.f32.xlu0 %v1872
  %v1874 = vpop.xlane.xlu0 %1873
  %v1875 = vmul.f32 %v1871, %v880
  %v1876 = vmul.f32 %v1874, %v880
  %v1877 = vmul.f32 %v1865, %v1865
  %v1878 = vmul.f32 %v1866, %v1866
  %v1879 = vsub.f32 %v1875, %v1877
  %v1880 = vsub.f32 %v1876, %v1878
  %v1881 = vsub.f32 %v1855, %v1865
  %v1882 = vsub.f32 %v1856, %v1866
  %v1883 = vadd.f32 %v1879, 1e-05
  %v1884 = vadd.f32 %v1880, 1e-05
  %v1885 = vrsqrt.pop %v1883
  %v1886 = vrsqrt.pop %v1884
  %v1887 = vmul.f32 %v1881, %v1885
  %v1888 = vmul.f32 %v1882, %v1886
  %v1889 = vlaneseq
  %v1890 = vshrl.u32 %v1889, 7
  %v1891 = vsub.s32 0, %v1890
  %v1892 = vrot.slane %v1857, %v1891
  %v1893 = vmul.f32 %v1887, %v1892
  %v1894 = vmul.f32 %v1888, %v1892
  %v1895 = vlaneseq
  %v1896 = vshrl.u32 %v1895, 7
  %v1897 = vsub.s32 0, %v1896
  %v1898 = vrot.slane %v1858, %v1897
  %v1899 = vadd.f32 %v1893, %v1898
  %v1900 = vadd.f32 %v1894, %v1898
  %v1901 = vld [vmem:[%s2 + $0xa0] sm:$0xff]
  %v1902 = vld [vmem:[%s2 + $0xa8] sm:$0xff]
  %v1903 = vld [vmem:[%s2 + $0xb0] sm:$0xff]
  %v1904 = vld [vmem:[%s2 + $0xb8] sm:$0xff]
  %v1905 = vld [vmem:[%s3 + $0xb] sm:$0x1]
  %v1906 = vlaneseq
  %v1907 = vshrl.u32 %v1906, 7
  %v1908 = vsub.s32 0, %v1907
  %v1909 = vrot.slane %v1905, %v1908
  %v1911 = vsel %vm28, %v1899, 0
  %v1914 = vsel %vm28, %v1900, 0
  %1916 = vmatprep.subr.mxu0 0.0
  %1917 = vmatpush1.msra.mxu0 %v1901
  %1918 = vmatprep.subr.mxu0 0.0
  %1919 = vmatpush1.msra.mxu0 %v1902
  %1920 = vmatprep.subr.mxu0 0.0
  %1921 = vmatpush1.msra.mxu0 %v1903
  %1922 = vmatprep.subr.mxu0 0.0
  %1923 = vmatpush1.msra.mxu0 %v1904
  %1924 = vmatprep.subr.mxu0 0.0
  %1925 = vmatpush1.msra.mxu0 0.0
  %1926 = vmatprep.subr.mxu0 0.0
  %1927 = vmatpush1.msra.mxu0 0.0
  %1928 = vmatprep.subr.mxu0 0.0
  %1929 = vmatpush1.msra.mxu0 0.0
  %1930 = vmatprep.subr.mxu0 0.0
  %1931 = vmatpush1.msra.mxu0 0.0
  %1932 = vmatprep.subr.mxu0 0.0
  %1933 = vmatpush1.msra.mxu0 0.0
  %1934 = vmatprep.subr.mxu0 0.0
  %1935 = vmatpush1.msra.mxu0 0.0
  %1936 = vmatprep.subr.mxu0 0.0
  %1937 = vmatpush1.msra.mxu0 0.0
  %1938 = vmatprep.subr.mxu0 0.0
  %1939 = vmatpush1.msra.mxu0 0.0
  %1940 = vmatprep.subr.mxu0 0.0
  %1941 = vmatpush1.msra.mxu0 0.0
  %1942 = vmatprep.subr.mxu0 0.0
  %1943 = vmatpush1.msra.mxu0 0.0
  %1944 = vmatprep.subr.mxu0 0.0
  %1945 = vmatpush1.msra.mxu0 0.0
  %1946 = vmatprep.subr.mxu0 0.0
  %1947 = vmatpush1.msra.mxu0 0.0
  %1948 = vmatprep.subr.mxu0 0.0
  %1949 = vmatpush1.msra.mxu0 0.0
  %1950 = vmatprep.subr.mxu0 0.0
  %1951 = vmatpush1.msra.mxu0 0.0
  %1952 = vmatprep.subr.mxu0 0.0
  %1953 = vmatpush1.msra.mxu0 0.0
  %1954 = vmatprep.subr.mxu0 0.0
  %1955 = vmatpush1.msra.mxu0 0.0
  %1956 = vmatprep.subr.mxu0 0.0
  %1957 = vmatpush1.msra.mxu0 0.0
  %1958 = vmatprep.subr.mxu0 0.0
  %1959 = vmatpush1.msra.mxu0 0.0
  %1960 = vmatprep.subr.mxu0 0.0
  %1961 = vmatpush1.msra.mxu0 0.0
  %1962 = vmatprep.subr.mxu0 0.0
  %1963 = vmatpush1.msra.mxu0 0.0
  %1964 = vmatprep.subr.mxu0 0.0
  %1965 = vmatpush1.msra.mxu0 0.0
  %1966 = vmatprep.subr.mxu0 0.0
  %1967 = vmatpush1.msra.mxu0 0.0
  %1968 = vmatprep.subr.mxu0 0.0
  %1969 = vmatpush1.msra.mxu0 0.0
  %1970 = vmatprep.subr.mxu0 0.0
  %1971 = vmatpush1.msra.mxu0 0.0
  %1972 = vmatprep.subr.mxu0 0.0
  %1973 = vmatpush1.msra.mxu0 0.0
  %1974 = vmatprep.subr.mxu0 0.0
  %1975 = vmatpush1.msra.mxu0 0.0
  %1976 = vmatprep.subr.mxu0 0.0
  %1977 = vmatpush1.msra.mxu0 0.0
  %1978 = vmatprep.subr.mxu0 0.0
  %1979 = vmatpush1.msra.mxu0 0.0
  %1980 = vmatprep.mubr.f32.mxu0 0.0
  %1981 = vmatmul.mubr.f32.gmra.mrb[0].mxu0 %v1911
  %v1982 = vpop.f32.mrb[0].mxu0
  %v1983 = vadd.f32 %v1909, %v1982
  %v1984 = vpop.f32.mrb[0].mxu0
  %1985 = vmatprep.mubr.f32.mxu0 0.0
  %1986 = vmatmul.mubr.f32.gmra.mrb[0].mxu0 %v1914
  %v1987 = vpop.f32.mrb[0].mxu0
  %v1988 = vadd.f32 %v1909, %v1987
  %v1989 = vpop.f32.mrb[0].mxu0
  %1990 = vdwg.mxu0
  %v1991 = vmax.f32 %v1983, 0.0
  %v1992 = vmax.f32 %v1988, 0.0
  %v1993 = vld [vmem:[%s2 + $0xc0] sm:$0xff]
  %v1994 = vld [vmem:[%s2 + $0xc8] sm:$0xff]
  %v1995 = vld [vmem:[%s2 + $0xd0] sm:$0xff]
  %v1996 = vld [vmem:[%s2 + $0xd8] sm:$0xff]
  %v1997 = vld [vmem:[%s2 + $0xe0] sm:$0xff]
  %v1998 = vld [vmem:[%s2 + $0xe8] sm:$0xff]
  %v1999 = vld [vmem:[%s2 + $0xf0] sm:$0xff]
  %v2000 = vld [vmem:[%s2 + $0xf8] sm:$0xff]
  %v2001 = vld [vmem:[%s3 + $0xc] sm:$0x1]
  %v2002 = vlaneseq
  %v2003 = vshrl.u32 %v2002, 7
  %v2004 = vsub.s32 0, %v2003
  %v2005 = vrot.slane %v2001, %v2004
  %vm2006 = vcmask 523264
  %v2008 = vsel %vm2006, %v1991, 0
  %v2011 = vsel %vm2006, %v1992, 0
  %2013 = vmatprep.subr.mxu0 0.0
  %2014 = vmatpush1.msra.mxu0 %v1993
  %2015 = vmatprep.subr.mxu0 0.0
  %2016 = vmatpush1.msra.mxu0 %v1994
  %2017 = vmatprep.subr.mxu0 0.0
  %2018 = vmatpush1.msra.mxu0 %v1995
  %2019 = vmatprep.subr.mxu0 0.0
  %2020 = vmatpush1.msra.mxu0 %v1996
  %2021 = vmatprep.subr.mxu0 0.0
  %2022 = vmatpush1.msra.mxu0 %v1997
  %2023 = vmatprep.subr.mxu0 0.0
  %2024 = vmatpush1.msra.mxu0 %v1998
  %2025 = vmatprep.subr.mxu0 0.0
  %2026 = vmatpush1.msra.mxu0 %v1999
  %2027 = vmatprep.subr.mxu0 0.0
  %2028 = vmatpush1.msra.mxu0 %v2000
  %2029 = vmatprep.subr.mxu0 0.0
  %2030 = vmatpush1.msra.mxu0 0.0
  %2031 = vmatprep.subr.mxu0 0.0
  %2032 = vmatpush1.msra.mxu0 0.0
  %2033 = vmatprep.subr.mxu0 0.0
  %2034 = vmatpush1.msra.mxu0 0.0
  %2035 = vmatprep.subr.mxu0 0.0
  %2036 = vmatpush1.msra.mxu0 0.0
  %2037 = vmatprep.subr.mxu0 0.0
  %2038 = vmatpush1.msra.mxu0 0.0
  %2039 = vmatprep.subr.mxu0 0.0
  %2040 = vmatpush1.msra.mxu0 0.0
  %2041 = vmatprep.subr.mxu0 0.0
  %2042 = vmatpush1.msra.mxu0 0.0
  %2043 = vmatprep.subr.mxu0 0.0
  %2044 = vmatpush1.msra.mxu0 0.0
  %2045 = vmatprep.subr.mxu0 0.0
  %2046 = vmatpush1.msra.mxu0 0.0
  %2047 = vmatprep.subr.mxu0 0.0
  %2048 = vmatpush1.msra.mxu0 0.0
  %2049 = vmatprep.subr.mxu0 0.0
  %2050 = vmatpush1.msra.mxu0 0.0
  %2051 = vmatprep.subr.mxu0 0.0
  %2052 = vmatpush1.msra.mxu0 0.0
  %2053 = vmatprep.subr.mxu0 0.0
  %2054 = vmatpush1.msra.mxu0 0.0
  %2055 = vmatprep.subr.mxu0 0.0
  %2056 = vmatpush1.msra.mxu0 0.0
  %2057 = vmatprep.subr.mxu0 0.0
  %2058 = vmatpush1.msra.mxu0 0.0
  %2059 = vmatprep.subr.mxu0 0.0
  %2060 = vmatpush1.msra.mxu0 0.0
  %2061 = vmatprep.subr.mxu0 0.0
  %2062 = vmatpush1.msra.mxu0 0.0
  %2063 = vmatprep.subr.mxu0 0.0
  %2064 = vmatpush1.msra.mxu0 0.0
  %2065 = vmatprep.subr.mxu0 0.0
  %2066 = vmatpush1.msra.mxu0 0.0
  %2067 = vmatprep.subr.mxu0 0.0
  %2068 = vmatpush1.msra.mxu0 0.0
  %2069 = vmatprep.subr.mxu0 0.0
  %2070 = vmatpush1.msra.mxu0 0.0
  %2071 = vmatprep.subr.mxu0 0.0
  %2072 = vmatpush1.msra.mxu0 0.0
  %2073 = vmatprep.subr.mxu0 0.0
  %2074 = vmatpush1.msra.mxu0 0.0
  %2075 = vmatprep.subr.mxu0 0.0
  %2076 = vmatpush1.msra.mxu0 0.0
  %2077 = vmatprep.mubr.f32.mxu0 0.0
  %2078 = vmatmul.mubr.f32.gmra.mrb[0].mxu0 %v2008
  %v2079 = vpop.f32.mrb[0].mxu0
  %v2080 = vadd.f32 %v2005, %v2079
  %v2081 = vpop.f32.mrb[0].mxu0
  %2082 = vmatprep.mubr.f32.mxu0 0.0
  %2083 = vmatmul.mubr.f32.gmra.mrb[0].mxu0 %v2011
  %v2084 = vpop.f32.mrb[0].mxu0
  %v2085 = vadd.f32 %v2005, %v2084
  %v2086 = vpop.f32.mrb[0].mxu0
  %2087 = vdwg.mxu0
  %v2088 = vadd.f32 %v1899, %v2080
  %v2089 = vadd.f32 %v1900, %v2085
  %v2090 = vld [vmem:[%s3 + $0x9] sm:$0x1]
  %v2091 = vld [vmem:[%s3 + $0xa] sm:$0x1]
  %v2092 = vsel %vm28, %v2088, 0.0
  %2093 = vadd.xlane.f32.xlu0 %v2092
  %v2094 = vpop.xlane.xlu0 %2093
  %v2095 = vsel %vm28, %v2089, 0.0
  %2096 = vadd.xlane.f32.xlu0 %v2095
  %v2097 = vpop.xlane.xlu0 %2096
  %v2098 = vmul.f32 %v2094, %v880
  %v2099 = vmul.f32 %v2097, %v880
  %v2100 = vmul.f32 %v2088, %v2088
  %v2101 = vmul.f32 %v2089, %v2089
  %v2102 = vsel %vm28, %v2100, 0.0
  %2103 = vadd.xlane.f32.xlu0 %v2102
  %v2104 = vpop.xlane.xlu0 %2103
  %v2105 = vsel %vm28, %v2101, 0.0
  %2106 = vadd.xlane.f32.xlu0 %v2105
  %v2107 = vpop.xlane.xlu0 %2106
  %v2108 = vmul.f32 %v2104, %v880
  %v2109 = vmul.f32 %v2107, %v880
  %v2110 = vmul.f32 %v2098, %v2098
  %v2111 = vmul.f32 %v2099, %v2099
  %v2112 = vsub.f32 %v2108, %v2110
  %v2113 = vsub.f32 %v2109, %v2111
  %v2114 = vsub.f32 %v2088, %v2098
  %v2115 = vsub.f32 %v2089, %v2099
  %v2116 = vadd.f32 %v2112, 1e-05
  %v2117 = vadd.f32 %v2113, 1e-05
  %v2118 = vrsqrt.pop %v2116
  %v2119 = vrsqrt.pop %v2117
  %v2120 = vmul.f32 %v2114, %v2118
  %v2121 = vmul.f32 %v2115, %v2119
  %v2122 = vlaneseq
  %v2123 = vshrl.u32 %v2122, 7
  %v2124 = vsub.s32 0, %v2123
  %v2125 = vrot.slane %v2090, %v2124
  %v2126 = vmul.f32 %v2120, %v2125
  %v2127 = vmul.f32 %v2121, %v2125
  %v2128 = vlaneseq
  %v2129 = vshrl.u32 %v2128, 7
  %v2130 = vsub.s32 0, %v2129
  %v2131 = vrot.slane %v2091, %v2130
  %v2132 = vadd.f32 %v2126, %v2131
  %v2133 = vadd.f32 %v2127, %v2131
  %v2134 = vld [vmem:[%s2 + $0x100] sm:$0xff]
  %v2135 = vld [vmem:[%s2 + $0x108] sm:$0xff]
  %v2136 = vld [vmem:[%s2 + $0x110] sm:$0xff]
  %v2137 = vld [vmem:[%s2 + $0x118] sm:$0xff]
  %v2138 = vld [vmem:[%s3 + $0xd] sm:$0x1]
  %v2139 = vlaneseq
  %v2140 = vshrl.u32 %v2139, 7
  %v2141 = vsub.s32 0, %v2140
  %v2142 = vrot.slane %v2138, %v2141
  %v2144 = vsel %vm28, %v2132, 0
  %v2147 = vsel %vm28, %v2133, 0
  %2149 = vmatprep.subr.mxu0 0.0
  %2150 = vmatpush1.msra.mxu0 %v2134
  %2151 = vmatprep.subr.mxu0 0.0
  %2152 = vmatpush1.msra.mxu0 %v2135
  %2153 = vmatprep.subr.mxu0 0.0
  %2154 = vmatpush1.msra.mxu0 %v2136
  %2155 = vmatprep.subr.mxu0 0.0
  %2156 = vmatpush1.msra.mxu0 %v2137
  %2157 = vmatprep.subr.mxu0 0.0
  %2158 = vmatpush1.msra.mxu0 0.0
  %2159 = vmatprep.subr.mxu0 0.0
  %2160 = vmatpush1.msra.mxu0 0.0
  %2161 = vmatprep.subr.mxu0 0.0
  %2162 = vmatpush1.msra.mxu0 0.0
  %2163 = vmatprep.subr.mxu0 0.0
  %2164 = vmatpush1.msra.mxu0 0.0
  %2165 = vmatprep.subr.mxu0 0.0
  %2166 = vmatpush1.msra.mxu0 0.0
  %2167 = vmatprep.subr.mxu0 0.0
  %2168 = vmatpush1.msra.mxu0 0.0
  %2169 = vmatprep.subr.mxu0 0.0
  %2170 = vmatpush1.msra.mxu0 0.0
  %2171 = vmatprep.subr.mxu0 0.0
  %2172 = vmatpush1.msra.mxu0 0.0
  %2173 = vmatprep.subr.mxu0 0.0
  %2174 = vmatpush1.msra.mxu0 0.0
  %2175 = vmatprep.subr.mxu0 0.0
  %2176 = vmatpush1.msra.mxu0 0.0
  %2177 = vmatprep.subr.mxu0 0.0
  %2178 = vmatpush1.msra.mxu0 0.0
  %2179 = vmatprep.subr.mxu0 0.0
  %2180 = vmatpush1.msra.mxu0 0.0
  %2181 = vmatprep.subr.mxu0 0.0
  %2182 = vmatpush1.msra.mxu0 0.0
  %2183 = vmatprep.subr.mxu0 0.0
  %2184 = vmatpush1.msra.mxu0 0.0
  %2185 = vmatprep.subr.mxu0 0.0
  %2186 = vmatpush1.msra.mxu0 0.0
  %2187 = vmatprep.subr.mxu0 0.0
  %2188 = vmatpush1.msra.mxu0 0.0
  %2189 = vmatprep.subr.mxu0 0.0
  %2190 = vmatpush1.msra.mxu0 0.0
  %2191 = vmatprep.subr.mxu0 0.0
  %2192 = vmatpush1.msra.mxu0 0.0
  %2193 = vmatprep.subr.mxu0 0.0
  %2194 = vmatpush1.msra.mxu0 0.0
  %2195 = vmatprep.subr.mxu0 0.0
  %2196 = vmatpush1.msra.mxu0 0.0
  %2197 = vmatprep.subr.mxu0 0.0
  %2198 = vmatpush1.msra.mxu0 0.0
  %2199 = vmatprep.subr.mxu0 0.0
  %2200 = vmatpush1.msra.mxu0 0.0
  %2201 = vmatprep.subr.mxu0 0.0
  %2202 = vmatpush1.msra.mxu0 0.0
  %2203 = vmatprep.subr.mxu0 0.0
  %2204 = vmatpush1.msra.mxu0 0.0
  %2205 = vmatprep.subr.mxu0 0.0
  %2206 = vmatpush1.msra.mxu0 0.0
  %2207 = vmatprep.subr.mxu0 0.0
  %2208 = vmatpush1.msra.mxu0 0.0
  %2209 = vmatprep.subr.mxu0 0.0
  %2210 = vmatpush1.msra.mxu0 0.0
  %2211 = vmatprep.subr.mxu0 0.0
  %2212 = vmatpush1.msra.mxu0 0.0
  %2213 = vmatprep.mubr.f32.mxu0 0.0
  %2214 = vmatmul.mubr.f32.gmra.mrb[0].mxu0 %v2144
  %v2215 = vpop.f32.mrb[0].mxu0
  %v2216 = vadd.f32 %v2142, %v2215
  %v2217 = vpop.f32.mrb[0].mxu0
  %2218 = vmatprep.mubr.f32.mxu0 0.0
  %2219 = vmatmul.mubr.f32.gmra.mrb[0].mxu0 %v2147
  %v2220 = vpop.f32.mrb[0].mxu0
  %v2221 = vadd.f32 %v2142, %v2220
  %v2222 = vpop.f32.mrb[0].mxu0
  %2223 = vdwg.mxu0
  %s2224 = scalar_lea.vmem %s2, 288
  %v2225 = vld [vmem:[%s2224] sm:$0xff]
  %v2226 = vld [vmem:[%s2224 + $0x8] sm:$0xff]
  %v2227 = vld [vmem:[%s2224 + $0x10] sm:$0xff]
  %v2228 = vld [vmem:[%s2224 + $0x18] sm:$0xff]
  %s2229 = scalar_lea.vmem %s3, 16
  %v2230 = vld [vmem:[%s2229] sm:$0x1]
  %v2231 = vlaneseq
  %v2232 = vshrl.u32 %v2231, 7
  %v2233 = vsub.s32 0, %v2232
  %v2234 = vrot.slane %v2230, %v2233
  %2235 = vmatprep.subr.mxu0 0.0
  %2236 = vmatpush1.msra.mxu0 %v2225
  %2237 = vmatprep.subr.mxu0 0.0
  %2238 = vmatpush1.msra.mxu0 %v2226
  %2239 = vmatprep.subr.mxu0 0.0
  %2240 = vmatpush1.msra.mxu0 %v2227
  %2241 = vmatprep.subr.mxu0 0.0
  %2242 = vmatpush1.msra.mxu0 %v2228
  %2243 = vmatprep.subr.mxu0 0.0
  %2244 = vmatpush1.msra.mxu0 0.0
  %2245 = vmatprep.subr.mxu0 0.0
  %2246 = vmatpush1.msra.mxu0 0.0
  %2247 = vmatprep.subr.mxu0 0.0
  %2248 = vmatpush1.msra.mxu0 0.0
  %2249 = vmatprep.subr.mxu0 0.0
  %2250 = vmatpush1.msra.mxu0 0.0
  %2251 = vmatprep.subr.mxu0 0.0
  %2252 = vmatpush1.msra.mxu0 0.0
  %2253 = vmatprep.subr.mxu0 0.0
  %2254 = vmatpush1.msra.mxu0 0.0
  %2255 = vmatprep.subr.mxu0 0.0
  %2256 = vmatpush1.msra.mxu0 0.0
  %2257 = vmatprep.subr.mxu0 0.0
  %2258 = vmatpush1.msra.mxu0 0.0
  %2259 = vmatprep.subr.mxu0 0.0
  %2260 = vmatpush1.msra.mxu0 0.0
  %2261 = vmatprep.subr.mxu0 0.0
  %2262 = vmatpush1.msra.mxu0 0.0
  %2263 = vmatprep.subr.mxu0 0.0
  %2264 = vmatpush1.msra.mxu0 0.0
  %2265 = vmatprep.subr.mxu0 0.0
  %2266 = vmatpush1.msra.mxu0 0.0
  %2267 = vmatprep.subr.mxu0 0.0
  %2268 = vmatpush1.msra.mxu0 0.0
  %2269 = vmatprep.subr.mxu0 0.0
  %2270 = vmatpush1.msra.mxu0 0.0
  %2271 = vmatprep.subr.mxu0 0.0
  %2272 = vmatpush1.msra.mxu0 0.0
  %2273 = vmatprep.subr.mxu0 0.0
  %2274 = vmatpush1.msra.mxu0 0.0
  %2275 = vmatprep.subr.mxu0 0.0
  %2276 = vmatpush1.msra.mxu0 0.0
  %2277 = vmatprep.subr.mxu0 0.0
  %2278 = vmatpush1.msra.mxu0 0.0
  %2279 = vmatprep.subr.mxu0 0.0
  %2280 = vmatpush1.msra.mxu0 0.0
  %2281 = vmatprep.subr.mxu0 0.0
  %2282 = vmatpush1.msra.mxu0 0.0
  %2283 = vmatprep.subr.mxu0 0.0
  %2284 = vmatpush1.msra.mxu0 0.0
  %2285 = vmatprep.subr.mxu0 0.0
  %2286 = vmatpush1.msra.mxu0 0.0
  %2287 = vmatprep.subr.mxu0 0.0
  %2288 = vmatpush1.msra.mxu0 0.0
  %2289 = vmatprep.subr.mxu0 0.0
  %2290 = vmatpush1.msra.mxu0 0.0
  %2291 = vmatprep.subr.mxu0 0.0
  %2292 = vmatpush1.msra.mxu0 0.0
  %2293 = vmatprep.subr.mxu0 0.0
  %2294 = vmatpush1.msra.mxu0 0.0
  %2295 = vmatprep.subr.mxu0 0.0
  %2296 = vmatpush1.msra.mxu0 0.0
  %2297 = vmatprep.subr.mxu0 0.0
  %2298 = vmatpush1.msra.mxu0 0.0
  %2299 = vmatprep.mubr.f32.mxu0 0.0
  %2300 = vmatmul.mubr.f32.gmra.mrb[0].mxu0 %v2144
  %v2301 = vpop.f32.mrb[0].mxu0
  %v2302 = vadd.f32 %v2234, %v2301
  %v2303 = vpop.f32.mrb[0].mxu0
  %2304 = vmatprep.mubr.f32.mxu0 0.0
  %2305 = vmatmul.mubr.f32.gmra.mrb[0].mxu0 %v2147
  %v2306 = vpop.f32.mrb[0].mxu0
  %v2307 = vadd.f32 %v2234, %v2306
  %v2308 = vpop.f32.mrb[0].mxu0
  %2309 = vdwg.mxu0
  %2311 = vrot.lane.b32.xlu0 %v2302, 96
  %v2312 = vpop.permute.xlu0 %2311
  %v2313 = vsel %vm113, %v2302, 0
  %v2315 = vsel %vm113, %v2312, 0
  %2317 = vmatprep.subr.mxu0 0.0
  %2318 = vmatpush1.xpose.msra.mxu0 %v2315
  %2319 = vmatprep.subr.mxu0 0.0
  %2320 = vmatpush1.xpose.msra.mxu0 0.0
  %2321 = vmatprep.subr.mxu0 0.0
  %2322 = vmatpush1.xpose.msra.mxu0 0.0
  %2323 = vmatprep.subr.mxu0 0.0
  %2324 = vmatpush1.xpose.msra.mxu0 0.0
  %2325 = vmatprep.subr.mxu0 0.0
  %2326 = vmatpush1.xpose.msra.mxu0 0.0
  %2327 = vmatprep.subr.mxu0 0.0
  %2328 = vmatpush1.xpose.msra.mxu0 0.0
  %2329 = vmatprep.subr.mxu0 0.0
  %2330 = vmatpush1.xpose.msra.mxu0 0.0
  %2331 = vmatprep.subr.mxu0 0.0
  %2332 = vmatpush1.xpose.msra.mxu0 0.0
  %2333 = vmatprep.subr.mxu0 0.0
  %2334 = vmatpush1.xpose.msra.mxu0 0.0
  %2335 = vmatprep.subr.mxu0 0.0
  %2336 = vmatpush1.xpose.msra.mxu0 0.0
  %2337 = vmatprep.subr.mxu0 0.0
  %2338 = vmatpush1.xpose.msra.mxu0 0.0
  %2339 = vmatprep.subr.mxu0 0.0
  %2340 = vmatpush1.xpose.msra.mxu0 0.0
  %2341 = vmatprep.subr.mxu0 0.0
  %2342 = vmatpush1.xpose.msra.mxu0 0.0
  %2343 = vmatprep.subr.mxu0 0.0
  %2344 = vmatpush1.xpose.msra.mxu0 0.0
  %2345 = vmatprep.subr.mxu0 0.0
  %2346 = vmatpush1.xpose.msra.mxu0 0.0
  %2347 = vmatprep.subr.mxu0 0.0
  %2348 = vmatpush1.xpose.msra.mxu0 0.0
  %2349 = vmatprep.subr.mxu0 0.0
  %2350 = vmatpush1.xpose.msra.mxu0 0.0
  %2351 = vmatprep.subr.mxu0 0.0
  %2352 = vmatpush1.xpose.msra.mxu0 0.0
  %2353 = vmatprep.subr.mxu0 0.0
  %2354 = vmatpush1.xpose.msra.mxu0 0.0
  %2355 = vmatprep.subr.mxu0 0.0
  %2356 = vmatpush1.xpose.msra.mxu0 0.0
  %2357 = vmatprep.subr.mxu0 0.0
  %2358 = vmatpush1.xpose.msra.mxu0 0.0
  %2359 = vmatprep.subr.mxu0 0.0
  %2360 = vmatpush1.xpose.msra.mxu0 0.0
  %2361 = vmatprep.subr.mxu0 0.0
  %2362 = vmatpush1.xpose.msra.mxu0 0.0
  %2363 = vmatprep.subr.mxu0 0.0
  %2364 = vmatpush1.xpose.msra.mxu0 0.0
  %2365 = vmatprep.subr.mxu0 0.0
  %2366 = vmatpush1.xpose.msra.mxu0 0.0
  %2367 = vmatprep.subr.mxu0 0.0
  %2368 = vmatpush1.xpose.msra.mxu0 0.0
  %2369 = vmatprep.subr.mxu0 0.0
  %2370 = vmatpush1.xpose.msra.mxu0 0.0
  %2371 = vmatprep.subr.mxu0 0.0
  %2372 = vmatpush1.xpose.msra.mxu0 0.0
  %2373 = vmatprep.subr.mxu0 0.0
  %2374 = vmatpush1.xpose.msra.mxu0 0.0
  %2375 = vmatprep.subr.mxu0 0.0
  %2376 = vmatpush1.xpose.msra.mxu0 0.0
  %2377 = vmatprep.subr.mxu0 0.0
  %2378 = vmatpush1.xpose.msra.mxu0 0.0
  %2379 = vmatprep.subr.mxu0 0.0
  %2380 = vmatpush1.xpose.msra.mxu0 0.0
  %2381 = vmatprep.mubr.f32.mxu0 0.0
  %2382 = vmatmul.mubr.f32.gmra.mrb[0].mxu0 %v2313
  %v2383 = vpop.f32.mrb[0].mxu0
  %v2384 = vadd.f32 0.0, %v2383
  %v2385 = vpop.f32.mrb[0].mxu0
  %2386 = vdwg.mxu0
  %2387 = vrot.lane.b32.xlu0 %v2302, 112
  %v2388 = vpop.permute.xlu0 %2387
  %2389 = vrot.lane.b32.xlu0 %v2302, 80
  %v2390 = vpop.permute.xlu0 %2389
  %v2391 = vsel %vm113, %v2388, 0
  %v2393 = vsel %vm113, %v2390, 0
  %2395 = vmatprep.subr.mxu0 0.0
  %2396 = vmatpush1.xpose.msra.mxu0 %v2393
  %2397 = vmatprep.subr.mxu0 0.0
  %2398 = vmatpush1.xpose.msra.mxu0 0.0
  %2399 = vmatprep.subr.mxu0 0.0
  %2400 = vmatpush1.xpose.msra.mxu0 0.0
  %2401 = vmatprep.subr.mxu0 0.0
  %2402 = vmatpush1.xpose.msra.mxu0 0.0
  %2403 = vmatprep.subr.mxu0 0.0
  %2404 = vmatpush1.xpose.msra.mxu0 0.0
  %2405 = vmatprep.subr.mxu0 0.0
  %2406 = vmatpush1.xpose.msra.mxu0 0.0
  %2407 = vmatprep.subr.mxu0 0.0
  %2408 = vmatpush1.xpose.msra.mxu0 0.0
  %2409 = vmatprep.subr.mxu0 0.0
  %2410 = vmatpush1.xpose.msra.mxu0 0.0
  %2411 = vmatprep.subr.mxu0 0.0
  %2412 = vmatpush1.xpose.msra.mxu0 0.0
  %2413 = vmatprep.subr.mxu0 0.0
  %2414 = vmatpush1.xpose.msra.mxu0 0.0
  %2415 = vmatprep.subr.mxu0 0.0
  %2416 = vmatpush1.xpose.msra.mxu0 0.0
  %2417 = vmatprep.subr.mxu0 0.0
  %2418 = vmatpush1.xpose.msra.mxu0 0.0
  %2419 = vmatprep.subr.mxu0 0.0
  %2420 = vmatpush1.xpose.msra.mxu0 0.0
  %2421 = vmatprep.subr.mxu0 0.0
  %2422 = vmatpush1.xpose.msra.mxu0 0.0
  %2423 = vmatprep.subr.mxu0 0.0
  %2424 = vmatpush1.xpose.msra.mxu0 0.0
  %2425 = vmatprep.subr.mxu0 0.0
  %2426 = vmatpush1.xpose.msra.mxu0 0.0
  %2427 = vmatprep.subr.mxu0 0.0
  %2428 = vmatpush1.xpose.msra.mxu0 0.0
  %2429 = vmatprep.subr.mxu0 0.0
  %2430 = vmatpush1.xpose.msra.mxu0 0.0
  %2431 = vmatprep.subr.mxu0 0.0
  %2432 = vmatpush1.xpose.msra.mxu0 0.0
  %2433 = vmatprep.subr.mxu0 0.0
  %2434 = vmatpush1.xpose.msra.mxu0 0.0
  %2435 = vmatprep.subr.mxu0 0.0
  %2436 = vmatpush1.xpose.msra.mxu0 0.0
  %2437 = vmatprep.subr.mxu0 0.0
  %2438 = vmatpush1.xpose.msra.mxu0 0.0
  %2439 = vmatprep.subr.mxu0 0.0
  %2440 = vmatpush1.xpose.msra.mxu0 0.0
  %2441 = vmatprep.subr.mxu0 0.0
  %2442 = vmatpush1.xpose.msra.mxu0 0.0
  %2443 = vmatprep.subr.mxu0 0.0
  %2444 = vmatpush1.xpose.msra.mxu0 0.0
  %2445 = vmatprep.subr.mxu0 0.0
  %2446 = vmatpush1.xpose.msra.mxu0 0.0
  %2447 = vmatprep.subr.mxu0 0.0
  %2448 = vmatpush1.xpose.msra.mxu0 0.0
  %2449 = vmatprep.subr.mxu0 0.0
  %2450 = vmatpush1.xpose.msra.mxu0 0.0
  %2451 = vmatprep.subr.mxu0 0.0
  %2452 = vmatpush1.xpose.msra.mxu0 0.0
  %2453 = vmatprep.subr.mxu0 0.0
  %2454 = vmatpush1.xpose.msra.mxu0 0.0
  %2455 = vmatprep.subr.mxu0 0.0
  %2456 = vmatpush1.xpose.msra.mxu0 0.0
  %2457 = vmatprep.subr.mxu0 0.0
  %2458 = vmatpush1.xpose.msra.mxu0 0.0
  %2459 = vmatprep.mubr.f32.mxu0 0.0
  %2460 = vmatmul.mubr.f32.gmra.mrb[0].mxu0 %v2391
  %v2461 = vpop.f32.mrb[0].mxu0
  %v2462 = vadd.f32 0.0, %v2461
  %v2463 = vpop.f32.mrb[0].mxu0
  %2464 = vdwg.mxu0
  %2466 = vrot.lane.b32.xlu0 %v2307, 96
  %v2467 = vpop.permute.xlu0 %2466
  %v2468 = vsel %vm113, %v2307, 0
  %v2470 = vsel %vm113, %v2467, 0
  %2472 = vmatprep.subr.mxu0 0.0
  %2473 = vmatpush1.xpose.msra.mxu0 %v2470
  %2474 = vmatprep.subr.mxu0 0.0
  %2475 = vmatpush1.xpose.msra.mxu0 0.0
  %2476 = vmatprep.subr.mxu0 0.0
  %2477 = vmatpush1.xpose.msra.mxu0 0.0
  %2478 = vmatprep.subr.mxu0 0.0
  %2479 = vmatpush1.xpose.msra.mxu0 0.0
  %2480 = vmatprep.subr.mxu0 0.0
  %2481 = vmatpush1.xpose.msra.mxu0 0.0
  %2482 = vmatprep.subr.mxu0 0.0
  %2483 = vmatpush1.xpose.msra.mxu0 0.0
  %2484 = vmatprep.subr.mxu0 0.0
  %2485 = vmatpush1.xpose.msra.mxu0 0.0
  %2486 = vmatprep.subr.mxu0 0.0
  %2487 = vmatpush1.xpose.msra.mxu0 0.0
  %2488 = vmatprep.subr.mxu0 0.0
  %2489 = vmatpush1.xpose.msra.mxu0 0.0
  %2490 = vmatprep.subr.mxu0 0.0
  %2491 = vmatpush1.xpose.msra.mxu0 0.0
  %2492 = vmatprep.subr.mxu0 0.0
  %2493 = vmatpush1.xpose.msra.mxu0 0.0
  %2494 = vmatprep.subr.mxu0 0.0
  %2495 = vmatpush1.xpose.msra.mxu0 0.0
  %2496 = vmatprep.subr.mxu0 0.0
  %2497 = vmatpush1.xpose.msra.mxu0 0.0
  %2498 = vmatprep.subr.mxu0 0.0
  %2499 = vmatpush1.xpose.msra.mxu0 0.0
  %2500 = vmatprep.subr.mxu0 0.0
  %2501 = vmatpush1.xpose.msra.mxu0 0.0
  %2502 = vmatprep.subr.mxu0 0.0
  %2503 = vmatpush1.xpose.msra.mxu0 0.0
  %2504 = vmatprep.subr.mxu0 0.0
  %2505 = vmatpush1.xpose.msra.mxu0 0.0
  %2506 = vmatprep.subr.mxu0 0.0
  %2507 = vmatpush1.xpose.msra.mxu0 0.0
  %2508 = vmatprep.subr.mxu0 0.0
  %2509 = vmatpush1.xpose.msra.mxu0 0.0
  %2510 = vmatprep.subr.mxu0 0.0
  %2511 = vmatpush1.xpose.msra.mxu0 0.0
  %2512 = vmatprep.subr.mxu0 0.0
  %2513 = vmatpush1.xpose.msra.mxu0 0.0
  %2514 = vmatprep.subr.mxu0 0.0
  %2515 = vmatpush1.xpose.msra.mxu0 0.0
  %2516 = vmatprep.subr.mxu0 0.0
  %2517 = vmatpush1.xpose.msra.mxu0 0.0
  %2518 = vmatprep.subr.mxu0 0.0
  %2519 = vmatpush1.xpose.msra.mxu0 0.0
  %2520 = vmatprep.subr.mxu0 0.0
  %2521 = vmatpush1.xpose.msra.mxu0 0.0
  %2522 = vmatprep.subr.mxu0 0.0
  %2523 = vmatpush1.xpose.msra.mxu0 0.0
  %2524 = vmatprep.subr.mxu0 0.0
  %2525 = vmatpush1.xpose.msra.mxu0 0.0
  %2526 = vmatprep.subr.mxu0 0.0
  %2527 = vmatpush1.xpose.msra.mxu0 0.0
  %2528 = vmatprep.subr.mxu0 0.0
  %2529 = vmatpush1.xpose.msra.mxu0 0.0
  %2530 = vmatprep.subr.mxu0 0.0
  %2531 = vmatpush1.xpose.msra.mxu0 0.0
  %2532 = vmatprep.subr.mxu0 0.0
  %2533 = vmatpush1.xpose.msra.mxu0 0.0
  %2534 = vmatprep.subr.mxu0 0.0
  %2535 = vmatpush1.xpose.msra.mxu0 0.0
  %2536 = vmatprep.mubr.f32.mxu0 0.0
  %2537 = vmatmul.mubr.f32.gmra.mrb[0].mxu0 %v2468
  %v2538 = vpop.f32.mrb[0].mxu0
  %v2539 = vadd.f32 0.0, %v2538
  %v2540 = vpop.f32.mrb[0].mxu0
  %2541 = vdwg.mxu0
  %2542 = vrot.lane.b32.xlu0 %v2307, 112
  %v2543 = vpop.permute.xlu0 %2542
  %2544 = vrot.lane.b32.xlu0 %v2307, 80
  %v2545 = vpop.permute.xlu0 %2544
  %v2546 = vsel %vm113, %v2543, 0
  %v2548 = vsel %vm113, %v2545, 0
  %2550 = vmatprep.subr.mxu0 0.0
  %2551 = vmatpush1.xpose.msra.mxu0 %v2548
  %2552 = vmatprep.subr.mxu0 0.0
  %2553 = vmatpush1.xpose.msra.mxu0 0.0
  %2554 = vmatprep.subr.mxu0 0.0
  %2555 = vmatpush1.xpose.msra.mxu0 0.0
  %2556 = vmatprep.subr.mxu0 0.0
  %2557 = vmatpush1.xpose.msra.mxu0 0.0
  %2558 = vmatprep.subr.mxu0 0.0
  %2559 = vmatpush1.xpose.msra.mxu0 0.0
  %2560 = vmatprep.subr.mxu0 0.0
  %2561 = vmatpush1.xpose.msra.mxu0 0.0
  %2562 = vmatprep.subr.mxu0 0.0
  %2563 = vmatpush1.xpose.msra.mxu0 0.0
  %2564 = vmatprep.subr.mxu0 0.0
  %2565 = vmatpush1.xpose.msra.mxu0 0.0
  %2566 = vmatprep.subr.mxu0 0.0
  %2567 = vmatpush1.xpose.msra.mxu0 0.0
  %2568 = vmatprep.subr.mxu0 0.0
  %2569 = vmatpush1.xpose.msra.mxu0 0.0
  %2570 = vmatprep.subr.mxu0 0.0
  %2571 = vmatpush1.xpose.msra.mxu0 0.0
  %2572 = vmatprep.subr.mxu0 0.0
  %2573 = vmatpush1.xpose.msra.mxu0 0.0
  %2574 = vmatprep.subr.mxu0 0.0
  %2575 = vmatpush1.xpose.msra.mxu0 0.0
  %2576 = vmatprep.subr.mxu0 0.0
  %2577 = vmatpush1.xpose.msra.mxu0 0.0
  %2578 = vmatprep.subr.mxu0 0.0
  %2579 = vmatpush1.xpose.msra.mxu0 0.0
  %2580 = vmatprep.subr.mxu0 0.0
  %2581 = vmatpush1.xpose.msra.mxu0 0.0
  %2582 = vmatprep.subr.mxu0 0.0
  %2583 = vmatpush1.xpose.msra.mxu0 0.0
  %2584 = vmatprep.subr.mxu0 0.0
  %2585 = vmatpush1.xpose.msra.mxu0 0.0
  %2586 = vmatprep.subr.mxu0 0.0
  %2587 = vmatpush1.xpose.msra.mxu0 0.0
  %2588 = vmatprep.subr.mxu0 0.0
  %2589 = vmatpush1.xpose.msra.mxu0 0.0
  %2590 = vmatprep.subr.mxu0 0.0
  %2591 = vmatpush1.xpose.msra.mxu0 0.0
  %2592 = vmatprep.subr.mxu0 0.0
  %2593 = vmatpush1.xpose.msra.mxu0 0.0
  %2594 = vmatprep.subr.mxu0 0.0
  %2595 = vmatpush1.xpose.msra.mxu0 0.0
  %2596 = vmatprep.subr.mxu0 0.0
  %2597 = vmatpush1.xpose.msra.mxu0 0.0
  %2598 = vmatprep.subr.mxu0 0.0
  %2599 = vmatpush1.xpose.msra.mxu0 0.0
  %2600 = vmatprep.subr.mxu0 0.0
  %2601 = vmatpush1.xpose.msra.mxu0 0.0
  %2602 = vmatprep.subr.mxu0 0.0
  %2603 = vmatpush1.xpose.msra.mxu0 0.0
  %2604 = vmatprep.subr.mxu0 0.0
  %2605 = vmatpush1.xpose.msra.mxu0 0.0
  %2606 = vmatprep.subr.mxu0 0.0
  %2607 = vmatpush1.xpose.msra.mxu0 0.0
  %2608 = vmatprep.subr.mxu0 0.0
  %2609 = vmatpush1.xpose.msra.mxu0 0.0
  %2610 = vmatprep.subr.mxu0 0.0
  %2611 = vmatpush1.xpose.msra.mxu0 0.0
  %2612 = vmatprep.subr.mxu0 0.0
  %2613 = vmatpush1.xpose.msra.mxu0 0.0
  %2614 = vmatprep.mubr.f32.mxu0 0.0
  %2615 = vmatmul.mubr.f32.gmra.mrb[0].mxu0 %v2546
  %v2616 = vpop.f32.mrb[0].mxu0
  %v2617 = vadd.f32 0.0, %v2616
  %v2618 = vpop.f32.mrb[0].mxu0
  %2619 = vdwg.mxu0
  %v2620 = vsel %vm421, %v2384, -inf
  %2621 = vmax.xlane.f32.xlu0 %v2620
  %v2622 = vpop.xlane.xlu0 %2621
  %v2623 = vsel %vm421, %v2462, -inf
  %2624 = vmax.xlane.f32.xlu0 %v2623
  %v2625 = vpop.xlane.xlu0 %2624
  %v2626 = vsel %vm421, %v2539, -inf
  %2627 = vmax.xlane.f32.xlu0 %v2626
  %v2628 = vpop.xlane.xlu0 %2627
  %v2629 = vsel %vm421, %v2617, -inf
  %2630 = vmax.xlane.f32.xlu0 %v2629
  %v2631 = vpop.xlane.xlu0 %2630
  %v2632 = vsub.f32 %v2384, %v2622
  %v2633 = vsub.f32 %v2462, %v2625
  %v2634 = vsub.f32 %v2539, %v2628
  %v2635 = vsub.f32 %v2617, %v2631
  %v2636 = vmul.f32 %v2632, 1.442695
  %v2637 = vpow.pop %v2636
  %v2638 = vmul.f32 %v2633, 1.442695
  %v2639 = vpow.pop %v2638
  %v2640 = vmul.f32 %v2634, 1.442695
  %v2641 = vpow.pop %v2640
  %v2642 = vmul.f32 %v2635, 1.442695
  %v2643 = vpow.pop %v2642
  %v2644 = vsel %vm421, %v2637, 0.0
  %2645 = vadd.xlane.f32.xlu0 %v2644
  %v2646 = vpop.xlane.xlu0 %2645
  %v2647 = vsel %vm421, %v2639, 0.0
  %2648 = vadd.xlane.f32.xlu0 %v2647
  %v2649 = vpop.xlane.xlu0 %2648
  %v2650 = vsel %vm421, %v2641, 0.0
  %2651 = vadd.xlane.f32.xlu0 %v2650
  %v2652 = vpop.xlane.xlu0 %2651
  %v2653 = vsel %vm421, %v2643, 0.0
  %2654 = vadd.xlane.f32.xlu0 %v2653
  %v2655 = vpop.xlane.xlu0 %2654
  %v2656 = vrcp.pop %v2646
  %v2657 = vrcp.pop %v2649
  %v2658 = vrcp.pop %v2652
  %v2659 = vrcp.pop %v2655
  %v2660 = vmul.f32 %v2637, %v2656
  %v2661 = vmul.f32 %v2639, %v2657
  %v2662 = vmul.f32 %v2641, %v2658
  %v2663 = vmul.f32 %v2643, %v2659
  %2664 = vrot.lane.b32.xlu0 %v2302, 64
  %v2665 = vpop.permute.xlu0 %2664
  %v2668 = vsel %vm421, %v2660, 0
  %2670 = vmatprep.subr.mxu0 0.0
  %2671 = vmatpush1.msra.mxu0 %v2665
  %2672 = vmatprep.subr.mxu0 0.0
  %2673 = vmatpush1.msra.mxu0 0.0
  %2674 = vmatprep.subr.mxu0 0.0
  %2675 = vmatpush1.msra.mxu0 0.0
  %2676 = vmatprep.subr.mxu0 0.0
  %2677 = vmatpush1.msra.mxu0 0.0
  %2678 = vmatprep.subr.mxu0 0.0
  %2679 = vmatpush1.msra.mxu0 0.0
  %2680 = vmatprep.subr.mxu0 0.0
  %2681 = vmatpush1.msra.mxu0 0.0
  %2682 = vmatprep.subr.mxu0 0.0
  %2683 = vmatpush1.msra.mxu0 0.0
  %2684 = vmatprep.subr.mxu0 0.0
  %2685 = vmatpush1.msra.mxu0 0.0
  %2686 = vmatprep.subr.mxu0 0.0
  %2687 = vmatpush1.msra.mxu0 0.0
  %2688 = vmatprep.subr.mxu0 0.0
  %2689 = vmatpush1.msra.mxu0 0.0
  %2690 = vmatprep.subr.mxu0 0.0
  %2691 = vmatpush1.msra.mxu0 0.0
  %2692 = vmatprep.subr.mxu0 0.0
  %2693 = vmatpush1.msra.mxu0 0.0
  %2694 = vmatprep.subr.mxu0 0.0
  %2695 = vmatpush1.msra.mxu0 0.0
  %2696 = vmatprep.subr.mxu0 0.0
  %2697 = vmatpush1.msra.mxu0 0.0
  %2698 = vmatprep.subr.mxu0 0.0
  %2699 = vmatpush1.msra.mxu0 0.0
  %2700 = vmatprep.subr.mxu0 0.0
  %2701 = vmatpush1.msra.mxu0 0.0
  %2702 = vmatprep.subr.mxu0 0.0
  %2703 = vmatpush1.msra.mxu0 0.0
  %2704 = vmatprep.subr.mxu0 0.0
  %2705 = vmatpush1.msra.mxu0 0.0
  %2706 = vmatprep.subr.mxu0 0.0
  %2707 = vmatpush1.msra.mxu0 0.0
  %2708 = vmatprep.subr.mxu0 0.0
  %2709 = vmatpush1.msra.mxu0 0.0
  %2710 = vmatprep.subr.mxu0 0.0
  %2711 = vmatpush1.msra.mxu0 0.0
  %2712 = vmatprep.subr.mxu0 0.0
  %2713 = vmatpush1.msra.mxu0 0.0
  %2714 = vmatprep.subr.mxu0 0.0
  %2715 = vmatpush1.msra.mxu0 0.0
  %2716 = vmatprep.subr.mxu0 0.0
  %2717 = vmatpush1.msra.mxu0 0.0
  %2718 = vmatprep.subr.mxu0 0.0
  %2719 = vmatpush1.msra.mxu0 0.0
  %2720 = vmatprep.subr.mxu0 0.0
  %2721 = vmatpush1.msra.mxu0 0.0
  %2722 = vmatprep.subr.mxu0 0.0
  %2723 = vmatpush1.msra.mxu0 0.0
  %2724 = vmatprep.subr.mxu0 0.0
  %2725 = vmatpush1.msra.mxu0 0.0
  %2726 = vmatprep.subr.mxu0 0.0
  %2727 = vmatpush1.msra.mxu0 0.0
  %2728 = vmatprep.subr.mxu0 0.0
  %2729 = vmatpush1.msra.mxu0 0.0
  %2730 = vmatprep.subr.mxu0 0.0
  %2731 = vmatpush1.msra.mxu0 0.0
  %2732 = vmatprep.subr.mxu0 0.0
  %2733 = vmatpush1.msra.mxu0 0.0
  %2734 = vmatprep.mubr.f32.mxu0 0.0
  %2735 = vmatmul.mubr.f32.gmra.mrb[0].mxu0 %v2668
  %v2736 = vpop.f32.mrb[0].mxu0
  %v2737 = vadd.f32 0.0, %v2736
  %v2738 = vpop.f32.mrb[0].mxu0
  %2739 = vdwg.mxu0
  %2740 = vrot.lane.b32.xlu0 %v2302, 48
  %v2741 = vpop.permute.xlu0 %2740
  %v2744 = vsel %vm421, %v2661, 0
  %2746 = vmatprep.subr.mxu0 0.0
  %2747 = vmatpush1.msra.mxu0 %v2741
  %2748 = vmatprep.subr.mxu0 0.0
  %2749 = vmatpush1.msra.mxu0 0.0
  %2750 = vmatprep.subr.mxu0 0.0
  %2751 = vmatpush1.msra.mxu0 0.0
  %2752 = vmatprep.subr.mxu0 0.0
  %2753 = vmatpush1.msra.mxu0 0.0
  %2754 = vmatprep.subr.mxu0 0.0
  %2755 = vmatpush1.msra.mxu0 0.0
  %2756 = vmatprep.subr.mxu0 0.0
  %2757 = vmatpush1.msra.mxu0 0.0
  %2758 = vmatprep.subr.mxu0 0.0
  %2759 = vmatpush1.msra.mxu0 0.0
  %2760 = vmatprep.subr.mxu0 0.0
  %2761 = vmatpush1.msra.mxu0 0.0
  %2762 = vmatprep.subr.mxu0 0.0
  %2763 = vmatpush1.msra.mxu0 0.0
  %2764 = vmatprep.subr.mxu0 0.0
  %2765 = vmatpush1.msra.mxu0 0.0
  %2766 = vmatprep.subr.mxu0 0.0
  %2767 = vmatpush1.msra.mxu0 0.0
  %2768 = vmatprep.subr.mxu0 0.0
  %2769 = vmatpush1.msra.mxu0 0.0
  %2770 = vmatprep.subr.mxu0 0.0
  %2771 = vmatpush1.msra.mxu0 0.0
  %2772 = vmatprep.subr.mxu0 0.0
  %2773 = vmatpush1.msra.mxu0 0.0
  %2774 = vmatprep.subr.mxu0 0.0
  %2775 = vmatpush1.msra.mxu0 0.0
  %2776 = vmatprep.subr.mxu0 0.0
  %2777 = vmatpush1.msra.mxu0 0.0
  %2778 = vmatprep.subr.mxu0 0.0
  %2779 = vmatpush1.msra.mxu0 0.0
  %2780 = vmatprep.subr.mxu0 0.0
  %2781 = vmatpush1.msra.mxu0 0.0
  %2782 = vmatprep.subr.mxu0 0.0
  %2783 = vmatpush1.msra.mxu0 0.0
  %2784 = vmatprep.subr.mxu0 0.0
  %2785 = vmatpush1.msra.mxu0 0.0
  %2786 = vmatprep.subr.mxu0 0.0
  %2787 = vmatpush1.msra.mxu0 0.0
  %2788 = vmatprep.subr.mxu0 0.0
  %2789 = vmatpush1.msra.mxu0 0.0
  %2790 = vmatprep.subr.mxu0 0.0
  %2791 = vmatpush1.msra.mxu0 0.0
  %2792 = vmatprep.subr.mxu0 0.0
  %2793 = vmatpush1.msra.mxu0 0.0
  %2794 = vmatprep.subr.mxu0 0.0
  %2795 = vmatpush1.msra.mxu0 0.0
  %2796 = vmatprep.subr.mxu0 0.0
  %2797 = vmatpush1.msra.mxu0 0.0
  %2798 = vmatprep.subr.mxu0 0.0
  %2799 = vmatpush1.msra.mxu0 0.0
  %2800 = vmatprep.subr.mxu0 0.0
  %2801 = vmatpush1.msra.mxu0 0.0
  %2802 = vmatprep.subr.mxu0 0.0
  %2803 = vmatpush1.msra.mxu0 0.0
  %2804 = vmatprep.subr.mxu0 0.0
  %2805 = vmatpush1.msra.mxu0 0.0
  %2806 = vmatprep.subr.mxu0 0.0
  %2807 = vmatpush1.msra.mxu0 0.0
  %2808 = vmatprep.subr.mxu0 0.0
  %2809 = vmatpush1.msra.mxu0 0.0
  %2810 = vmatprep.mubr.f32.mxu0 0.0
  %2811 = vmatmul.mubr.f32.gmra.mrb[0].mxu0 %v2744
  %v2812 = vpop.f32.mrb[0].mxu0
  %v2813 = vadd.f32 0.0, %v2812
  %v2814 = vpop.f32.mrb[0].mxu0
  %2815 = vdwg.mxu0
  %2817 = vrot.lane.b32.xlu0 %v2813, 16
  %v2818 = vpop.permute.xlu0 %2817
  %v2820 = vsel %vm113, %v2737, %v2818
  %2821 = vrot.lane.b32.xlu0 %v2307, 64
  %v2822 = vpop.permute.xlu0 %2821
  %v2825 = vsel %vm421, %v2662, 0
  %2827 = vmatprep.subr.mxu0 0.0
  %2828 = vmatpush1.msra.mxu0 %v2822
  %2829 = vmatprep.subr.mxu0 0.0
  %2830 = vmatpush1.msra.mxu0 0.0
  %2831 = vmatprep.subr.mxu0 0.0
  %2832 = vmatpush1.msra.mxu0 0.0
  %2833 = vmatprep.subr.mxu0 0.0
  %2834 = vmatpush1.msra.mxu0 0.0
  %2835 = vmatprep.subr.mxu0 0.0
  %2836 = vmatpush1.msra.mxu0 0.0
  %2837 = vmatprep.subr.mxu0 0.0
  %2838 = vmatpush1.msra.mxu0 0.0
  %2839 = vmatprep.subr.mxu0 0.0
  %2840 = vmatpush1.msra.mxu0 0.0
  %2841 = vmatprep.subr.mxu0 0.0
  %2842 = vmatpush1.msra.mxu0 0.0
  %2843 = vmatprep.subr.mxu0 0.0
  %2844 = vmatpush1.msra.mxu0 0.0
  %2845 = vmatprep.subr.mxu0 0.0
  %2846 = vmatpush1.msra.mxu0 0.0
  %2847 = vmatprep.subr.mxu0 0.0
  %2848 = vmatpush1.msra.mxu0 0.0
  %2849 = vmatprep.subr.mxu0 0.0
  %2850 = vmatpush1.msra.mxu0 0.0
  %2851 = vmatprep.subr.mxu0 0.0
  %2852 = vmatpush1.msra.mxu0 0.0
  %2853 = vmatprep.subr.mxu0 0.0
  %2854 = vmatpush1.msra.mxu0 0.0
  %2855 = vmatprep.subr.mxu0 0.0
  %2856 = vmatpush1.msra.mxu0 0.0
  %2857 = vmatprep.subr.mxu0 0.0
  %2858 = vmatpush1.msra.mxu0 0.0
  %2859 = vmatprep.subr.mxu0 0.0
  %2860 = vmatpush1.msra.mxu0 0.0
  %2861 = vmatprep.subr.mxu0 0.0
  %2862 = vmatpush1.msra.mxu0 0.0
  %2863 = vmatprep.subr.mxu0 0.0
  %2864 = vmatpush1.msra.mxu0 0.0
  %2865 = vmatprep.subr.mxu0 0.0
  %2866 = vmatpush1.msra.mxu0 0.0
  %2867 = vmatprep.subr.mxu0 0.0
  %2868 = vmatpush1.msra.mxu0 0.0
  %2869 = vmatprep.subr.mxu0 0.0
  %2870 = vmatpush1.msra.mxu0 0.0
  %2871 = vmatprep.subr.mxu0 0.0
  %2872 = vmatpush1.msra.mxu0 0.0
  %2873 = vmatprep.subr.mxu0 0.0
  %2874 = vmatpush1.msra.mxu0 0.0
  %2875 = vmatprep.subr.mxu0 0.0
  %2876 = vmatpush1.msra.mxu0 0.0
  %2877 = vmatprep.subr.mxu0 0.0
  %2878 = vmatpush1.msra.mxu0 0.0
  %2879 = vmatprep.subr.mxu0 0.0
  %2880 = vmatpush1.msra.mxu0 0.0
  %2881 = vmatprep.subr.mxu0 0.0
  %2882 = vmatpush1.msra.mxu0 0.0
  %2883 = vmatprep.subr.mxu0 0.0
  %2884 = vmatpush1.msra.mxu0 0.0
  %2885 = vmatprep.subr.mxu0 0.0
  %2886 = vmatpush1.msra.mxu0 0.0
  %2887 = vmatprep.subr.mxu0 0.0
  %2888 = vmatpush1.msra.mxu0 0.0
  %2889 = vmatprep.subr.mxu0 0.0
  %2890 = vmatpush1.msra.mxu0 0.0
  %2891 = vmatprep.mubr.f32.mxu0 0.0
  %2892 = vmatmul.mubr.f32.gmra.mrb[0].mxu0 %v2825
  %v2893 = vpop.f32.mrb[0].mxu0
  %v2894 = vadd.f32 0.0, %v2893
  %v2895 = vpop.f32.mrb[0].mxu0
  %2896 = vdwg.mxu0
  %2897 = vrot.lane.b32.xlu0 %v2307, 48
  %v2898 = vpop.permute.xlu0 %2897
  %v2901 = vsel %vm421, %v2663, 0
  %2903 = vmatprep.subr.mxu0 0.0
  %2904 = vmatpush1.msra.mxu0 %v2898
  %2905 = vmatprep.subr.mxu0 0.0
  %2906 = vmatpush1.msra.mxu0 0.0
  %2907 = vmatprep.subr.mxu0 0.0
  %2908 = vmatpush1.msra.mxu0 0.0
  %2909 = vmatprep.subr.mxu0 0.0
  %2910 = vmatpush1.msra.mxu0 0.0
  %2911 = vmatprep.subr.mxu0 0.0
  %2912 = vmatpush1.msra.mxu0 0.0
  %2913 = vmatprep.subr.mxu0 0.0
  %2914 = vmatpush1.msra.mxu0 0.0
  %2915 = vmatprep.subr.mxu0 0.0
  %2916 = vmatpush1.msra.mxu0 0.0
  %2917 = vmatprep.subr.mxu0 0.0
  %2918 = vmatpush1.msra.mxu0 0.0
  %2919 = vmatprep.subr.mxu0 0.0
  %2920 = vmatpush1.msra.mxu0 0.0
  %2921 = vmatprep.subr.mxu0 0.0
  %2922 = vmatpush1.msra.mxu0 0.0
  %2923 = vmatprep.subr.mxu0 0.0
  %2924 = vmatpush1.msra.mxu0 0.0
  %2925 = vmatprep.subr.mxu0 0.0
  %2926 = vmatpush1.msra.mxu0 0.0
  %2927 = vmatprep.subr.mxu0 0.0
  %2928 = vmatpush1.msra.mxu0 0.0
  %2929 = vmatprep.subr.mxu0 0.0
  %2930 = vmatpush1.msra.mxu0 0.0
  %2931 = vmatprep.subr.mxu0 0.0
  %2932 = vmatpush1.msra.mxu0 0.0
  %2933 = vmatprep.subr.mxu0 0.0
  %2934 = vmatpush1.msra.mxu0 0.0
  %2935 = vmatprep.subr.mxu0 0.0
  %2936 = vmatpush1.msra.mxu0 0.0
  %2937 = vmatprep.subr.mxu0 0.0
  %2938 = vmatpush1.msra.mxu0 0.0
  %2939 = vmatprep.subr.mxu0 0.0
  %2940 = vmatpush1.msra.mxu0 0.0
  %2941 = vmatprep.subr.mxu0 0.0
  %2942 = vmatpush1.msra.mxu0 0.0
  %2943 = vmatprep.subr.mxu0 0.0
  %2944 = vmatpush1.msra.mxu0 0.0
  %2945 = vmatprep.subr.mxu0 0.0
  %2946 = vmatpush1.msra.mxu0 0.0
  %2947 = vmatprep.subr.mxu0 0.0
  %2948 = vmatpush1.msra.mxu0 0.0
  %2949 = vmatprep.subr.mxu0 0.0
  %2950 = vmatpush1.msra.mxu0 0.0
  %2951 = vmatprep.subr.mxu0 0.0
  %2952 = vmatpush1.msra.mxu0 0.0
  %2953 = vmatprep.subr.mxu0 0.0
  %2954 = vmatpush1.msra.mxu0 0.0
  %2955 = vmatprep.subr.mxu0 0.0
  %2956 = vmatpush1.msra.mxu0 0.0
  %2957 = vmatprep.subr.mxu0 0.0
  %2958 = vmatpush1.msra.mxu0 0.0
  %2959 = vmatprep.subr.mxu0 0.0
  %2960 = vmatpush1.msra.mxu0 0.0
  %2961 = vmatprep.subr.mxu0 0.0
  %2962 = vmatpush1.msra.mxu0 0.0
  %2963 = vmatprep.subr.mxu0 0.0
  %2964 = vmatpush1.msra.mxu0 0.0
  %2965 = vmatprep.subr.mxu0 0.0
  %2966 = vmatpush1.msra.mxu0 0.0
  %2967 = vmatprep.mubr.f32.mxu0 0.0
  %2968 = vmatmul.mubr.f32.gmra.mrb[0].mxu0 %v2901
  %v2969 = vpop.f32.mrb[0].mxu0
  %v2970 = vadd.f32 0.0, %v2969
  %v2971 = vpop.f32.mrb[0].mxu0
  %2972 = vdwg.mxu0
  %2974 = vrot.lane.b32.xlu0 %v2970, 16
  %v2975 = vpop.permute.xlu0 %2974
  %v2977 = vsel %vm113, %v2894, %v2975
  %v2978 = vld [vmem:[%s2224 + $0x20] sm:$0xff]
  %v2979 = vld [vmem:[%s2224 + $0x28] sm:$0xff]
  %v2980 = vld [vmem:[%s2224 + $0x30] sm:$0xff]
  %v2981 = vld [vmem:[%s2224 + $0x38] sm:$0xff]
  %v2982 = vld [vmem:[%s2229 + $0x1] sm:$0x1]
  %v2983 = vlaneseq
  %v2984 = vshrl.u32 %v2983, 7
  %v2985 = vsub.s32 0, %v2984
  %v2986 = vrot.slane %v2982, %v2985
  %v2988 = vsel %vm28, %v2820, 0
  %v2991 = vsel %vm28, %v2977, 0
  %2993 = vmatprep.subr.mxu0 0.0
  %2994 = vmatpush1.msra.mxu0 %v2978
  %2995 = vmatprep.subr.mxu0 0.0
  %2996 = vmatpush1.msra.mxu0 %v2979
  %2997 = vmatprep.subr.mxu0 0.0
  %2998 = vmatpush1.msra.mxu0 %v2980
  %2999 = vmatprep.subr.mxu0 0.0
  %3000 = vmatpush1.msra.mxu0 %v2981
  %3001 = vmatprep.subr.mxu0 0.0
  %3002 = vmatpush1.msra.mxu0 0.0
  %3003 = vmatprep.subr.mxu0 0.0
  %3004 = vmatpush1.msra.mxu0 0.0
  %3005 = vmatprep.subr.mxu0 0.0
  %3006 = vmatpush1.msra.mxu0 0.0
  %3007 = vmatprep.subr.mxu0 0.0
  %3008 = vmatpush1.msra.mxu0 0.0
  %3009 = vmatprep.subr.mxu0 0.0
  %3010 = vmatpush1.msra.mxu0 0.0
  %3011 = vmatprep.subr.mxu0 0.0
  %3012 = vmatpush1.msra.mxu0 0.0
  %3013 = vmatprep.subr.mxu0 0.0
  %3014 = vmatpush1.msra.mxu0 0.0
  %3015 = vmatprep.subr.mxu0 0.0
  %3016 = vmatpush1.msra.mxu0 0.0
  %3017 = vmatprep.subr.mxu0 0.0
  %3018 = vmatpush1.msra.mxu0 0.0
  %3019 = vmatprep.subr.mxu0 0.0
  %3020 = vmatpush1.msra.mxu0 0.0
  %3021 = vmatprep.subr.mxu0 0.0
  %3022 = vmatpush1.msra.mxu0 0.0
  %3023 = vmatprep.subr.mxu0 0.0
  %3024 = vmatpush1.msra.mxu0 0.0
  %3025 = vmatprep.subr.mxu0 0.0
  %3026 = vmatpush1.msra.mxu0 0.0
  %3027 = vmatprep.subr.mxu0 0.0
  %3028 = vmatpush1.msra.mxu0 0.0
  %3029 = vmatprep.subr.mxu0 0.0
  %3030 = vmatpush1.msra.mxu0 0.0
  %3031 = vmatprep.subr.mxu0 0.0
  %3032 = vmatpush1.msra.mxu0 0.0
  %3033 = vmatprep.subr.mxu0 0.0
  %3034 = vmatpush1.msra.mxu0 0.0
  %3035 = vmatprep.subr.mxu0 0.0
  %3036 = vmatpush1.msra.mxu0 0.0
  %3037 = vmatprep.subr.mxu0 0.0
  %3038 = vmatpush1.msra.mxu0 0.0
  %3039 = vmatprep.subr.mxu0 0.0
  %3040 = vmatpush1.msra.mxu0 0.0
  %3041 = vmatprep.subr.mxu0 0.0
  %3042 = vmatpush1.msra.mxu0 0.0
  %3043 = vmatprep.subr.mxu0 0.0
  %3044 = vmatpush1.msra.mxu0 0.0
  %3045 = vmatprep.subr.mxu0 0.0
  %3046 = vmatpush1.msra.mxu0 0.0
  %3047 = vmatprep.subr.mxu0 0.0
  %3048 = vmatpush1.msra.mxu0 0.0
  %3049 = vmatprep.subr.mxu0 0.0
  %3050 = vmatpush1.msra.mxu0 0.0
  %3051 = vmatprep.subr.mxu0 0.0
  %3052 = vmatpush1.msra.mxu0 0.0
  %3053 = vmatprep.subr.mxu0 0.0
  %3054 = vmatpush1.msra.mxu0 0.0
  %3055 = vmatprep.subr.mxu0 0.0
  %3056 = vmatpush1.msra.mxu0 0.0
  %3057 = vmatprep.mubr.f32.mxu0 0.0
  %3058 = vmatmul.mubr.f32.gmra.mrb[0].mxu0 %v2988
  %v3059 = vpop.f32.mrb[0].mxu0
  %v3060 = vadd.f32 %v2986, %v3059
  %v3061 = vpop.f32.mrb[0].mxu0
  %3062 = vmatprep.mubr.f32.mxu0 0.0
  %3063 = vmatmul.mubr.f32.gmra.mrb[0].mxu0 %v2991
  %v3064 = vpop.f32.mrb[0].mxu0
  %v3065 = vadd.f32 %v2986, %v3064
  %v3066 = vpop.f32.mrb[0].mxu0
  %3067 = vdwg.mxu0
  %v3068 = vadd.f32 %v2132, %v3060
  %v3069 = vadd.f32 %v2133, %v3065
  %v3070 = vld [vmem:[%s2229 + $0x5] sm:$0x1]
  %v3071 = vld [vmem:[%s2229 + $0x6] sm:$0x1]
  %v3072 = vsel %vm28, %v3068, 0.0
  %3073 = vadd.xlane.f32.xlu0 %v3072
  %v3074 = vpop.xlane.xlu0 %3073
  %v3075 = vsel %vm28, %v3069, 0.0
  %3076 = vadd.xlane.f32.xlu0 %v3075
  %v3077 = vpop.xlane.xlu0 %3076
  %v3078 = vmul.f32 %v3074, %v880
  %v3079 = vmul.f32 %v3077, %v880
  %v3080 = vmul.f32 %v3068, %v3068
  %v3081 = vmul.f32 %v3069, %v3069
  %v3082 = vsel %vm28, %v3080, 0.0
  %3083 = vadd.xlane.f32.xlu0 %v3082
  %v3084 = vpop.xlane.xlu0 %3083
  %v3085 = vsel %vm28, %v3081, 0.0
  %3086 = vadd.xlane.f32.xlu0 %v3085
  %v3087 = vpop.xlane.xlu0 %3086
  %v3088 = vmul.f32 %v3084, %v880
  %v3089 = vmul.f32 %v3087, %v880
  %v3090 = vmul.f32 %v3078, %v3078
  %v3091 = vmul.f32 %v3079, %v3079
  %v3092 = vsub.f32 %v3088, %v3090
  %v3093 = vsub.f32 %v3089, %v3091
  %v3094 = vsub.f32 %v3068, %v3078
  %v3095 = vsub.f32 %v3069, %v3079
  %v3096 = vadd.f32 %v3092, 1e-05
  %v3097 = vadd.f32 %v3093, 1e-05
  %v3098 = vrsqrt.pop %v3096
  %v3099 = vrsqrt.pop %v3097
  %v3100 = vmul.f32 %v3094, %v3098
  %v3101 = vmul.f32 %v3095, %v3099
  %v3102 = vlaneseq
  %v3103 = vshrl.u32 %v3102, 7
  %v3104 = vsub.s32 0, %v3103
  %v3105 = vrot.slane %v3070, %v3104
  %v3106 = vmul.f32 %v3100, %v3105
  %v3107 = vmul.f32 %v3101, %v3105
  %v3108 = vlaneseq
  %v3109 = vshrl.u32 %v3108, 7
  %v3110 = vsub.s32 0, %v3109
  %v3111 = vrot.slane %v3071, %v3110
  %v3112 = vadd.f32 %v3106, %v3111
  %v3113 = vadd.f32 %v3107, %v3111
  %s3114 = scalar_lea.vmem %s1, 16
  %v3115 = vld [vmem:[%s3114] sm:$0xff]
  %v3116 = vld [vmem:[%s3114 + $0x8] sm:$0xff]
  %v3117 = vld [vmem:[%s2224 + $0x40] sm:$0xff]
  %v3118 = vld [vmem:[%s2224 + $0x48] sm:$0xff]
  %v3119 = vld [vmem:[%s2224 + $0x50] sm:$0xff]
  %v3120 = vld [vmem:[%s2224 + $0x58] sm:$0xff]
  %v3121 = vld [vmem:[%s2229 + $0x2] sm:$0x1]
  %v3122 = vlaneseq
  %v3123 = vshrl.u32 %v3122, 7
  %v3124 = vsub.s32 0, %v3123
  %v3125 = vrot.slane %v3121, %v3124
  %v3127 = vsel %vm28, %v3112, 0
  %v3130 = vsel %vm28, %v3113, 0
  %3132 = vmatprep.subr.mxu0 0.0
  %3133 = vmatpush1.msra.mxu0 %v3117
  %3134 = vmatprep.subr.mxu0 0.0
  %3135 = vmatpush1.msra.mxu0 %v3118
  %3136 = vmatprep.subr.mxu0 0.0
  %3137 = vmatpush1.msra.mxu0 %v3119
  %3138 = vmatprep.subr.mxu0 0.0
  %3139 = vmatpush1.msra.mxu0 %v3120
  %3140 = vmatprep.subr.mxu0 0.0
  %3141 = vmatpush1.msra.mxu0 0.0
  %3142 = vmatprep.subr.mxu0 0.0
  %3143 = vmatpush1.msra.mxu0 0.0
  %3144 = vmatprep.subr.mxu0 0.0
  %3145 = vmatpush1.msra.mxu0 0.0
  %3146 = vmatprep.subr.mxu0 0.0
  %3147 = vmatpush1.msra.mxu0 0.0
  %3148 = vmatprep.subr.mxu0 0.0
  %3149 = vmatpush1.msra.mxu0 0.0
  %3150 = vmatprep.subr.mxu0 0.0
  %3151 = vmatpush1.msra.mxu0 0.0
  %3152 = vmatprep.subr.mxu0 0.0
  %3153 = vmatpush1.msra.mxu0 0.0
  %3154 = vmatprep.subr.mxu0 0.0
  %3155 = vmatpush1.msra.mxu0 0.0
  %3156 = vmatprep.subr.mxu0 0.0
  %3157 = vmatpush1.msra.mxu0 0.0
  %3158 = vmatprep.subr.mxu0 0.0
  %3159 = vmatpush1.msra.mxu0 0.0
  %3160 = vmatprep.subr.mxu0 0.0
  %3161 = vmatpush1.msra.mxu0 0.0
  %3162 = vmatprep.subr.mxu0 0.0
  %3163 = vmatpush1.msra.mxu0 0.0
  %3164 = vmatprep.subr.mxu0 0.0
  %3165 = vmatpush1.msra.mxu0 0.0
  %3166 = vmatprep.subr.mxu0 0.0
  %3167 = vmatpush1.msra.mxu0 0.0
  %3168 = vmatprep.subr.mxu0 0.0
  %3169 = vmatpush1.msra.mxu0 0.0
  %3170 = vmatprep.subr.mxu0 0.0
  %3171 = vmatpush1.msra.mxu0 0.0
  %3172 = vmatprep.subr.mxu0 0.0
  %3173 = vmatpush1.msra.mxu0 0.0
  %3174 = vmatprep.subr.mxu0 0.0
  %3175 = vmatpush1.msra.mxu0 0.0
  %3176 = vmatprep.subr.mxu0 0.0
  %3177 = vmatpush1.msra.mxu0 0.0
  %3178 = vmatprep.subr.mxu0 0.0
  %3179 = vmatpush1.msra.mxu0 0.0
  %3180 = vmatprep.subr.mxu0 0.0
  %3181 = vmatpush1.msra.mxu0 0.0
  %3182 = vmatprep.subr.mxu0 0.0
  %3183 = vmatpush1.msra.mxu0 0.0
  %3184 = vmatprep.subr.mxu0 0.0
  %3185 = vmatpush1.msra.mxu0 0.0
  %3186 = vmatprep.subr.mxu0 0.0
  %3187 = vmatpush1.msra.mxu0 0.0
  %3188 = vmatprep.subr.mxu0 0.0
  %3189 = vmatpush1.msra.mxu0 0.0
  %3190 = vmatprep.subr.mxu0 0.0
  %3191 = vmatpush1.msra.mxu0 0.0
  %3192 = vmatprep.subr.mxu0 0.0
  %3193 = vmatpush1.msra.mxu0 0.0
  %3194 = vmatprep.subr.mxu0 0.0
  %3195 = vmatpush1.msra.mxu0 0.0
  %3196 = vmatprep.mubr.f32.mxu0 0.0
  %3197 = vmatmul.mubr.f32.gmra.mrb[0].mxu0 %v3127
  %v3198 = vpop.f32.mrb[0].mxu0
  %v3199 = vadd.f32 %v3125, %v3198
  %v3200 = vpop.f32.mrb[0].mxu0
  %3201 = vmatprep.mubr.f32.mxu0 0.0
  %3202 = vmatmul.mubr.f32.gmra.mrb[0].mxu0 %v3130
  %v3203 = vpop.f32.mrb[0].mxu0
  %v3204 = vadd.f32 %v3125, %v3203
  %v3205 = vpop.f32.mrb[0].mxu0
  %3206 = vdwg.mxu0
  %v3207 = vld [vmem:[%s2224 + $0x60] sm:$0xff]
  %v3208 = vld [vmem:[%s2224 + $0x68] sm:$0xff]
  %v3209 = vld [vmem:[%s2224 + $0x70] sm:$0xff]
  %v3210 = vld [vmem:[%s2224 + $0x78] sm:$0xff]
  %v3211 = vld [vmem:[%s2229 + $0x3] sm:$0x1]
  %v3212 = vlaneseq
  %v3213 = vshrl.u32 %v3212, 7
  %v3214 = vsub.s32 0, %v3213
  %v3215 = vrot.slane %v3211, %v3214
  %v3217 = vsel %vm28, %v3115, 0
  %v3220 = vsel %vm28, %v3116, 0
  %3222 = vmatprep.subr.mxu0 0.0
  %3223 = vmatpush1.msra.mxu0 %v3207
  %3224 = vmatprep.subr.mxu0 0.0
  %3225 = vmatpush1.msra.mxu0 %v3208
  %3226 = vmatprep.subr.mxu0 0.0
  %3227 = vmatpush1.msra.mxu0 %v3209
  %3228 = vmatprep.subr.mxu0 0.0
  %3229 = vmatpush1.msra.mxu0 %v3210
  %3230 = vmatprep.subr.mxu0 0.0
  %3231 = vmatpush1.msra.mxu0 0.0
  %3232 = vmatprep.subr.mxu0 0.0
  %3233 = vmatpush1.msra.mxu0 0.0
  %3234 = vmatprep.subr.mxu0 0.0
  %3235 = vmatpush1.msra.mxu0 0.0
  %3236 = vmatprep.subr.mxu0 0.0
  %3237 = vmatpush1.msra.mxu0 0.0
  %3238 = vmatprep.subr.mxu0 0.0
  %3239 = vmatpush1.msra.mxu0 0.0
  %3240 = vmatprep.subr.mxu0 0.0
  %3241 = vmatpush1.msra.mxu0 0.0
  %3242 = vmatprep.subr.mxu0 0.0
  %3243 = vmatpush1.msra.mxu0 0.0
  %3244 = vmatprep.subr.mxu0 0.0
  %3245 = vmatpush1.msra.mxu0 0.0
  %3246 = vmatprep.subr.mxu0 0.0
  %3247 = vmatpush1.msra.mxu0 0.0
  %3248 = vmatprep.subr.mxu0 0.0
  %3249 = vmatpush1.msra.mxu0 0.0
  %3250 = vmatprep.subr.mxu0 0.0
  %3251 = vmatpush1.msra.mxu0 0.0
  %3252 = vmatprep.subr.mxu0 0.0
  %3253 = vmatpush1.msra.mxu0 0.0
  %3254 = vmatprep.subr.mxu0 0.0
  %3255 = vmatpush1.msra.mxu0 0.0
  %3256 = vmatprep.subr.mxu0 0.0
  %3257 = vmatpush1.msra.mxu0 0.0
  %3258 = vmatprep.subr.mxu0 0.0
  %3259 = vmatpush1.msra.mxu0 0.0
  %3260 = vmatprep.subr.mxu0 0.0
  %3261 = vmatpush1.msra.mxu0 0.0
  %3262 = vmatprep.subr.mxu0 0.0
  %3263 = vmatpush1.msra.mxu0 0.0
  %3264 = vmatprep.subr.mxu0 0.0
  %3265 = vmatpush1.msra.mxu0 0.0
  %3266 = vmatprep.subr.mxu0 0.0
  %3267 = vmatpush1.msra.mxu0 0.0
  %3268 = vmatprep.subr.mxu0 0.0
  %3269 = vmatpush1.msra.mxu0 0.0
  %3270 = vmatprep.subr.mxu0 0.0
  %3271 = vmatpush1.msra.mxu0 0.0
  %3272 = vmatprep.subr.mxu0 0.0
  %3273 = vmatpush1.msra.mxu0 0.0
  %3274 = vmatprep.subr.mxu0 0.0
  %3275 = vmatpush1.msra.mxu0 0.0
  %3276 = vmatprep.subr.mxu0 0.0
  %3277 = vmatpush1.msra.mxu0 0.0
  %3278 = vmatprep.subr.mxu0 0.0
  %3279 = vmatpush1.msra.mxu0 0.0
  %3280 = vmatprep.subr.mxu0 0.0
  %3281 = vmatpush1.msra.mxu0 0.0
  %3282 = vmatprep.subr.mxu0 0.0
  %3283 = vmatpush1.msra.mxu0 0.0
  %3284 = vmatprep.subr.mxu0 0.0
  %3285 = vmatpush1.msra.mxu0 0.0
  %3286 = vmatprep.mubr.f32.mxu0 0.0
  %3287 = vmatmul.mubr.f32.gmra.mrb[0].mxu0 %v3217
  %v3288 = vpop.f32.mrb[0].mxu0
  %v3289 = vadd.f32 %v3215, %v3288
  %v3290 = vpop.f32.mrb[0].mxu0
  %3291 = vmatprep.mubr.f32.mxu0 0.0
  %3292 = vmatmul.mubr.f32.gmra.mrb[0].mxu0 %v3220
  %v3293 = vpop.f32.mrb[0].mxu0
  %v3294 = vadd.f32 %v3215, %v3293
  %v3295 = vpop.f32.mrb[0].mxu0
  %3296 = vdwg.mxu0
  %v3298 = vsel %vm113, %v3199, 0
  %v3301 = vsel %vm113, %v3289, 0
  %3303 = vmatprep.subr.mxu0 0.0
  %3304 = vmatpush1.xpose.msra.mxu0 %v3301
  %3305 = vmatprep.subr.mxu0 0.0
  %3306 = vmatpush1.xpose.msra.mxu0 0.0
  %3307 = vmatprep.subr.mxu0 0.0
  %3308 = vmatpush1.xpose.msra.mxu0 0.0
  %3309 = vmatprep.subr.mxu0 0.0
  %3310 = vmatpush1.xpose.msra.mxu0 0.0
  %3311 = vmatprep.subr.mxu0 0.0
  %3312 = vmatpush1.xpose.msra.mxu0 0.0
  %3313 = vmatprep.subr.mxu0 0.0
  %3314 = vmatpush1.xpose.msra.mxu0 0.0
  %3315 = vmatprep.subr.mxu0 0.0
  %3316 = vmatpush1.xpose.msra.mxu0 0.0
  %3317 = vmatprep.subr.mxu0 0.0
  %3318 = vmatpush1.xpose.msra.mxu0 0.0
  %3319 = vmatprep.subr.mxu0 0.0
  %3320 = vmatpush1.xpose.msra.mxu0 0.0
  %3321 = vmatprep.subr.mxu0 0.0
  %3322 = vmatpush1.xpose.msra.mxu0 0.0
  %3323 = vmatprep.subr.mxu0 0.0
  %3324 = vmatpush1.xpose.msra.mxu0 0.0
  %3325 = vmatprep.subr.mxu0 0.0
  %3326 = vmatpush1.xpose.msra.mxu0 0.0
  %3327 = vmatprep.subr.mxu0 0.0
  %3328 = vmatpush1.xpose.msra.mxu0 0.0
  %3329 = vmatprep.subr.mxu0 0.0
  %3330 = vmatpush1.xpose.msra.mxu0 0.0
  %3331 = vmatprep.subr.mxu0 0.0
  %3332 = vmatpush1.xpose.msra.mxu0 0.0
  %3333 = vmatprep.subr.mxu0 0.0
  %3334 = vmatpush1.xpose.msra.mxu0 0.0
  %3335 = vmatprep.subr.mxu0 0.0
  %3336 = vmatpush1.xpose.msra.mxu0 0.0
  %3337 = vmatprep.subr.mxu0 0.0
  %3338 = vmatpush1.xpose.msra.mxu0 0.0
  %3339 = vmatprep.subr.mxu0 0.0
  %3340 = vmatpush1.xpose.msra.mxu0 0.0
  %3341 = vmatprep.subr.mxu0 0.0
  %3342 = vmatpush1.xpose.msra.mxu0 0.0
  %3343 = vmatprep.subr.mxu0 0.0
  %3344 = vmatpush1.xpose.msra.mxu0 0.0
  %3345 = vmatprep.subr.mxu0 0.0
  %3346 = vmatpush1.xpose.msra.mxu0 0.0
  %3347 = vmatprep.subr.mxu0 0.0
  %3348 = vmatpush1.xpose.msra.mxu0 0.0
  %3349 = vmatprep.subr.mxu0 0.0
  %3350 = vmatpush1.xpose.msra.mxu0 0.0
  %3351 = vmatprep.subr.mxu0 0.0
  %3352 = vmatpush1.xpose.msra.mxu0 0.0
  %3353 = vmatprep.subr.mxu0 0.0
  %3354 = vmatpush1.xpose.msra.mxu0 0.0
  %3355 = vmatprep.subr.mxu0 0.0
  %3356 = vmatpush1.xpose.msra.mxu0 0.0
  %3357 = vmatprep.subr.mxu0 0.0
  %3358 = vmatpush1.xpose.msra.mxu0 0.0
  %3359 = vmatprep.subr.mxu0 0.0
  %3360 = vmatpush1.xpose.msra.mxu0 0.0
  %3361 = vmatprep.subr.mxu0 0.0
  %3362 = vmatpush1.xpose.msra.mxu0 0.0
  %3363 = vmatprep.subr.mxu0 0.0
  %3364 = vmatpush1.xpose.msra.mxu0 0.0
  %3365 = vmatprep.subr.mxu0 0.0
  %3366 = vmatpush1.xpose.msra.mxu0 0.0
  %3367 = vmatprep.mubr.f32.mxu0 0.0
  %3368 = vmatmul.mubr.f32.gmra.mrb[0].mxu0 %v3298
  %v3369 = vpop.f32.mrb[0].mxu0
  %v3370 = vadd.f32 0.0, %v3369
  %v3371 = vpop.f32.mrb[0].mxu0
  %3372 = vdwg.mxu0
  %3373 = vrot.lane.b32.xlu0 %v3199, 112
  %v3374 = vpop.permute.xlu0 %3373
  %3375 = vrot.lane.b32.xlu0 %v3289, 112
  %v3376 = vpop.permute.xlu0 %3375
  %v3377 = vsel %vm113, %v3374, 0
  %v3379 = vsel %vm113, %v3376, 0
  %3381 = vmatprep.subr.mxu0 0.0
  %3382 = vmatpush1.xpose.msra.mxu0 %v3379
  %3383 = vmatprep.subr.mxu0 0.0
  %3384 = vmatpush1.xpose.msra.mxu0 0.0
  %3385 = vmatprep.subr.mxu0 0.0
  %3386 = vmatpush1.xpose.msra.mxu0 0.0
  %3387 = vmatprep.subr.mxu0 0.0
  %3388 = vmatpush1.xpose.msra.mxu0 0.0
  %3389 = vmatprep.subr.mxu0 0.0
  %3390 = vmatpush1.xpose.msra.mxu0 0.0
  %3391 = vmatprep.subr.mxu0 0.0
  %3392 = vmatpush1.xpose.msra.mxu0 0.0
  %3393 = vmatprep.subr.mxu0 0.0
  %3394 = vmatpush1.xpose.msra.mxu0 0.0
  %3395 = vmatprep.subr.mxu0 0.0
  %3396 = vmatpush1.xpose.msra.mxu0 0.0
  %3397 = vmatprep.subr.mxu0 0.0
  %3398 = vmatpush1.xpose.msra.mxu0 0.0
  %3399 = vmatprep.subr.mxu0 0.0
  %3400 = vmatpush1.xpose.msra.mxu0 0.0
  %3401 = vmatprep.subr.mxu0 0.0
  %3402 = vmatpush1.xpose.msra.mxu0 0.0
  %3403 = vmatprep.subr.mxu0 0.0
  %3404 = vmatpush1.xpose.msra.mxu0 0.0
  %3405 = vmatprep.subr.mxu0 0.0
  %3406 = vmatpush1.xpose.msra.mxu0 0.0
  %3407 = vmatprep.subr.mxu0 0.0
  %3408 = vmatpush1.xpose.msra.mxu0 0.0
  %3409 = vmatprep.subr.mxu0 0.0
  %3410 = vmatpush1.xpose.msra.mxu0 0.0
  %3411 = vmatprep.subr.mxu0 0.0
  %3412 = vmatpush1.xpose.msra.mxu0 0.0
  %3413 = vmatprep.subr.mxu0 0.0
  %3414 = vmatpush1.xpose.msra.mxu0 0.0
  %3415 = vmatprep.subr.mxu0 0.0
  %3416 = vmatpush1.xpose.msra.mxu0 0.0
  %3417 = vmatprep.subr.mxu0 0.0
  %3418 = vmatpush1.xpose.msra.mxu0 0.0
  %3419 = vmatprep.subr.mxu0 0.0
  %3420 = vmatpush1.xpose.msra.mxu0 0.0
  %3421 = vmatprep.subr.mxu0 0.0
  %3422 = vmatpush1.xpose.msra.mxu0 0.0
  %3423 = vmatprep.subr.mxu0 0.0
  %3424 = vmatpush1.xpose.msra.mxu0 0.0
  %3425 = vmatprep.subr.mxu0 0.0
  %3426 = vmatpush1.xpose.msra.mxu0 0.0
  %3427 = vmatprep.subr.mxu0 0.0
  %3428 = vmatpush1.xpose.msra.mxu0 0.0
  %3429 = vmatprep.subr.mxu0 0.0
  %3430 = vmatpush1.xpose.msra.mxu0 0.0
  %3431 = vmatprep.subr.mxu0 0.0
  %3432 = vmatpush1.xpose.msra.mxu0 0.0
  %3433 = vmatprep.subr.mxu0 0.0
  %3434 = vmatpush1.xpose.msra.mxu0 0.0
  %3435 = vmatprep.subr.mxu0 0.0
  %3436 = vmatpush1.xpose.msra.mxu0 0.0
  %3437 = vmatprep.subr.mxu0 0.0
  %3438 = vmatpush1.xpose.msra.mxu0 0.0
  %3439 = vmatprep.subr.mxu0 0.0
  %3440 = vmatpush1.xpose.msra.mxu0 0.0
  %3441 = vmatprep.subr.mxu0 0.0
  %3442 = vmatpush1.xpose.msra.mxu0 0.0
  %3443 = vmatprep.subr.mxu0 0.0
  %3444 = vmatpush1.xpose.msra.mxu0 0.0
  %3445 = vmatprep.mubr.f32.mxu0 0.0
  %3446 = vmatmul.mubr.f32.gmra.mrb[0].mxu0 %v3377
  %v3447 = vpop.f32.mrb[0].mxu0
  %v3448 = vadd.f32 0.0, %v3447
  %v3449 = vpop.f32.mrb[0].mxu0
  %3450 = vdwg.mxu0
  %v3452 = vsel %vm113, %v3204, 0
  %v3455 = vsel %vm113, %v3294, 0
  %3457 = vmatprep.subr.mxu0 0.0
  %3458 = vmatpush1.xpose.msra.mxu0 %v3455
  %3459 = vmatprep.subr.mxu0 0.0
  %3460 = vmatpush1.xpose.msra.mxu0 0.0
  %3461 = vmatprep.subr.mxu0 0.0
  %3462 = vmatpush1.xpose.msra.mxu0 0.0
  %3463 = vmatprep.subr.mxu0 0.0
  %3464 = vmatpush1.xpose.msra.mxu0 0.0
  %3465 = vmatprep.subr.mxu0 0.0
  %3466 = vmatpush1.xpose.msra.mxu0 0.0
  %3467 = vmatprep.subr.mxu0 0.0
  %3468 = vmatpush1.xpose.msra.mxu0 0.0
  %3469 = vmatprep.subr.mxu0 0.0
  %3470 = vmatpush1.xpose.msra.mxu0 0.0
  %3471 = vmatprep.subr.mxu0 0.0
  %3472 = vmatpush1.xpose.msra.mxu0 0.0
  %3473 = vmatprep.subr.mxu0 0.0
  %3474 = vmatpush1.xpose.msra.mxu0 0.0
  %3475 = vmatprep.subr.mxu0 0.0
  %3476 = vmatpush1.xpose.msra.mxu0 0.0
  %3477 = vmatprep.subr.mxu0 0.0
  %3478 = vmatpush1.xpose.msra.mxu0 0.0
  %3479 = vmatprep.subr.mxu0 0.0
  %3480 = vmatpush1.xpose.msra.mxu0 0.0
  %3481 = vmatprep.subr.mxu0 0.0
  %3482 = vmatpush1.xpose.msra.mxu0 0.0
  %3483 = vmatprep.subr.mxu0 0.0
  %3484 = vmatpush1.xpose.msra.mxu0 0.0
  %3485 = vmatprep.subr.mxu0 0.0
  %3486 = vmatpush1.xpose.msra.mxu0 0.0
  %3487 = vmatprep.subr.mxu0 0.0
  %3488 = vmatpush1.xpose.msra.mxu0 0.0
  %3489 = vmatprep.subr.mxu0 0.0
  %3490 = vmatpush1.xpose.msra.mxu0 0.0
  %3491 = vmatprep.subr.mxu0 0.0
  %3492 = vmatpush1.xpose.msra.mxu0 0.0
  %3493 = vmatprep.subr.mxu0 0.0
  %3494 = vmatpush1.xpose.msra.mxu0 0.0
  %3495 = vmatprep.subr.mxu0 0.0
  %3496 = vmatpush1.xpose.msra.mxu0 0.0
  %3497 = vmatprep.subr.mxu0 0.0
  %3498 = vmatpush1.xpose.msra.mxu0 0.0
  %3499 = vmatprep.subr.mxu0 0.0
  %3500 = vmatpush1.xpose.msra.mxu0 0.0
  %3501 = vmatprep.subr.mxu0 0.0
  %3502 = vmatpush1.xpose.msra.mxu0 0.0
  %3503 = vmatprep.subr.mxu0 0.0
  %3504 = vmatpush1.xpose.msra.mxu0 0.0
  %3505 = vmatprep.subr.mxu0 0.0
  %3506 = vmatpush1.xpose.msra.mxu0 0.0
  %3507 = vmatprep.subr.mxu0 0.0
  %3508 = vmatpush1.xpose.msra.mxu0 0.0
  %3509 = vmatprep.subr.mxu0 0.0
  %3510 = vmatpush1.xpose.msra.mxu0 0.0
  %3511 = vmatprep.subr.mxu0 0.0
  %3512 = vmatpush1.xpose.msra.mxu0 0.0
  %3513 = vmatprep.subr.mxu0 0.0
  %3514 = vmatpush1.xpose.msra.mxu0 0.0
  %3515 = vmatprep.subr.mxu0 0.0
  %3516 = vmatpush1.xpose.msra.mxu0 0.0
  %3517 = vmatprep.subr.mxu0 0.0
  %3518 = vmatpush1.xpose.msra.mxu0 0.0
  %3519 = vmatprep.subr.mxu0 0.0
  %3520 = vmatpush1.xpose.msra.mxu0 0.0
  %3521 = vmatprep.mubr.f32.mxu0 0.0
  %3522 = vmatmul.mubr.f32.gmra.mrb[0].mxu0 %v3452
  %v3523 = vpop.f32.mrb[0].mxu0
  %v3524 = vadd.f32 0.0, %v3523
  %v3525 = vpop.f32.mrb[0].mxu0
  %3526 = vdwg.mxu0
  %3527 = vrot.lane.b32.xlu0 %v3204, 112
  %v3528 = vpop.permute.xlu0 %3527
  %3529 = vrot.lane.b32.xlu0 %v3294, 112
  %v3530 = vpop.permute.xlu0 %3529
  %v3531 = vsel %vm113, %v3528, 0
  %v3533 = vsel %vm113, %v3530, 0
  %3535 = vmatprep.subr.mxu0 0.0
  %3536 = vmatpush1.xpose.msra.mxu0 %v3533
  %3537 = vmatprep.subr.mxu0 0.0
  %3538 = vmatpush1.xpose.msra.mxu0 0.0
  %3539 = vmatprep.subr.mxu0 0.0
  %3540 = vmatpush1.xpose.msra.mxu0 0.0
  %3541 = vmatprep.subr.mxu0 0.0
  %3542 = vmatpush1.xpose.msra.mxu0 0.0
  %3543 = vmatprep.subr.mxu0 0.0
  %3544 = vmatpush1.xpose.msra.mxu0 0.0
  %3545 = vmatprep.subr.mxu0 0.0
  %3546 = vmatpush1.xpose.msra.mxu0 0.0
  %3547 = vmatprep.subr.mxu0 0.0
  %3548 = vmatpush1.xpose.msra.mxu0 0.0
  %3549 = vmatprep.subr.mxu0 0.0
  %3550 = vmatpush1.xpose.msra.mxu0 0.0
  %3551 = vmatprep.subr.mxu0 0.0
  %3552 = vmatpush1.xpose.msra.mxu0 0.0
  %3553 = vmatprep.subr.mxu0 0.0
  %3554 = vmatpush1.xpose.msra.mxu0 0.0
  %3555 = vmatprep.subr.mxu0 0.0
  %3556 = vmatpush1.xpose.msra.mxu0 0.0
  %3557 = vmatprep.subr.mxu0 0.0
  %3558 = vmatpush1.xpose.msra.mxu0 0.0
  %3559 = vmatprep.subr.mxu0 0.0
  %3560 = vmatpush1.xpose.msra.mxu0 0.0
  %3561 = vmatprep.subr.mxu0 0.0
  %3562 = vmatpush1.xpose.msra.mxu0 0.0
  %3563 = vmatprep.subr.mxu0 0.0
  %3564 = vmatpush1.xpose.msra.mxu0 0.0
  %3565 = vmatprep.subr.mxu0 0.0
  %3566 = vmatpush1.xpose.msra.mxu0 0.0
  %3567 = vmatprep.subr.mxu0 0.0
  %3568 = vmatpush1.xpose.msra.mxu0 0.0
  %3569 = vmatprep.subr.mxu0 0.0
  %3570 = vmatpush1.xpose.msra.mxu0 0.0
  %3571 = vmatprep.subr.mxu0 0.0
  %3572 = vmatpush1.xpose.msra.mxu0 0.0
  %3573 = vmatprep.subr.mxu0 0.0
  %3574 = vmatpush1.xpose.msra.mxu0 0.0
  %3575 = vmatprep.subr.mxu0 0.0
  %3576 = vmatpush1.xpose.msra.mxu0 0.0
  %3577 = vmatprep.subr.mxu0 0.0
  %3578 = vmatpush1.xpose.msra.mxu0 0.0
  %3579 = vmatprep.subr.mxu0 0.0
  %3580 = vmatpush1.xpose.msra.mxu0 0.0
  %3581 = vmatprep.subr.mxu0 0.0
  %3582 = vmatpush1.xpose.msra.mxu0 0.0
  %3583 = vmatprep.subr.mxu0 0.0
  %3584 = vmatpush1.xpose.msra.mxu0 0.0
  %3585 = vmatprep.subr.mxu0 0.0
  %3586 = vmatpush1.xpose.msra.mxu0 0.0
  %3587 = vmatprep.subr.mxu0 0.0
  %3588 = vmatpush1.xpose.msra.mxu0 0.0
  %3589 = vmatprep.subr.mxu0 0.0
  %3590 = vmatpush1.xpose.msra.mxu0 0.0
  %3591 = vmatprep.subr.mxu0 0.0
  %3592 = vmatpush1.xpose.msra.mxu0 0.0
  %3593 = vmatprep.subr.mxu0 0.0
  %3594 = vmatpush1.xpose.msra.mxu0 0.0
  %3595 = vmatprep.subr.mxu0 0.0
  %3596 = vmatpush1.xpose.msra.mxu0 0.0
  %3597 = vmatprep.subr.mxu0 0.0
  %3598 = vmatpush1.xpose.msra.mxu0 0.0
  %3599 = vmatprep.mubr.f32.mxu0 0.0
  %3600 = vmatmul.mubr.f32.gmra.mrb[0].mxu0 %v3531
  %v3601 = vpop.f32.mrb[0].mxu0
  %v3602 = vadd.f32 0.0, %v3601
  %v3603 = vpop.f32.mrb[0].mxu0
  %3604 = vdwg.mxu0
  %v3605 = vsel %vm421, %v3370, -inf
  %3606 = vmax.xlane.f32.xlu0 %v3605
  %v3607 = vpop.xlane.xlu0 %3606
  %v3608 = vsel %vm421, %v3448, -inf
  %3609 = vmax.xlane.f32.xlu0 %v3608
  %v3610 = vpop.xlane.xlu0 %3609
  %v3611 = vsel %vm421, %v3524, -inf
  %3612 = vmax.xlane.f32.xlu0 %v3611
  %v3613 = vpop.xlane.xlu0 %3612
  %v3614 = vsel %vm421, %v3602, -inf
  %3615 = vmax.xlane.f32.xlu0 %v3614
  %v3616 = vpop.xlane.xlu0 %3615
  %v3617 = vsub.f32 %v3370, %v3607
  %v3618 = vsub.f32 %v3448, %v3610
  %v3619 = vsub.f32 %v3524, %v3613
  %v3620 = vsub.f32 %v3602, %v3616
  %v3621 = vmul.f32 %v3617, 1.442695
  %v3622 = vpow.pop %v3621
  %v3623 = vmul.f32 %v3618, 1.442695
  %v3624 = vpow.pop %v3623
  %v3625 = vmul.f32 %v3619, 1.442695
  %v3626 = vpow.pop %v3625
  %v3627 = vmul.f32 %v3620, 1.442695
  %v3628 = vpow.pop %v3627
  %v3629 = vsel %vm421, %v3622, 0.0
  %3630 = vadd.xlane.f32.xlu0 %v3629
  %v3631 = vpop.xlane.xlu0 %3630
  %v3632 = vsel %vm421, %v3624, 0.0
  %3633 = vadd.xlane.f32.xlu0 %v3632
  %v3634 = vpop.xlane.xlu0 %3633
  %v3635 = vsel %vm421, %v3626, 0.0
  %3636 = vadd.xlane.f32.xlu0 %v3635
  %v3637 = vpop.xlane.xlu0 %3636
  %v3638 = vsel %vm421, %v3628, 0.0
  %3639 = vadd.xlane.f32.xlu0 %v3638
  %v3640 = vpop.xlane.xlu0 %3639
  %v3641 = vrcp.pop %v3631
  %v3642 = vrcp.pop %v3634
  %v3643 = vrcp.pop %v3637
  %v3644 = vrcp.pop %v3640
  %v3645 = vmul.f32 %v3622, %v3641
  %v3646 = vmul.f32 %v3624, %v3642
  %v3647 = vmul.f32 %v3626, %v3643
  %v3648 = vmul.f32 %v3628, %v3644
  %3649 = vrot.lane.b32.xlu0 %v3289, 96
  %v3650 = vpop.permute.xlu0 %3649
  %v3653 = vsel %vm421, %v3645, 0
  %3655 = vmatprep.subr.mxu0 0.0
  %3656 = vmatpush1.msra.mxu0 %v3650
  %3657 = vmatprep.subr.mxu0 0.0
  %3658 = vmatpush1.msra.mxu0 0.0
  %3659 = vmatprep.subr.mxu0 0.0
  %3660 = vmatpush1.msra.mxu0 0.0
  %3661 = vmatprep.subr.mxu0 0.0
  %3662 = vmatpush1.msra.mxu0 0.0
  %3663 = vmatprep.subr.mxu0 0.0
  %3664 = vmatpush1.msra.mxu0 0.0
  %3665 = vmatprep.subr.mxu0 0.0
  %3666 = vmatpush1.msra.mxu0 0.0
  %3667 = vmatprep.subr.mxu0 0.0
  %3668 = vmatpush1.msra.mxu0 0.0
  %3669 = vmatprep.subr.mxu0 0.0
  %3670 = vmatpush1.msra.mxu0 0.0
  %3671 = vmatprep.subr.mxu0 0.0
  %3672 = vmatpush1.msra.mxu0 0.0
  %3673 = vmatprep.subr.mxu0 0.0
  %3674 = vmatpush1.msra.mxu0 0.0
  %3675 = vmatprep.subr.mxu0 0.0
  %3676 = vmatpush1.msra.mxu0 0.0
  %3677 = vmatprep.subr.mxu0 0.0
  %3678 = vmatpush1.msra.mxu0 0.0
  %3679 = vmatprep.subr.mxu0 0.0
  %3680 = vmatpush1.msra.mxu0 0.0
  %3681 = vmatprep.subr.mxu0 0.0
  %3682 = vmatpush1.msra.mxu0 0.0
  %3683 = vmatprep.subr.mxu0 0.0
  %3684 = vmatpush1.msra.mxu0 0.0
  %3685 = vmatprep.subr.mxu0 0.0
  %3686 = vmatpush1.msra.mxu0 0.0
  %3687 = vmatprep.subr.mxu0 0.0
  %3688 = vmatpush1.msra.mxu0 0.0
  %3689 = vmatprep.subr.mxu0 0.0
  %3690 = vmatpush1.msra.mxu0 0.0
  %3691 = vmatprep.subr.mxu0 0.0
  %3692 = vmatpush1.msra.mxu0 0.0
  %3693 = vmatprep.subr.mxu0 0.0
  %3694 = vmatpush1.msra.mxu0 0.0
  %3695 = vmatprep.subr.mxu0 0.0
  %3696 = vmatpush1.msra.mxu0 0.0
  %3697 = vmatprep.subr.mxu0 0.0
  %3698 = vmatpush1.msra.mxu0 0.0
  %3699 = vmatprep.subr.mxu0 0.0
  %3700 = vmatpush1.msra.mxu0 0.0
  %3701 = vmatprep.subr.mxu0 0.0
  %3702 = vmatpush1.msra.mxu0 0.0
  %3703 = vmatprep.subr.mxu0 0.0
  %3704 = vmatpush1.msra.mxu0 0.0
  %3705 = vmatprep.subr.mxu0 0.0
  %3706 = vmatpush1.msra.mxu0 0.0
  %3707 = vmatprep.subr.mxu0 0.0
  %3708 = vmatpush1.msra.mxu0 0.0
  %3709 = vmatprep.subr.mxu0 0.0
  %3710 = vmatpush1.msra.mxu0 0.0
  %3711 = vmatprep.subr.mxu0 0.0
  %3712 = vmatpush1.msra.mxu0 0.0
  %3713 = vmatprep.subr.mxu0 0.0
  %3714 = vmatpush1.msra.mxu0 0.0
  %3715 = vmatprep.subr.mxu0 0.0
  %3716 = vmatpush1.msra.mxu0 0.0
  %3717 = vmatprep.subr.mxu0 0.0
  %3718 = vmatpush1.msra.mxu0 0.0
  %3719 = vmatprep.mubr.f32.mxu0 0.0
  %3720 = vmatmul.mubr.f32.gmra.mrb[0].mxu0 %v3653
  %v3721 = vpop.f32.mrb[0].mxu0
  %v3722 = vadd.f32 0.0, %v3721
  %v3723 = vpop.f32.mrb[0].mxu0
  %3724 = vdwg.mxu0
  %3725 = vrot.lane.b32.xlu0 %v3289, 80
  %v3726 = vpop.permute.xlu0 %3725
  %v3729 = vsel %vm421, %v3646, 0
  %3731 = vmatprep.subr.mxu0 0.0
  %3732 = vmatpush1.msra.mxu0 %v3726
  %3733 = vmatprep.subr.mxu0 0.0
  %3734 = vmatpush1.msra.mxu0 0.0
  %3735 = vmatprep.subr.mxu0 0.0
  %3736 = vmatpush1.msra.mxu0 0.0
  %3737 = vmatprep.subr.mxu0 0.0
  %3738 = vmatpush1.msra.mxu0 0.0
  %3739 = vmatprep.subr.mxu0 0.0
  %3740 = vmatpush1.msra.mxu0 0.0
  %3741 = vmatprep.subr.mxu0 0.0
  %3742 = vmatpush1.msra.mxu0 0.0
  %3743 = vmatprep.subr.mxu0 0.0
  %3744 = vmatpush1.msra.mxu0 0.0
  %3745 = vmatprep.subr.mxu0 0.0
  %3746 = vmatpush1.msra.mxu0 0.0
  %3747 = vmatprep.subr.mxu0 0.0
  %3748 = vmatpush1.msra.mxu0 0.0
  %3749 = vmatprep.subr.mxu0 0.0
  %3750 = vmatpush1.msra.mxu0 0.0
  %3751 = vmatprep.subr.mxu0 0.0
  %3752 = vmatpush1.msra.mxu0 0.0
  %3753 = vmatprep.subr.mxu0 0.0
  %3754 = vmatpush1.msra.mxu0 0.0
  %3755 = vmatprep.subr.mxu0 0.0
  %3756 = vmatpush1.msra.mxu0 0.0
  %3757 = vmatprep.subr.mxu0 0.0
  %3758 = vmatpush1.msra.mxu0 0.0
  %3759 = vmatprep.subr.mxu0 0.0
  %3760 = vmatpush1.msra.mxu0 0.0
  %3761 = vmatprep.subr.mxu0 0.0
  %3762 = vmatpush1.msra.mxu0 0.0
  %3763 = vmatprep.subr.mxu0 0.0
  %3764 = vmatpush1.msra.mxu0 0.0
  %3765 = vmatprep.subr.mxu0 0.0
  %3766 = vmatpush1.msra.mxu0 0.0
  %3767 = vmatprep.subr.mxu0 0.0
  %3768 = vmatpush1.msra.mxu0 0.0
  %3769 = vmatprep.subr.mxu0 0.0
  %3770 = vmatpush1.msra.mxu0 0.0
  %3771 = vmatprep.subr.mxu0 0.0
  %3772 = vmatpush1.msra.mxu0 0.0
  %3773 = vmatprep.subr.mxu0 0.0
  %3774 = vmatpush1.msra.mxu0 0.0
  %3775 = vmatprep.subr.mxu0 0.0
  %3776 = vmatpush1.msra.mxu0 0.0
  %3777 = vmatprep.subr.mxu0 0.0
  %3778 = vmatpush1.msra.mxu0 0.0
  %3779 = vmatprep.subr.mxu0 0.0
  %3780 = vmatpush1.msra.mxu0 0.0
  %3781 = vmatprep.subr.mxu0 0.0
  %3782 = vmatpush1.msra.mxu0 0.0
  %3783 = vmatprep.subr.mxu0 0.0
  %3784 = vmatpush1.msra.mxu0 0.0
  %3785 = vmatprep.subr.mxu0 0.0
  %3786 = vmatpush1.msra.mxu0 0.0
  %3787 = vmatprep.subr.mxu0 0.0
  %3788 = vmatpush1.msra.mxu0 0.0
  %3789 = vmatprep.subr.mxu0 0.0
  %3790 = vmatpush1.msra.mxu0 0.0
  %3791 = vmatprep.subr.mxu0 0.0
  %3792 = vmatpush1.msra.mxu0 0.0
  %3793 = vmatprep.subr.mxu0 0.0
  %3794 = vmatpush1.msra.mxu0 0.0
  %3795 = vmatprep.mubr.f32.mxu0 0.0
  %3796 = vmatmul.mubr.f32.gmra.mrb[0].mxu0 %v3729
  %v3797 = vpop.f32.mrb[0].mxu0
  %v3798 = vadd.f32 0.0, %v3797
  %v3799 = vpop.f32.mrb[0].mxu0
  %3800 = vdwg.mxu0
  %3802 = vrot.lane.b32.xlu0 %v3798, 16
  %v3803 = vpop.permute.xlu0 %3802
  %v3805 = vsel %vm113, %v3722, %v3803
  %3806 = vrot.lane.b32.xlu0 %v3294, 96
  %v3807 = vpop.permute.xlu0 %3806
  %v3810 = vsel %vm421, %v3647, 0
  %3812 = vmatprep.subr.mxu0 0.0
  %3813 = vmatpush1.msra.mxu0 %v3807
  %3814 = vmatprep.subr.mxu0 0.0
  %3815 = vmatpush1.msra.mxu0 0.0
  %3816 = vmatprep.subr.mxu0 0.0
  %3817 = vmatpush1.msra.mxu0 0.0
  %3818 = vmatprep.subr.mxu0 0.0
  %3819 = vmatpush1.msra.mxu0 0.0
  %3820 = vmatprep.subr.mxu0 0.0
  %3821 = vmatpush1.msra.mxu0 0.0
  %3822 = vmatprep.subr.mxu0 0.0
  %3823 = vmatpush1.msra.mxu0 0.0
  %3824 = vmatprep.subr.mxu0 0.0
  %3825 = vmatpush1.msra.mxu0 0.0
  %3826 = vmatprep.subr.mxu0 0.0
  %3827 = vmatpush1.msra.mxu0 0.0
  %3828 = vmatprep.subr.mxu0 0.0
  %3829 = vmatpush1.msra.mxu0 0.0
  %3830 = vmatprep.subr.mxu0 0.0
  %3831 = vmatpush1.msra.mxu0 0.0
  %3832 = vmatprep.subr.mxu0 0.0
  %3833 = vmatpush1.msra.mxu0 0.0
  %3834 = vmatprep.subr.mxu0 0.0
  %3835 = vmatpush1.msra.mxu0 0.0
  %3836 = vmatprep.subr.mxu0 0.0
  %3837 = vmatpush1.msra.mxu0 0.0
  %3838 = vmatprep.subr.mxu0 0.0
  %3839 = vmatpush1.msra.mxu0 0.0
  %3840 = vmatprep.subr.mxu0 0.0
  %3841 = vmatpush1.msra.mxu0 0.0
  %3842 = vmatprep.subr.mxu0 0.0
  %3843 = vmatpush1.msra.mxu0 0.0
  %3844 = vmatprep.subr.mxu0 0.0
  %3845 = vmatpush1.msra.mxu0 0.0
  %3846 = vmatprep.subr.mxu0 0.0
  %3847 = vmatpush1.msra.mxu0 0.0
  %3848 = vmatprep.subr.mxu0 0.0
  %3849 = vmatpush1.msra.mxu0 0.0
  %3850 = vmatprep.subr.mxu0 0.0
  %3851 = vmatpush1.msra.mxu0 0.0
  %3852 = vmatprep.subr.mxu0 0.0
  %3853 = vmatpush1.msra.mxu0 0.0
  %3854 = vmatprep.subr.mxu0 0.0
  %3855 = vmatpush1.msra.mxu0 0.0
  %3856 = vmatprep.subr.mxu0 0.0
  %3857 = vmatpush1.msra.mxu0 0.0
  %3858 = vmatprep.subr.mxu0 0.0
  %3859 = vmatpush1.msra.mxu0 0.0
  %3860 = vmatprep.subr.mxu0 0.0
  %3861 = vmatpush1.msra.mxu0 0.0
  %3862 = vmatprep.subr.mxu0 0.0
  %3863 = vmatpush1.msra.mxu0 0.0
  %3864 = vmatprep.subr.mxu0 0.0
  %3865 = vmatpush1.msra.mxu0 0.0
  %3866 = vmatprep.subr.mxu0 0.0
  %3867 = vmatpush1.msra.mxu0 0.0
  %3868 = vmatprep.subr.mxu0 0.0
  %3869 = vmatpush1.msra.mxu0 0.0
  %3870 = vmatprep.subr.mxu0 0.0
  %3871 = vmatpush1.msra.mxu0 0.0
  %3872 = vmatprep.subr.mxu0 0.0
  %3873 = vmatpush1.msra.mxu0 0.0
  %3874 = vmatprep.subr.mxu0 0.0
  %3875 = vmatpush1.msra.mxu0 0.0
  %3876 = vmatprep.mubr.f32.mxu0 0.0
  %3877 = vmatmul.mubr.f32.gmra.mrb[0].mxu0 %v3810
  %v3878 = vpop.f32.mrb[0].mxu0
  %v3879 = vadd.f32 0.0, %v3878
  %v3880 = vpop.f32.mrb[0].mxu0
  %3881 = vdwg.mxu0
  %3882 = vrot.lane.b32.xlu0 %v3294, 80
  %v3883 = vpop.permute.xlu0 %3882
  %v3886 = vsel %vm421, %v3648, 0
  %3888 = vmatprep.subr.mxu0 0.0
  %3889 = vmatpush1.msra.mxu0 %v3883
  %3890 = vmatprep.subr.mxu0 0.0
  %3891 = vmatpush1.msra.mxu0 0.0
  %3892 = vmatprep.subr.mxu0 0.0
  %3893 = vmatpush1.msra.mxu0 0.0
  %3894 = vmatprep.subr.mxu0 0.0
  %3895 = vmatpush1.msra.mxu0 0.0
  %3896 = vmatprep.subr.mxu0 0.0
  %3897 = vmatpush1.msra.mxu0 0.0
  %3898 = vmatprep.subr.mxu0 0.0
  %3899 = vmatpush1.msra.mxu0 0.0
  %3900 = vmatprep.subr.mxu0 0.0
  %3901 = vmatpush1.msra.mxu0 0.0
  %3902 = vmatprep.subr.mxu0 0.0
  %3903 = vmatpush1.msra.mxu0 0.0
  %3904 = vmatprep.subr.mxu0 0.0
  %3905 = vmatpush1.msra.mxu0 0.0
  %3906 = vmatprep.subr.mxu0 0.0
  %3907 = vmatpush1.msra.mxu0 0.0
  %3908 = vmatprep.subr.mxu0 0.0
  %3909 = vmatpush1.msra.mxu0 0.0
  %3910 = vmatprep.subr.mxu0 0.0
  %3911 = vmatpush1.msra.mxu0 0.0
  %3912 = vmatprep.subr.mxu0 0.0
  %3913 = vmatpush1.msra.mxu0 0.0
  %3914 = vmatprep.subr.mxu0 0.0
  %3915 = vmatpush1.msra.mxu0 0.0
  %3916 = vmatprep.subr.mxu0 0.0
  %3917 = vmatpush1.msra.mxu0 0.0
  %3918 = vmatprep.subr.mxu0 0.0
  %3919 = vmatpush1.msra.mxu0 0.0
  %3920 = vmatprep.subr.mxu0 0.0
  %3921 = vmatpush1.msra.mxu0 0.0
  %3922 = vmatprep.subr.mxu0 0.0
  %3923 = vmatpush1.msra.mxu0 0.0
  %3924 = vmatprep.subr.mxu0 0.0
  %3925 = vmatpush1.msra.mxu0 0.0
  %3926 = vmatprep.subr.mxu0 0.0
  %3927 = vmatpush1.msra.mxu0 0.0
  %3928 = vmatprep.subr.mxu0 0.0
  %3929 = vmatpush1.msra.mxu0 0.0
  %3930 = vmatprep.subr.mxu0 0.0
  %3931 = vmatpush1.msra.mxu0 0.0
  %3932 = vmatprep.subr.mxu0 0.0
  %3933 = vmatpush1.msra.mxu0 0.0
  %3934 = vmatprep.subr.mxu0 0.0
  %3935 = vmatpush1.msra.mxu0 0.0
  %3936 = vmatprep.subr.mxu0 0.0
  %3937 = vmatpush1.msra.mxu0 0.0
  %3938 = vmatprep.subr.mxu0 0.0
  %3939 = vmatpush1.msra.mxu0 0.0
  %3940 = vmatprep.subr.mxu0 0.0
  %3941 = vmatpush1.msra.mxu0 0.0
  %3942 = vmatprep.subr.mxu0 0.0
  %3943 = vmatpush1.msra.mxu0 0.0
  %3944 = vmatprep.subr.mxu0 0.0
  %3945 = vmatpush1.msra.mxu0 0.0
  %3946 = vmatprep.subr.mxu0 0.0
  %3947 = vmatpush1.msra.mxu0 0.0
  %3948 = vmatprep.subr.mxu0 0.0
  %3949 = vmatpush1.msra.mxu0 0.0
  %3950 = vmatprep.subr.mxu0 0.0
  %3951 = vmatpush1.msra.mxu0 0.0
  %3952 = vmatprep.mubr.f32.mxu0 0.0
  %3953 = vmatmul.mubr.f32.gmra.mrb[0].mxu0 %v3886
  %v3954 = vpop.f32.mrb[0].mxu0
  %v3955 = vadd.f32 0.0, %v3954
  %v3956 = vpop.f32.mrb[0].mxu0
  %3957 = vdwg.mxu0
  %3959 = vrot.lane.b32.xlu0 %v3955, 16
  %v3960 = vpop.permute.xlu0 %3959
  %v3962 = vsel %vm113, %v3879, %v3960
  %v3963 = vld [vmem:[%s2224 + $0x80] sm:$0xff]
  %v3964 = vld [vmem:[%s2224 + $0x88] sm:$0xff]
  %v3965 = vld [vmem:[%s2224 + $0x90] sm:$0xff]
  %v3966 = vld [vmem:[%s2224 + $0x98] sm:$0xff]
  %v3967 = vld [vmem:[%s2229 + $0x4] sm:$0x1]
  %v3968 = vlaneseq
  %v3969 = vshrl.u32 %v3968, 7
  %v3970 = vsub.s32 0, %v3969
  %v3971 = vrot.slane %v3967, %v3970
  %v3973 = vsel %vm28, %v3805, 0
  %v3976 = vsel %vm28, %v3962, 0
  %3978 = vmatprep.subr.mxu0 0.0
  %3979 = vmatpush1.msra.mxu0 %v3963
  %3980 = vmatprep.subr.mxu0 0.0
  %3981 = vmatpush1.msra.mxu0 %v3964
  %3982 = vmatprep.subr.mxu0 0.0
  %3983 = vmatpush1.msra.mxu0 %v3965
  %3984 = vmatprep.subr.mxu0 0.0
  %3985 = vmatpush1.msra.mxu0 %v3966
  %3986 = vmatprep.subr.mxu0 0.0
  %3987 = vmatpush1.msra.mxu0 0.0
  %3988 = vmatprep.subr.mxu0 0.0
  %3989 = vmatpush1.msra.mxu0 0.0
  %3990 = vmatprep.subr.mxu0 0.0
  %3991 = vmatpush1.msra.mxu0 0.0
  %3992 = vmatprep.subr.mxu0 0.0
  %3993 = vmatpush1.msra.mxu0 0.0
  %3994 = vmatprep.subr.mxu0 0.0
  %3995 = vmatpush1.msra.mxu0 0.0
  %3996 = vmatprep.subr.mxu0 0.0
  %3997 = vmatpush1.msra.mxu0 0.0
  %3998 = vmatprep.subr.mxu0 0.0
  %3999 = vmatpush1.msra.mxu0 0.0
  %4000 = vmatprep.subr.mxu0 0.0
  %4001 = vmatpush1.msra.mxu0 0.0
  %4002 = vmatprep.subr.mxu0 0.0
  %4003 = vmatpush1.msra.mxu0 0.0
  %4004 = vmatprep.subr.mxu0 0.0
  %4005 = vmatpush1.msra.mxu0 0.0
  %4006 = vmatprep.subr.mxu0 0.0
  %4007 = vmatpush1.msra.mxu0 0.0
  %4008 = vmatprep.subr.mxu0 0.0
  %4009 = vmatpush1.msra.mxu0 0.0
  %4010 = vmatprep.subr.mxu0 0.0
  %4011 = vmatpush1.msra.mxu0 0.0
  %4012 = vmatprep.subr.mxu0 0.0
  %4013 = vmatpush1.msra.mxu0 0.0
  %4014 = vmatprep.subr.mxu0 0.0
  %4015 = vmatpush1.msra.mxu0 0.0
  %4016 = vmatprep.subr.mxu0 0.0
  %4017 = vmatpush1.msra.mxu0 0.0
  %4018 = vmatprep.subr.mxu0 0.0
  %4019 = vmatpush1.msra.mxu0 0.0
  %4020 = vmatprep.subr.mxu0 0.0
  %4021 = vmatpush1.msra.mxu0 0.0
  %4022 = vmatprep.subr.mxu0 0.0
  %4023 = vmatpush1.msra.mxu0 0.0
  %4024 = vmatprep.subr.mxu0 0.0
  %4025 = vmatpush1.msra.mxu0 0.0
  %4026 = vmatprep.subr.mxu0 0.0
  %4027 = vmatpush1.msra.mxu0 0.0
  %4028 = vmatprep.subr.mxu0 0.0
  %4029 = vmatpush1.msra.mxu0 0.0
  %4030 = vmatprep.subr.mxu0 0.0
  %4031 = vmatpush1.msra.mxu0 0.0
  %4032 = vmatprep.subr.mxu0 0.0
  %4033 = vmatpush1.msra.mxu0 0.0
  %4034 = vmatprep.subr.mxu0 0.0
  %4035 = vmatpush1.msra.mxu0 0.0
  %4036 = vmatprep.subr.mxu0 0.0
  %4037 = vmatpush1.msra.mxu0 0.0
  %4038 = vmatprep.subr.mxu0 0.0
  %4039 = vmatpush1.msra.mxu0 0.0
  %4040 = vmatprep.subr.mxu0 0.0
  %4041 = vmatpush1.msra.mxu0 0.0
  %4042 = vmatprep.mubr.f32.mxu0 0.0
  %4043 = vmatmul.mubr.f32.gmra.mrb[0].mxu0 %v3973
  %v4044 = vpop.f32.mrb[0].mxu0
  %v4045 = vadd.f32 %v3971, %v4044
  %v4046 = vpop.f32.mrb[0].mxu0
  %4047 = vmatprep.mubr.f32.mxu0 0.0
  %4048 = vmatmul.mubr.f32.gmra.mrb[0].mxu0 %v3976
  %v4049 = vpop.f32.mrb[0].mxu0
  %v4050 = vadd.f32 %v3971, %v4049
  %v4051 = vpop.f32.mrb[0].mxu0
  %4052 = vdwg.mxu0
  %v4053 = vadd.f32 %v3112, %v4045
  %v4054 = vadd.f32 %v3113, %v4050
  %v4055 = vld [vmem:[%s2229 + $0x7] sm:$0x1]
  %v4056 = vld [vmem:[%s2229 + $0x8] sm:$0x1]
  %v4057 = vsel %vm28, %v4053, 0.0
  %4058 = vadd.xlane.f32.xlu0 %v4057
  %v4059 = vpop.xlane.xlu0 %4058
  %v4060 = vsel %vm28, %v4054, 0.0
  %4061 = vadd.xlane.f32.xlu0 %v4060
  %v4062 = vpop.xlane.xlu0 %4061
  %v4063 = vmul.f32 %v4059, %v880
  %v4064 = vmul.f32 %v4062, %v880
  %v4065 = vmul.f32 %v4053, %v4053
  %v4066 = vmul.f32 %v4054, %v4054
  %v4067 = vsel %vm28, %v4065, 0.0
  %4068 = vadd.xlane.f32.xlu0 %v4067
  %v4069 = vpop.xlane.xlu0 %4068
  %v4070 = vsel %vm28, %v4066, 0.0
  %4071 = vadd.xlane.f32.xlu0 %v4070
  %v4072 = vpop.xlane.xlu0 %4071
  %v4073 = vmul.f32 %v4069, %v880
  %v4074 = vmul.f32 %v4072, %v880
  %v4075 = vmul.f32 %v4063, %v4063
  %v4076 = vmul.f32 %v4064, %v4064
  %v4077 = vsub.f32 %v4073, %v4075
  %v4078 = vsub.f32 %v4074, %v4076
  %v4079 = vsub.f32 %v4053, %v4063
  %v4080 = vsub.f32 %v4054, %v4064
  %v4081 = vadd.f32 %v4077, 1e-05
  %v4082 = vadd.f32 %v4078, 1e-05
  %v4083 = vrsqrt.pop %v4081
  %v4084 = vrsqrt.pop %v4082
  %v4085 = vmul.f32 %v4079, %v4083
  %v4086 = vmul.f32 %v4080, %v4084
  %v4087 = vlaneseq
  %v4088 = vshrl.u32 %v4087, 7
  %v4089 = vsub.s32 0, %v4088
  %v4090 = vrot.slane %v4055, %v4089
  %v4091 = vmul.f32 %v4085, %v4090
  %v4092 = vmul.f32 %v4086, %v4090
  %v4093 = vlaneseq
  %v4094 = vshrl.u32 %v4093, 7
  %v4095 = vsub.s32 0, %v4094
  %v4096 = vrot.slane %v4056, %v4095
  %v4097 = vadd.f32 %v4091, %v4096
  %v4098 = vadd.f32 %v4092, %v4096
  %v4099 = vld [vmem:[%s2224 + $0xa0] sm:$0xff]
  %v4100 = vld [vmem:[%s2224 + $0xa8] sm:$0xff]
  %v4101 = vld [vmem:[%s2224 + $0xb0] sm:$0xff]
  %v4102 = vld [vmem:[%s2224 + $0xb8] sm:$0xff]
  %v4103 = vld [vmem:[%s2229 + $0xb] sm:$0x1]
  %v4104 = vlaneseq
  %v4105 = vshrl.u32 %v4104, 7
  %v4106 = vsub.s32 0, %v4105
  %v4107 = vrot.slane %v4103, %v4106
  %v4109 = vsel %vm28, %v4097, 0
  %v4112 = vsel %vm28, %v4098, 0
  %4114 = vmatprep.subr.mxu0 0.0
  %4115 = vmatpush1.msra.mxu0 %v4099
  %4116 = vmatprep.subr.mxu0 0.0
  %4117 = vmatpush1.msra.mxu0 %v4100
  %4118 = vmatprep.subr.mxu0 0.0
  %4119 = vmatpush1.msra.mxu0 %v4101
  %4120 = vmatprep.subr.mxu0 0.0
  %4121 = vmatpush1.msra.mxu0 %v4102
  %4122 = vmatprep.subr.mxu0 0.0
  %4123 = vmatpush1.msra.mxu0 0.0
  %4124 = vmatprep.subr.mxu0 0.0
  %4125 = vmatpush1.msra.mxu0 0.0
  %4126 = vmatprep.subr.mxu0 0.0
  %4127 = vmatpush1.msra.mxu0 0.0
  %4128 = vmatprep.subr.mxu0 0.0
  %4129 = vmatpush1.msra.mxu0 0.0
  %4130 = vmatprep.subr.mxu0 0.0
  %4131 = vmatpush1.msra.mxu0 0.0
  %4132 = vmatprep.subr.mxu0 0.0
  %4133 = vmatpush1.msra.mxu0 0.0
  %4134 = vmatprep.subr.mxu0 0.0
  %4135 = vmatpush1.msra.mxu0 0.0
  %4136 = vmatprep.subr.mxu0 0.0
  %4137 = vmatpush1.msra.mxu0 0.0
  %4138 = vmatprep.subr.mxu0 0.0
  %4139 = vmatpush1.msra.mxu0 0.0
  %4140 = vmatprep.subr.mxu0 0.0
  %4141 = vmatpush1.msra.mxu0 0.0
  %4142 = vmatprep.subr.mxu0 0.0
  %4143 = vmatpush1.msra.mxu0 0.0
  %4144 = vmatprep.subr.mxu0 0.0
  %4145 = vmatpush1.msra.mxu0 0.0
  %4146 = vmatprep.subr.mxu0 0.0
  %4147 = vmatpush1.msra.mxu0 0.0
  %4148 = vmatprep.subr.mxu0 0.0
  %4149 = vmatpush1.msra.mxu0 0.0
  %4150 = vmatprep.subr.mxu0 0.0
  %4151 = vmatpush1.msra.mxu0 0.0
  %4152 = vmatprep.subr.mxu0 0.0
  %4153 = vmatpush1.msra.mxu0 0.0
  %4154 = vmatprep.subr.mxu0 0.0
  %4155 = vmatpush1.msra.mxu0 0.0
  %4156 = vmatprep.subr.mxu0 0.0
  %4157 = vmatpush1.msra.mxu0 0.0
  %4158 = vmatprep.subr.mxu0 0.0
  %4159 = vmatpush1.msra.mxu0 0.0
  %4160 = vmatprep.subr.mxu0 0.0
  %4161 = vmatpush1.msra.mxu0 0.0
  %4162 = vmatprep.subr.mxu0 0.0
  %4163 = vmatpush1.msra.mxu0 0.0
  %4164 = vmatprep.subr.mxu0 0.0
  %4165 = vmatpush1.msra.mxu0 0.0
  %4166 = vmatprep.subr.mxu0 0.0
  %4167 = vmatpush1.msra.mxu0 0.0
  %4168 = vmatprep.subr.mxu0 0.0
  %4169 = vmatpush1.msra.mxu0 0.0
  %4170 = vmatprep.subr.mxu0 0.0
  %4171 = vmatpush1.msra.mxu0 0.0
  %4172 = vmatprep.subr.mxu0 0.0
  %4173 = vmatpush1.msra.mxu0 0.0
  %4174 = vmatprep.subr.mxu0 0.0
  %4175 = vmatpush1.msra.mxu0 0.0
  %4176 = vmatprep.subr.mxu0 0.0
  %4177 = vmatpush1.msra.mxu0 0.0
  %4178 = vmatprep.mubr.f32.mxu0 0.0
  %4179 = vmatmul.mubr.f32.gmra.mrb[0].mxu0 %v4109
  %v4180 = vpop.f32.mrb[0].mxu0
  %v4181 = vadd.f32 %v4107, %v4180
  %v4182 = vpop.f32.mrb[0].mxu0
  %4183 = vmatprep.mubr.f32.mxu0 0.0
  %4184 = vmatmul.mubr.f32.gmra.mrb[0].mxu0 %v4112
  %v4185 = vpop.f32.mrb[0].mxu0
  %v4186 = vadd.f32 %v4107, %v4185
  %v4187 = vpop.f32.mrb[0].mxu0
  %4188 = vdwg.mxu0
  %v4189 = vmax.f32 %v4181, 0.0
  %v4190 = vmax.f32 %v4186, 0.0
  %v4191 = vld [vmem:[%s2224 + $0xc0] sm:$0xff]
  %v4192 = vld [vmem:[%s2224 + $0xc8] sm:$0xff]
  %v4193 = vld [vmem:[%s2224 + $0xd0] sm:$0xff]
  %v4194 = vld [vmem:[%s2224 + $0xd8] sm:$0xff]
  %v4195 = vld [vmem:[%s2224 + $0xe0] sm:$0xff]
  %v4196 = vld [vmem:[%s2224 + $0xe8] sm:$0xff]
  %v4197 = vld [vmem:[%s2224 + $0xf0] sm:$0xff]
  %v4198 = vld [vmem:[%s2224 + $0xf8] sm:$0xff]
  %v4199 = vld [vmem:[%s2229 + $0xc] sm:$0x1]
  %v4200 = vlaneseq
  %v4201 = vshrl.u32 %v4200, 7
  %v4202 = vsub.s32 0, %v4201
  %v4203 = vrot.slane %v4199, %v4202
  %v4205 = vsel %vm2006, %v4189, 0
  %v4208 = vsel %vm2006, %v4190, 0
  %4210 = vmatprep.subr.mxu0 0.0
  %4211 = vmatpush1.msra.mxu0 %v4191
  %4212 = vmatprep.subr.mxu0 0.0
  %4213 = vmatpush1.msra.mxu0 %v4192
  %4214 = vmatprep.subr.mxu0 0.0
  %4215 = vmatpush1.msra.mxu0 %v4193
  %4216 = vmatprep.subr.mxu0 0.0
  %4217 = vmatpush1.msra.mxu0 %v4194
  %4218 = vmatprep.subr.mxu0 0.0
  %4219 = vmatpush1.msra.mxu0 %v4195
  %4220 = vmatprep.subr.mxu0 0.0
  %4221 = vmatpush1.msra.mxu0 %v4196
  %4222 = vmatprep.subr.mxu0 0.0
  %4223 = vmatpush1.msra.mxu0 %v4197
  %4224 = vmatprep.subr.mxu0 0.0
  %4225 = vmatpush1.msra.mxu0 %v4198
  %4226 = vmatprep.subr.mxu0 0.0
  %4227 = vmatpush1.msra.mxu0 0.0
  %4228 = vmatprep.subr.mxu0 0.0
  %4229 = vmatpush1.msra.mxu0 0.0
  %4230 = vmatprep.subr.mxu0 0.0
  %4231 = vmatpush1.msra.mxu0 0.0
  %4232 = vmatprep.subr.mxu0 0.0
  %4233 = vmatpush1.msra.mxu0 0.0
  %4234 = vmatprep.subr.mxu0 0.0
  %4235 = vmatpush1.msra.mxu0 0.0
  %4236 = vmatprep.subr.mxu0 0.0
  %4237 = vmatpush1.msra.mxu0 0.0
  %4238 = vmatprep.subr.mxu0 0.0
  %4239 = vmatpush1.msra.mxu0 0.0
  %4240 = vmatprep.subr.mxu0 0.0
  %4241 = vmatpush1.msra.mxu0 0.0
  %4242 = vmatprep.subr.mxu0 0.0
  %4243 = vmatpush1.msra.mxu0 0.0
  %4244 = vmatprep.subr.mxu0 0.0
  %4245 = vmatpush1.msra.mxu0 0.0
  %4246 = vmatprep.subr.mxu0 0.0
  %4247 = vmatpush1.msra.mxu0 0.0
  %4248 = vmatprep.subr.mxu0 0.0
  %4249 = vmatpush1.msra.mxu0 0.0
  %4250 = vmatprep.subr.mxu0 0.0
  %4251 = vmatpush1.msra.mxu0 0.0
  %4252 = vmatprep.subr.mxu0 0.0
  %4253 = vmatpush1.msra.mxu0 0.0
  %4254 = vmatprep.subr.mxu0 0.0
  %4255 = vmatpush1.msra.mxu0 0.0
  %4256 = vmatprep.subr.mxu0 0.0
  %4257 = vmatpush1.msra.mxu0 0.0
  %4258 = vmatprep.subr.mxu0 0.0
  %4259 = vmatpush1.msra.mxu0 0.0
  %4260 = vmatprep.subr.mxu0 0.0
  %4261 = vmatpush1.msra.mxu0 0.0
  %4262 = vmatprep.subr.mxu0 0.0
  %4263 = vmatpush1.msra.mxu0 0.0
  %4264 = vmatprep.subr.mxu0 0.0
  %4265 = vmatpush1.msra.mxu0 0.0
  %4266 = vmatprep.subr.mxu0 0.0
  %4267 = vmatpush1.msra.mxu0 0.0
  %4268 = vmatprep.subr.mxu0 0.0
  %4269 = vmatpush1.msra.mxu0 0.0
  %4270 = vmatprep.subr.mxu0 0.0
  %4271 = vmatpush1.msra.mxu0 0.0
  %4272 = vmatprep.subr.mxu0 0.0
  %4273 = vmatpush1.msra.mxu0 0.0
  %4274 = vmatprep.mubr.f32.mxu0 0.0
  %4275 = vmatmul.mubr.f32.gmra.mrb[0].mxu0 %v4205
  %v4276 = vpop.f32.mrb[0].mxu0
  %v4277 = vadd.f32 %v4203, %v4276
  %v4278 = vpop.f32.mrb[0].mxu0
  %4279 = vmatprep.mubr.f32.mxu0 0.0
  %4280 = vmatmul.mubr.f32.gmra.mrb[0].mxu0 %v4208
  %v4281 = vpop.f32.mrb[0].mxu0
  %v4282 = vadd.f32 %v4203, %v4281
  %v4283 = vpop.f32.mrb[0].mxu0
  %4284 = vdwg.mxu0
  %v4285 = vadd.f32 %v4097, %v4277
  %v4286 = vadd.f32 %v4098, %v4282
  %v4287 = vld [vmem:[%s2229 + $0x9] sm:$0x1]
  %v4288 = vld [vmem:[%s2229 + $0xa] sm:$0x1]
  %v4289 = vsel %vm28, %v4285, 0.0
  %4290 = vadd.xlane.f32.xlu0 %v4289
  %v4291 = vpop.xlane.xlu0 %4290
  %v4292 = vsel %vm28, %v4286, 0.0
  %4293 = vadd.xlane.f32.xlu0 %v4292
  %v4294 = vpop.xlane.xlu0 %4293
  %v4295 = vmul.f32 %v4291, %v880
  %v4296 = vmul.f32 %v4294, %v880
  %v4297 = vmul.f32 %v4285, %v4285
  %v4298 = vmul.f32 %v4286, %v4286
  %v4299 = vsel %vm28, %v4297, 0.0
  %4300 = vadd.xlane.f32.xlu0 %v4299
  %v4301 = vpop.xlane.xlu0 %4300
  %v4302 = vsel %vm28, %v4298, 0.0
  %4303 = vadd.xlane.f32.xlu0 %v4302
  %v4304 = vpop.xlane.xlu0 %4303
  %v4305 = vmul.f32 %v4301, %v880
  %v4306 = vmul.f32 %v4304, %v880
  %v4307 = vmul.f32 %v4295, %v4295
  %v4308 = vmul.f32 %v4296, %v4296
  %v4309 = vsub.f32 %v4305, %v4307
  %v4310 = vsub.f32 %v4306, %v4308
  %v4311 = vsub.f32 %v4285, %v4295
  %v4312 = vsub.f32 %v4286, %v4296
  %v4313 = vadd.f32 %v4309, 1e-05
  %v4314 = vadd.f32 %v4310, 1e-05
  %v4315 = vrsqrt.pop %v4313
  %v4316 = vrsqrt.pop %v4314
  %v4317 = vmul.f32 %v4311, %v4315
  %v4318 = vmul.f32 %v4312, %v4316
  %v4319 = vlaneseq
  %v4320 = vshrl.u32 %v4319, 7
  %v4321 = vsub.s32 0, %v4320
  %v4322 = vrot.slane %v4287, %v4321
  %v4323 = vmul.f32 %v4317, %v4322
  %v4324 = vmul.f32 %v4318, %v4322
  %v4325 = vlaneseq
  %v4326 = vshrl.u32 %v4325, 7
  %v4327 = vsub.s32 0, %v4326
  %v4328 = vrot.slane %v4288, %v4327
  %v4329 = vadd.f32 %v4323, %v4328
  %v4330 = vadd.f32 %v4324, %v4328
  %v4331 = vld [vmem:[%s2224 + $0x100] sm:$0xff]
  %v4332 = vld [vmem:[%s2224 + $0x108] sm:$0xff]
  %v4333 = vld [vmem:[%s2224 + $0x110] sm:$0xff]
  %v4334 = vld [vmem:[%s2224 + $0x118] sm:$0xff]
  %v4335 = vld [vmem:[%s2229 + $0xd] sm:$0x1]
  %v4336 = vlaneseq
  %v4337 = vshrl.u32 %v4336, 7
  %v4338 = vsub.s32 0, %v4337
  %v4339 = vrot.slane %v4335, %v4338
  %v4341 = vsel %vm28, %v4329, 0
  %v4344 = vsel %vm28, %v4330, 0
  %4346 = vmatprep.subr.mxu0 0.0
  %4347 = vmatpush1.msra.mxu0 %v4331
  %4348 = vmatprep.subr.mxu0 0.0
  %4349 = vmatpush1.msra.mxu0 %v4332
  %4350 = vmatprep.subr.mxu0 0.0
  %4351 = vmatpush1.msra.mxu0 %v4333
  %4352 = vmatprep.subr.mxu0 0.0
  %4353 = vmatpush1.msra.mxu0 %v4334
  %4354 = vmatprep.subr.mxu0 0.0
  %4355 = vmatpush1.msra.mxu0 0.0
  %4356 = vmatprep.subr.mxu0 0.0
  %4357 = vmatpush1.msra.mxu0 0.0
  %4358 = vmatprep.subr.mxu0 0.0
  %4359 = vmatpush1.msra.mxu0 0.0
  %4360 = vmatprep.subr.mxu0 0.0
  %4361 = vmatpush1.msra.mxu0 0.0
  %4362 = vmatprep.subr.mxu0 0.0
  %4363 = vmatpush1.msra.mxu0 0.0
  %4364 = vmatprep.subr.mxu0 0.0
  %4365 = vmatpush1.msra.mxu0 0.0
  %4366 = vmatprep.subr.mxu0 0.0
  %4367 = vmatpush1.msra.mxu0 0.0
  %4368 = vmatprep.subr.mxu0 0.0
  %4369 = vmatpush1.msra.mxu0 0.0
  %4370 = vmatprep.subr.mxu0 0.0
  %4371 = vmatpush1.msra.mxu0 0.0
  %4372 = vmatprep.subr.mxu0 0.0
  %4373 = vmatpush1.msra.mxu0 0.0
  %4374 = vmatprep.subr.mxu0 0.0
  %4375 = vmatpush1.msra.mxu0 0.0
  %4376 = vmatprep.subr.mxu0 0.0
  %4377 = vmatpush1.msra.mxu0 0.0
  %4378 = vmatprep.subr.mxu0 0.0
  %4379 = vmatpush1.msra.mxu0 0.0
  %4380 = vmatprep.subr.mxu0 0.0
  %4381 = vmatpush1.msra.mxu0 0.0
  %4382 = vmatprep.subr.mxu0 0.0
  %4383 = vmatpush1.msra.mxu0 0.0
  %4384 = vmatprep.subr.mxu0 0.0
  %4385 = vmatpush1.msra.mxu0 0.0
  %4386 = vmatprep.subr.mxu0 0.0
  %4387 = vmatpush1.msra.mxu0 0.0
  %4388 = vmatprep.subr.mxu0 0.0
  %4389 = vmatpush1.msra.mxu0 0.0
  %4390 = vmatprep.subr.mxu0 0.0
  %4391 = vmatpush1.msra.mxu0 0.0
  %4392 = vmatprep.subr.mxu0 0.0
  %4393 = vmatpush1.msra.mxu0 0.0
  %4394 = vmatprep.subr.mxu0 0.0
  %4395 = vmatpush1.msra.mxu0 0.0
  %4396 = vmatprep.subr.mxu0 0.0
  %4397 = vmatpush1.msra.mxu0 0.0
  %4398 = vmatprep.subr.mxu0 0.0
  %4399 = vmatpush1.msra.mxu0 0.0
  %4400 = vmatprep.subr.mxu0 0.0
  %4401 = vmatpush1.msra.mxu0 0.0
  %4402 = vmatprep.subr.mxu0 0.0
  %4403 = vmatpush1.msra.mxu0 0.0
  %4404 = vmatprep.subr.mxu0 0.0
  %4405 = vmatpush1.msra.mxu0 0.0
  %4406 = vmatprep.subr.mxu0 0.0
  %4407 = vmatpush1.msra.mxu0 0.0
  %4408 = vmatprep.subr.mxu0 0.0
  %4409 = vmatpush1.msra.mxu0 0.0
  %4410 = vmatprep.mubr.f32.mxu0 0.0
  %4411 = vmatmul.mubr.f32.gmra.mrb[0].mxu0 %v4341
  %v4412 = vpop.f32.mrb[0].mxu0
  %v4413 = vadd.f32 %v4339, %v4412
  %v4414 = vpop.f32.mrb[0].mxu0
  %4415 = vmatprep.mubr.f32.mxu0 0.0
  %4416 = vmatmul.mubr.f32.gmra.mrb[0].mxu0 %v4344
  %v4417 = vpop.f32.mrb[0].mxu0
  %v4418 = vadd.f32 %v4339, %v4417
  %v4419 = vpop.f32.mrb[0].mxu0
  %4420 = vdwg.mxu0
  %v4421 = vadd.f32 %v2216, %v4413
  %v4422 = vadd.f32 %v2221, %v4418
  %4423 = vst.msk [vmem:[%s4] sm:$0xff] %vm421, %v4421
  %4424 = vst.msk [vmem:[%s4 + $0x8] sm:$0xff] %vm421, %v4422
  // Predicated region
  $region18: #{decoder_forward.1} parent=0 // pred_check
    _
  $region19: #{decoder_forward.1} parent=0 // pred_check_branch
    %4426 = sbr.rel (0) target = $region21
  $region20: #{decoder_forward.1} parent=0 // pred_region
    _
  $region21: #{decoder_forward.1} parent=0 // pred_fallthru
    _
  // Predicated region
  $region22: #{decoder_forward.1} parent=0 // pred_check
    _
  $region23: #{decoder_forward.1} parent=0 // pred_check_branch
    %4428 = sbr.rel (0) target = $region25
  $region24: #{decoder_forward.1} parent=0 // pred_region
    _
  $region25: #{decoder_forward.1} parent=0 // pred_fallthru
    _

</llo_original>
